<compile_context>
chip_gen: v7x
topology: tpu7x:2x2x1
jax: 0.10.0
libtpu: 0.0.40
codegen_flags: <defaults>
</compile_context>

<pallas_src>
import jax
import jax.numpy as jnp
from jax import lax
from jax.experimental import pallas as pl
from jax.experimental.pallas import tpu as pltpu

EPS = 1e-5
LANES = 128


def _round_up(v, m):
    return -(-v // m) * m


def _bn_coeffs(sum_ref, sq_ref, gamma, beta, m):
    # Folded BN: normalization becomes one multiply-add per element.
    inv_m = 1.0 / m
    mean = sum_ref[...] * inv_m
    var = sq_ref[...] * inv_m - mean * mean
    scale = gamma * lax.rsqrt(var + EPS)
    shift = beta - mean * scale
    return scale, shift


def make_wrn_block_kernel(N, B, Ho, Wo, Cin_p, Cout_p):
    BM = B * Ho * Wo            # matmul M rows per grid step
    HoWo = Ho * Wo
    K1 = 9 * Cin_p              # conv1 fused K
    m2 = float(N * Ho * Wo)     # BN2 element count per channel

    def kernel(im_ref, xs_ref, w1_ref, w2_ref, wsc_ref, bn2_ref,
               o_ref,
               s2sum, s2sq, y_buf, hp_ref):
        p = pl.program_id(0)    # phase: 0 = conv1 + BN2 stats, 1 = BN2+ReLU+conv2+shortcut+add
        b = pl.program_id(1)    # batch block

        @pl.when((p == 0) & (b == 0))
        def _init():
            s2sum[...] = jnp.zeros_like(s2sum)
            s2sq[...] = jnp.zeros_like(s2sq)
            # Zero hp ONCE: the 1-wide halo ring stays zero for the whole kernel, the interior is
            # fully overwritten every phase-1 step (review: no per-step re-zero).
            hp_ref[...] = jnp.zeros_like(hp_ref)

        # -------- phase 0: y = conv1(x1) as ONE matmul (K=9*Cin_p); exact BN2 stats --------
        @pl.when(p == 0)
        def _phase0():
            lhs = im_ref[...].reshape(BM, K1)                      # bf16 im2col block
            y = jnp.dot(lhs, w1_ref[...], preferred_element_type=jnp.float32)
            # BN2 batch statistics on the f32 accumulator (never on bf16-rounded values).
            s2sum[...] += jnp.sum(y, axis=0, keepdims=True)
            s2sq[...] += jnp.sum(y * y, axis=0, keepdims=True)
            y_buf[b] = y.astype(jnp.bfloat16)                      # resident, bf16 (VMEM cap)

        # -------- phase 1: h = ReLU(BN2(y)); conv2 as ONE matmul (K=9*Cout_p); + shortcut --------
        @pl.when(p == 1)
        def _phase1():
            scale2, shift2 = _bn_coeffs(s2sum, s2sq, bn2_ref[0:1, :], bn2_ref[1:2, :], m2)
            h = jnp.maximum(y_buf[b].astype(jnp.float32) * scale2 + shift2, 0.0)
            hp_ref[:, 1:Ho + 1, 1:Wo + 1, :] = (
                h.reshape(B, Ho, Wo, Cout_p).astype(jnp.bfloat16))

            # VMEM-local im2col of h: 9 lane-aligned (width = Cout_p = multiple of 128) chunks.
            taps = [hp_ref[:, ky:ky + Ho, kx:kx + Wo, :].reshape(BM, Cout_p)
                    for ky in range(3) for kx in range(3)]
            lhs2 = jnp.concatenate(taps, axis=-1)                  # (BM, 9*Cout_p) bf16
            acc = jnp.dot(lhs2, w2_ref[...], preferred_element_type=jnp.float32)
            # shortcut: 1x1 / stride-2 conv on x1 (tiny K) added straight into the f32 result.
            acc += jnp.dot(xs_ref[...].reshape(BM, Cin_p), wsc_ref[...],
                           preferred_element_type=jnp.float32)
            o_ref[...] = acc.reshape(B, HoWo, Cout_p)              # no final ReLU (per module)

    return kernel


def _pick_batch_block(N, rows_per_image, target_rows=256, max_rows=2048):
    # Smallest divisor of N whose M = B*Ho*Wo reaches the target, capped so blocks stay VMEM-sized.
    divs = [d for d in range(1, N + 1) if N % d == 0]
    ok = [d for d in divs if d * rows_per_image <= max_rows] or [1]
    for d in ok:
        if d * rows_per_image >= target_rows:
            return d
    return ok[-1]


@jax.jit
def wrn_basic_block(x_nchw, params):
    x = jnp.transpose(x_nchw, (0, 2, 3, 1)).astype(jnp.float32)     # NCHW -> NHWC
    N, H, W, Cin = x.shape
    Cout = params["w1"].shape[-1]
    assert H % 2 == 0 and W % 2 == 0
    Ho, Wo = H // 2, W // 2
    Cin_p = _round_up(max(Cin, 8), 8)                # narrow K side: don't inflate HBM bytes
    Cout_p = _round_up(max(Cout, LANES), LANES)      # lane-dense output side

    # ---- BN1 (training-mode, exact biased batch stats) folded and applied in the wrapper ----
    # Same f32 math as the in-kernel version, just hoisted; it fuses into the im2col layout pass
    # the wrapper performs anyway, removes the halo-mask stream, and lets x1 be staged to HBM in
    # bf16 (its only consumers are MXU LHS operands).
    mean1 = jnp.mean(x, axis=(0, 1, 2))
    var1 = jnp.var(x, axis=(0, 1, 2))                               # biased, training-mode BN
    scale1 = params["g1"] * lax.rsqrt(var1 + EPS)
    shift1 = params["be1"] - mean1 * scale1
    x1 = jnp.maximum(x * scale1 + shift1, 0.0)
    x1 = jnp.pad(x1, ((0, 0), (0, 0), (0, 0), (0, Cin_p - Cin)))    # padded channels are exact 0

    # stride-2 3x3 im2col of x1 in bf16: 9/4 of the input elements (stride 2), halved by bf16.
    xp = jnp.pad(x1, ((0, 0), (1, 1), (1, 1), (0, 0)))
    cols = [xp[:, ky:ky + H:2, kx:kx + W:2, :] for ky in range(3) for kx in range(3)]
    im = jnp.stack(cols, axis=3).reshape(N, Ho * Wo, 9 * Cin_p).astype(jnp.bfloat16)
    # shortcut input: x1 at the stride-2 positions (tiny), consumed only in phase 1.
    xs = x1[:, ::2, ::2, :].reshape(N, Ho * Wo, Cin_p).astype(jnp.bfloat16)

    w1 = jnp.pad(params["w1"], ((0, 0), (0, 0), (0, Cin_p - Cin), (0, Cout_p - Cout)))
    w1 = w1.reshape(9 * Cin_p, Cout_p).astype(jnp.bfloat16)
    w2 = jnp.pad(params["w2"], ((0, 0), (0, 0), (0, Cout_p - Cout), (0, Cout_p - Cout)))
    w2 = w2.reshape(9 * Cout_p, Cout_p).astype(jnp.bfloat16)
    wsc = jnp.pad(params["wsc"], ((0, Cin_p - Cin), (0, Cout_p - Cout))).astype(jnp.bfloat16)
    bn2 = jnp.stack([jnp.pad(params["g2"], (0, Cout_p - Cout)),
                     jnp.pad(params["be2"], (0, Cout_p - Cout))]).astype(jnp.float32)

    B = _pick_batch_block(N, Ho * Wo)
    NB = N // B
    BM = B * Ho * Wo
    kernel = make_wrn_block_kernel(N, B, Ho, Wo, Cin_p, Cout_p)

    m_rows = N * Ho * Wo
    flops = 2 * m_rows * (9 * Cin_p + 9 * Cout_p + Cin_p) * Cout_p
    bytes_acc = (im.size + xs.size + w1.size + w2.size + wsc.size) * 2 \
                + bn2.size * 4 + m_rows * Cout_p * 4

    out = pl.pallas_call(
        kernel,
        out_shape=jax.ShapeDtypeStruct((N, Ho * Wo, Cout_p), jnp.float32),
        grid_spec=pltpu.PrefetchScalarGridSpec(
            num_scalar_prefetch=0,
            grid=(2, NB),        # (phase, batch block); phase outer so BN2 stats are final first
            in_specs=[
                # im2col'd x1: read only in phase 0; pinned to its LAST block in phase 1 so the
                # phase transition causes no re-DMA and phase 1 does no wasted input pass.
                pl.BlockSpec((B, Ho * Wo, 9 * Cin_p),
                             lambda p, b: (b + p * (NB - 1 - b), 0, 0)),
                # shortcut input: read only in phase 1 (pinned to block 0 during phase 0).
                pl.BlockSpec((B, Ho * Wo, Cin_p), lambda p, b: (b * p, 0, 0)),
                pl.BlockSpec((9 * Cin_p, Cout_p), lambda p, b: (0, 0)),     # w1 (bf16, resident)
                pl.BlockSpec((9 * Cout_p, Cout_p), lambda p, b: (0, 0)),    # w2 (bf16, resident)
                pl.BlockSpec((Cin_p, Cout_p), lambda p, b: (0, 0)),         # wsc (bf16, resident)
                pl.BlockSpec((2, Cout_p), lambda p, b: (0, 0)),             # gamma2 / beta2
            ],
            # Phase-aware output map: constant block in phase 0 (no garbage writebacks), real
            # block index only in phase 1 -> exactly NB output writebacks.
            out_specs=pl.BlockSpec((B, Ho * Wo, Cout_p), lambda p, b: (b * p, 0, 0)),
            scratch_shapes=[
                pltpu.VMEM((1, Cout_p), jnp.float32),                   # BN2 sum
                pltpu.VMEM((1, Cout_p), jnp.float32),                   # BN2 sum of squares
                pltpu.VMEM((NB, BM, Cout_p), jnp.bfloat16),             # y (conv1 out), resident
                pltpu.VMEM((B, Ho + 2, Wo + 2, Cout_p), jnp.bfloat16),  # padded h (halo zeroed once)
            ],
        ),
        compiler_params=pltpu.CompilerParams(
            dimension_semantics=("arbitrary", "arbitrary"),  # carried BN2 stats + resident y_buf
            vmem_limit_bytes=32 * 1024 * 1024,               # test working set << 32 MiB
        ),
        cost_estimate=pl.CostEstimate(flops=flops, transcendentals=Cout_p,
                                      bytes_accessed=bytes_acc),
    )(im, xs, w1, w2, wsc, bn2)

    out = out.reshape(N, Ho, Wo, Cout_p)[..., :Cout]          # drop channel padding (fused by XLA
    return jnp.transpose(out, (0, 3, 1, 2))                   # with the NHWC -> NCHW transpose)


def wrn_basic_block_ref(x_nchw, params):
    # Pure-JAX reference (f32, HIGHEST precision) for validation.
    x = jnp.transpose(x_nchw, (0, 2, 3, 1)).astype(jnp.float32)

    def bn_relu(v, g, b):
        mean = jnp.mean(v, axis=(0, 1, 2))
        var = jnp.var(v, axis=(0, 1, 2))                      # biased, as in training-mode BN
        return jnp.maximum((v - mean) * lax.rsqrt(var + EPS) * g + b, 0.0)

    dn = ('NHWC', 'HWIO', 'NHWC')
    x1 = bn_relu(x, params["g1"], params["be1"])
    y = lax.conv_general_dilated(x1, params["w1"], (2, 2), ((1, 1), (1, 1)),
                                 dimension_numbers=dn, precision=lax.Precision.HIGHEST)
    h = bn_relu(y, params["g2"], params["be2"])
    out = lax.conv_general_dilated(h, params["w2"], (1, 1), ((1, 1), (1, 1)),
                                   dimension_numbers=dn, precision=lax.Precision.HIGHEST)
    sc = jnp.einsum('nhwc,cd->nhwd', x1[:, ::2, ::2, :], params["wsc"],
                    precision=lax.Precision.HIGHEST)
    return jnp.transpose(sc + out, (0, 3, 1, 2))


def init_params(key, in_planes, planes):
    # Synthetic weights (HWIO conv layout).  BN gamma/beta made non-trivial so the self-check
    # is sensitive to scale/shift mistakes.  No conv biases (bias=False in the module).
    ks = jax.random.split(key, 7)
    s = 0.1
    return {
        "w1": s * jax.random.normal(ks[0], (3, 3, in_planes, planes), jnp.float32),
        "w2": s * jax.random.normal(ks[1], (3, 3, planes, planes), jnp.float32),
        "wsc": s * jax.random.normal(ks[2], (in_planes, planes), jnp.float32),
        "g1": 1.0 + 0.1 * jax.random.normal(ks[3], (in_planes,), jnp.float32),
        "be1": 0.1 * jax.random.normal(ks[4], (in_planes,), jnp.float32),
        "g2": 1.0 + 0.1 * jax.random.normal(ks[5], (planes,), jnp.float32),
        "be2": 0.1 * jax.random.normal(ks[6], (planes,), jnp.float32),
    }


if __name__ == "__main__":
    key = jax.random.PRNGKey(0)
    k_x, k_p = jax.random.split(key)
    x = jax.random.normal(k_x, (2, 4, 16, 16), jnp.float32)   # NCHW: batch=2, in_planes=4, 16x16
    params = init_params(k_p, in_planes=4, planes=8)

    out = wrn_basic_block(x, params)
    out = jax.block_until_ready(out)

    assert out.shape == (2, 8, 8, 8) and out.dtype == jnp.float32
    assert bool(jnp.all(jnp.isfinite(out)))
    ref = wrn_basic_block_ref(x, params)
    err = float(jnp.max(jnp.abs(out - ref)))
    # bf16 MXU inputs / bf16-staged y with f32 accumulation & f32 BN statistics -> small numerical
    # difference vs the f32 HIGHEST reference.  TODO(synk): per-stage validation for wide configs.
    assert err < 1e-1, f"mismatch vs pure-JAX reference: max abs err = {err}"
    print("KERNEL_OK")
</pallas_src>

<mosaic_0001>
module attributes {stable_mosaic.version = 11 : i64} {
  func.func @kernel(%arg0: i32, %arg1: i32, %arg2: memref<2x64x72xbf16, #tpu.memory_space<vmem>>, %arg3: memref<2x64x8xbf16, #tpu.memory_space<vmem>>, %arg4: memref<72x128xbf16, #tpu.memory_space<vmem>>, %arg5: memref<1152x128xbf16, #tpu.memory_space<vmem>>, %arg6: memref<8x128xbf16, #tpu.memory_space<vmem>>, %arg7: memref<2x128xf32, #tpu.memory_space<vmem>>, %arg8: memref<2x64x128xf32, #tpu.memory_space<vmem>>, %arg9: memref<1x128xf32, #tpu.memory_space<vmem>>, %arg10: memref<1x128xf32, #tpu.memory_space<vmem>>, %arg11: memref<1x128x128xbf16, #tpu.memory_space<vmem>>, %arg12: memref<2x10x10x128xbf16, #tpu.memory_space<vmem>>) attributes {dimension_semantics = [#tpu.dimension_semantics<arbitrary>, #tpu.dimension_semantics<arbitrary>], iteration_bounds = array<i64: 2, 1>, scalar_prefetch = 0 : i64, scratch_operands = 4 : i64, tpu.core_type = #tpu.core_type<tc>, window_params = [{transform_indices = @transform_0, window_bounds = array<i64: 2, 64, 72>}, {transform_indices = @transform_1, window_bounds = array<i64: 2, 64, 8>}, {pipeline_mode = #tpu.pipeline_mode<synchronous>, transform_indices = @transform_2, window_bounds = array<i64: 72, 128>}, {pipeline_mode = #tpu.pipeline_mode<synchronous>, transform_indices = @transform_3, window_bounds = array<i64: 1152, 128>}, {pipeline_mode = #tpu.pipeline_mode<synchronous>, transform_indices = @transform_4, window_bounds = array<i64: 8, 128>}, {pipeline_mode = #tpu.pipeline_mode<synchronous>, transform_indices = @transform_5, window_bounds = array<i64: 2, 128>}, {transform_indices = @transform_6, window_bounds = array<i64: 2, 64, 128>}]} {
    %c0_i32 = arith.constant 0 : i32
    %0 = arith.cmpi eq, %arg0, %c0_i32 : i32
    %c0_i32_0 = arith.constant 0 : i32
    %1 = arith.cmpi eq, %arg1, %c0_i32_0 : i32
    %2 = arith.andi %0, %1 : i1
    %3 = arith.extui %2 : i1 to i32
    %c0_i32_1 = arith.constant 0 : i32
    %4 = arith.cmpi ne, %3, %c0_i32_1 : i32
    scf.if %4 {
      %cst = arith.constant 0.000000e+00 : f32
      %11 = vector.broadcast %cst : f32 to vector<1x128xf32>
      %c0 = arith.constant 0 : index
      %c0_5 = arith.constant 0 : index
      %12 = vector.load %arg9[%c0, %c0_5] : memref<1x128xf32, #tpu.memory_space<vmem>>, vector<1x128xf32>
      tpu.vector_store %arg9[%c0, %c0_5], %11 {strides = array<i32>} : memref<1x128xf32, #tpu.memory_space<vmem>>, vector<1x128xf32>,
      %cst_6 = arith.constant 0.000000e+00 : f32
      %13 = vector.broadcast %cst_6 : f32 to vector<1x128xf32>
      %c0_7 = arith.constant 0 : index
      %c0_8 = arith.constant 0 : index
      %14 = vector.load %arg10[%c0_7, %c0_8] : memref<1x128xf32, #tpu.memory_space<vmem>>, vector<1x128xf32>
      tpu.vector_store %arg10[%c0_7, %c0_8], %13 {strides = array<i32>} : memref<1x128xf32, #tpu.memory_space<vmem>>, vector<1x128xf32>,
      %cst_9 = arith.constant 0.000000e+00 : bf16
      %15 = vector.broadcast %cst_9 : bf16 to vector<2x10x10x128xbf16>
      %c0_10 = arith.constant 0 : index
      %c0_11 = arith.constant 0 : index
      %c0_12 = arith.constant 0 : index
      %c0_13 = arith.constant 0 : index
      %16 = vector.load %arg12[%c0_10, %c0_11, %c0_12, %c0_13] : memref<2x10x10x128xbf16, #tpu.memory_space<vmem>>, vector<2x10x10x128xbf16>
      tpu.vector_store %arg12[%c0_10, %c0_11, %c0_12, %c0_13], %15 {strides = array<i32>} : memref<2x10x10x128xbf16, #tpu.memory_space<vmem>>, vector<2x10x10x128xbf16>,
    } else {
    }
    %c0_i32_2 = arith.constant 0 : i32
    %5 = arith.cmpi eq, %arg0, %c0_i32_2 : i32
    %6 = arith.extui %5 : i1 to i32
    %c0_i32_3 = arith.constant 0 : i32
    %7 = arith.cmpi ne, %6, %c0_i32_3 : i32
    scf.if %7 {
      %c0 = arith.constant 0 : index
      %c0_5 = arith.constant 0 : index
      %c0_6 = arith.constant 0 : index
      %11 = vector.load %arg2[%c0, %c0_5, %c0_6] : memref<2x64x72xbf16, #tpu.memory_space<vmem>>, vector<2x64x72xbf16>
      %12 = vector.shape_cast %11 : vector<2x64x72xbf16> to vector<128x72xbf16>
      %c0_7 = arith.constant 0 : index
      %c0_8 = arith.constant 0 : index
      %13 = vector.load %arg4[%c0_7, %c0_8] : memref<72x128xbf16, #tpu.memory_space<vmem>>, vector<72x128xbf16>
      %cst = arith.constant dense<0.000000e+00> : vector<128x128xf32>
      %14 = tpu.matmul %12, %13, %cst {dimension_numbers = #tpu.dot_dimension_numbers<[1], [0], [0], [1], [0, 0, 1, 1], [], []>} : vector<128x72xbf16>, vector<72x128xbf16>, vector<128x128xf32> -> vector<128x128xf32>
      %c0_9 = arith.constant 0 : index
      %c0_10 = arith.constant 0 : index
      %15 = vector.load %arg9[%c0_9, %c0_10] : memref<1x128xf32, #tpu.memory_space<vmem>>, vector<1x128xf32>
      %cst_11 = arith.constant dense<0.000000e+00> : vector<128xf32>
      %16 = vector.multi_reduction <add>, %14, %cst_11 [0] : vector<128x128xf32> to vector<128xf32>
      %17 = vector.shape_cast %16 : vector<128xf32> to vector<1x128xf32>
      %18 = arith.addf %15, %17 : vector<1x128xf32>
      %c0_12 = arith.constant 0 : index
      %c0_13 = arith.constant 0 : index
      %19 = vector.load %arg9[%c0_12, %c0_13] : memref<1x128xf32, #tpu.memory_space<vmem>>, vector<1x128xf32>
      tpu.vector_store %arg9[%c0_12, %c0_13], %18 {strides = array<i32>} : memref<1x128xf32, #tpu.memory_space<vmem>>, vector<1x128xf32>,
      %c0_14 = arith.constant 0 : index
      %c0_15 = arith.constant 0 : index
      %20 = vector.load %arg10[%c0_14, %c0_15] : memref<1x128xf32, #tpu.memory_space<vmem>>, vector<1x128xf32>
      %21 = arith.mulf %14, %14 : vector<128x128xf32>
      %cst_16 = arith.constant dense<0.000000e+00> : vector<128xf32>
      %22 = vector.multi_reduction <add>, %21, %cst_16 [0] : vector<128x128xf32> to vector<128xf32>
      %23 = vector.shape_cast %22 : vector<128xf32> to vector<1x128xf32>
      %24 = arith.addf %20, %23 : vector<1x128xf32>
      %c0_17 = arith.constant 0 : index
      %c0_18 = arith.constant 0 : index
      %25 = vector.load %arg10[%c0_17, %c0_18] : memref<1x128xf32, #tpu.memory_space<vmem>>, vector<1x128xf32>
      tpu.vector_store %arg10[%c0_17, %c0_18], %24 {strides = array<i32>} : memref<1x128xf32, #tpu.memory_space<vmem>>, vector<1x128xf32>,
      %26 = arith.truncf %14 : vector<128x128xf32> to vector<128x128xbf16>
      %27 = arith.index_cast %arg1 : i32 to index
      %c0_19 = arith.constant 0 : index
      %c0_20 = arith.constant 0 : index
      %28 = vector.load %arg11[%27, %c0_19, %c0_20] : memref<1x128x128xbf16, #tpu.memory_space<vmem>>, vector<1x128x128xbf16>
      %29 = vector.shape_cast %28 : vector<1x128x128xbf16> to vector<128x128xbf16>
      %30 = vector.shape_cast %26 : vector<128x128xbf16> to vector<1x128x128xbf16>
      tpu.vector_store %arg11[%27, %c0_19, %c0_20], %30 {strides = array<i32>} : memref<1x128x128xbf16, #tpu.memory_space<vmem>>, vector<1x128x128xbf16>,
    } else {
    }
    %c1_i32 = arith.constant 1 : i32
    %8 = arith.cmpi eq, %arg0, %c1_i32 : i32
    %9 = arith.extui %8 : i1 to i32
    %c0_i32_4 = arith.constant 0 : i32
    %10 = arith.cmpi ne, %9, %c0_i32_4 : i32
    scf.if %10 {
      %c0 = arith.constant 0 : index
      %c0_5 = arith.constant 0 : index
      %11 = vector.load %arg7[%c0, %c0_5] : memref<2x128xf32, #tpu.memory_space<vmem>>, vector<1x128xf32>
      %c1 = arith.constant 1 : index
      %c0_6 = arith.constant 0 : index
      %12 = vector.load %arg7[%c1, %c0_6] : memref<2x128xf32, #tpu.memory_space<vmem>>, vector<1x128xf32>
      %c0_7 = arith.constant 0 : index
      %c0_8 = arith.constant 0 : index
      %13 = vector.load %arg9[%c0_7, %c0_8] : memref<1x128xf32, #tpu.memory_space<vmem>>, vector<1x128xf32>
      %cst = arith.constant 7.812500e-03 : f32
      %14 = vector.broadcast %cst : f32 to vector<1x128xf32>
      %15 = arith.mulf %13, %14 : vector<1x128xf32>
      %c0_9 = arith.constant 0 : index
      %c0_10 = arith.constant 0 : index
      %16 = vector.load %arg10[%c0_9, %c0_10] : memref<1x128xf32, #tpu.memory_space<vmem>>, vector<1x128xf32>
      %cst_11 = arith.constant 7.812500e-03 : f32
      %17 = vector.broadcast %cst_11 : f32 to vector<1x128xf32>
      %18 = arith.mulf %16, %17 : vector<1x128xf32>
      %19 = arith.mulf %15, %15 : vector<1x128xf32>
      %20 = arith.subf %18, %19 : vector<1x128xf32>
      %cst_12 = arith.constant 9.99999974E-6 : f32
      %21 = vector.broadcast %cst_12 : f32 to vector<1x128xf32>
      %22 = arith.addf %20, %21 : vector<1x128xf32>
      %23 = math.rsqrt %22 : vector<1x128xf32>
      %24 = arith.mulf %11, %23 : vector<1x128xf32>
      %25 = arith.mulf %15, %24 : vector<1x128xf32>
      %26 = arith.subf %12, %25 : vector<1x128xf32>
      %27 = arith.index_cast %arg1 : i32 to index
      %c0_13 = arith.constant 0 : index
      %c0_14 = arith.constant 0 : index
      %28 = vector.load %arg11[%27, %c0_13, %c0_14] : memref<1x128x128xbf16, #tpu.memory_space<vmem>>, vector<1x128x128xbf16>
      %29 = vector.shape_cast %28 : vector<1x128x128xbf16> to vector<128x128xbf16>
      %30 = arith.extf %29 : vector<128x128xbf16> to vector<128x128xf32>
      %31 = vector.broadcast %24 : vector<1x128xf32> to vector<128x128xf32>
      %32 = arith.mulf %30, %31 : vector<128x128xf32>
      %33 = vector.broadcast %26 : vector<1x128xf32> to vector<128x128xf32>
      %34 = arith.addf %32, %33 : vector<128x128xf32>
      %cst_15 = arith.constant 0.000000e+00 : f32
      %35 = vector.broadcast %cst_15 : f32 to vector<128x128xf32>
      %36 = arith.maximumf %34, %35 : vector<128x128xf32>
      %37 = vector.shape_cast %36 : vector<128x128xf32> to vector<2x8x8x128xf32>
      %38 = arith.truncf %37 : vector<2x8x8x128xf32> to vector<2x8x8x128xbf16>
      %c0_16 = arith.constant 0 : index
      %c1_17 = arith.constant 1 : index
      %c1_18 = arith.constant 1 : index
      %c0_19 = arith.constant 0 : index
      %39 = vector.load %arg12[%c0_16, %c1_17, %c1_18, %c0_19] : memref<2x10x10x128xbf16, #tpu.memory_space<vmem>>, vector<2x8x8x128xbf16>
      tpu.vector_store %arg12[%c0_16, %c1_17, %c1_18, %c0_19], %38 {strides = array<i32>} : memref<2x10x10x128xbf16, #tpu.memory_space<vmem>>, vector<2x8x8x128xbf16>,
      %c0_20 = arith.constant 0 : index
      %c0_21 = arith.constant 0 : index
      %c0_22 = arith.constant 0 : index
      %c0_23 = arith.constant 0 : index
      %40 = vector.load %arg12[%c0_20, %c0_21, %c0_22, %c0_23] : memref<2x10x10x128xbf16, #tpu.memory_space<vmem>>, vector<2x8x8x128xbf16>
      %41 = vector.shape_cast %40 : vector<2x8x8x128xbf16> to vector<128x128xbf16>
      %c0_24 = arith.constant 0 : index
      %c0_25 = arith.constant 0 : index
      %c1_26 = arith.constant 1 : index
      %c0_27 = arith.constant 0 : index
      %42 = vector.load %arg12[%c0_24, %c0_25, %c1_26, %c0_27] : memref<2x10x10x128xbf16, #tpu.memory_space<vmem>>, vector<2x8x8x128xbf16>
      %43 = vector.shape_cast %42 : vector<2x8x8x128xbf16> to vector<128x128xbf16>
      %c0_28 = arith.constant 0 : index
      %c0_29 = arith.constant 0 : index
      %c2 = arith.constant 2 : index
      %c0_30 = arith.constant 0 : index
      %44 = vector.load %arg12[%c0_28, %c0_29, %c2, %c0_30] : memref<2x10x10x128xbf16, #tpu.memory_space<vmem>>, vector<2x8x8x128xbf16>
      %45 = vector.shape_cast %44 : vector<2x8x8x128xbf16> to vector<128x128xbf16>
      %c0_31 = arith.constant 0 : index
      %c1_32 = arith.constant 1 : index
      %c0_33 = arith.constant 0 : index
      %c0_34 = arith.constant 0 : index
      %46 = vector.load %arg12[%c0_31, %c1_32, %c0_33, %c0_34] : memref<2x10x10x128xbf16, #tpu.memory_space<vmem>>, vector<2x8x8x128xbf16>
      %47 = vector.shape_cast %46 : vector<2x8x8x128xbf16> to vector<128x128xbf16>
      %c0_35 = arith.constant 0 : index
      %c1_36 = arith.constant 1 : index
      %c1_37 = arith.constant 1 : index
      %c0_38 = arith.constant 0 : index
      %48 = vector.load %arg12[%c0_35, %c1_36, %c1_37, %c0_38] : memref<2x10x10x128xbf16, #tpu.memory_space<vmem>>, vector<2x8x8x128xbf16>
      %49 = vector.shape_cast %48 : vector<2x8x8x128xbf16> to vector<128x128xbf16>
      %c0_39 = arith.constant 0 : index
      %c1_40 = arith.constant 1 : index
      %c2_41 = arith.constant 2 : index
      %c0_42 = arith.constant 0 : index
      %50 = vector.load %arg12[%c0_39, %c1_40, %c2_41, %c0_42] : memref<2x10x10x128xbf16, #tpu.memory_space<vmem>>, vector<2x8x8x128xbf16>
      %51 = vector.shape_cast %50 : vector<2x8x8x128xbf16> to vector<128x128xbf16>
      %c0_43 = arith.constant 0 : index
      %c2_44 = arith.constant 2 : index
      %c0_45 = arith.constant 0 : index
      %c0_46 = arith.constant 0 : index
      %52 = vector.load %arg12[%c0_43, %c2_44, %c0_45, %c0_46] : memref<2x10x10x128xbf16, #tpu.memory_space<vmem>>, vector<2x8x8x128xbf16>
      %53 = vector.shape_cast %52 : vector<2x8x8x128xbf16> to vector<128x128xbf16>
      %c0_47 = arith.constant 0 : index
      %c2_48 = arith.constant 2 : index
      %c1_49 = arith.constant 1 : index
      %c0_50 = arith.constant 0 : index
      %54 = vector.load %arg12[%c0_47, %c2_48, %c1_49, %c0_50] : memref<2x10x10x128xbf16, #tpu.memory_space<vmem>>, vector<2x8x8x128xbf16>
      %55 = vector.shape_cast %54 : vector<2x8x8x128xbf16> to vector<128x128xbf16>
      %c0_51 = arith.constant 0 : index
      %c2_52 = arith.constant 2 : index
      %c2_53 = arith.constant 2 : index
      %c0_54 = arith.constant 0 : index
      %56 = vector.load %arg12[%c0_51, %c2_52, %c2_53, %c0_54] : memref<2x10x10x128xbf16, #tpu.memory_space<vmem>>, vector<2x8x8x128xbf16>
      %57 = vector.shape_cast %56 : vector<2x8x8x128xbf16> to vector<128x128xbf16>
      %58 = tpu.concatenate %41, %43, %45, %47, %49, %51, %53, %55, %57 in 1 : vector<128x128xbf16>, vector<128x128xbf16>, vector<128x128xbf16>, vector<128x128xbf16>, vector<128x128xbf16>, vector<128x128xbf16>, vector<128x128xbf16>, vector<128x128xbf16>, vector<128x128xbf16> -> vector<128x1152xbf16>
      %c0_55 = arith.constant 0 : index
      %c0_56 = arith.constant 0 : index
      %59 = vector.load %arg5[%c0_55, %c0_56] : memref<1152x128xbf16, #tpu.memory_space<vmem>>, vector<1152x128xbf16>
      %cst_57 = arith.constant dense<0.000000e+00> : vector<128x128xf32>
      %60 = tpu.matmul %58, %59, %cst_57 {dimension_numbers = #tpu.dot_dimension_numbers<[1], [0], [0], [1], [0, 0, 1, 1], [], []>} : vector<128x1152xbf16>, vector<1152x128xbf16>, vector<128x128xf32> -> vector<128x128xf32>
      %c0_58 = arith.constant 0 : index
      %c0_59 = arith.constant 0 : index
      %c0_60 = arith.constant 0 : index
      %61 = vector.load %arg3[%c0_58, %c0_59, %c0_60] : memref<2x64x8xbf16, #tpu.memory_space<vmem>>, vector<2x64x8xbf16>
      %62 = vector.shape_cast %61 : vector<2x64x8xbf16> to vector<128x8xbf16>
      %c0_61 = arith.constant 0 : index
      %c0_62 = arith.constant 0 : index
      %63 = vector.load %arg6[%c0_61, %c0_62] : memref<8x128xbf16, #tpu.memory_space<vmem>>, vector<8x128xbf16>
      %cst_63 = arith.constant dense<0.000000e+00> : vector<128x128xf32>
      %64 = tpu.matmul %62, %63, %cst_63 {dimension_numbers = #tpu.dot_dimension_numbers<[1], [0], [0], [1], [0, 0, 1, 1], [], []>} : vector<128x8xbf16>, vector<8x128xbf16>, vector<128x128xf32> -> vector<128x128xf32>
      %65 = arith.addf %60, %64 : vector<128x128xf32>
      %66 = vector.shape_cast %65 : vector<128x128xf32> to vector<2x64x128xf32>
      %c0_64 = arith.constant 0 : index
      %c0_65 = arith.constant 0 : index
      %c0_66 = arith.constant 0 : index
      %67 = vector.load %arg8[%c0_64, %c0_65, %c0_66] : memref<2x64x128xf32, #tpu.memory_space<vmem>>, vector<2x64x128xf32>
      tpu.vector_store %arg8[%c0_64, %c0_65, %c0_66], %66 {strides = array<i32>} : memref<2x64x128xf32, #tpu.memory_space<vmem>>, vector<2x64x128xf32>,
    } else {
    }
    return
  }
  func.func @transform_0(%arg0: i32, %arg1: i32) -> (i32, i32, i32) {
    %c0_i32 = arith.constant 0 : i32
    %0 = arith.subi %c0_i32, %arg1 : i32
    %1 = arith.muli %arg0, %0 : i32
    %2 = arith.addi %arg1, %1 : i32
    %c0_i32_0 = arith.constant 0 : i32
    %c0_i32_1 = arith.constant 0 : i32
    %c0_i32_2 = arith.constant 0 : i32
    return %2, %c0_i32_0, %c0_i32_1 : i32, i32, i32
  }
  func.func @transform_1(%arg0: i32, %arg1: i32) -> (i32, i32, i32) {
    %0 = arith.muli %arg1, %arg0 : i32
    %c0_i32 = arith.constant 0 : i32
    %c0_i32_0 = arith.constant 0 : i32
    %c0_i32_1 = arith.constant 0 : i32
    return %0, %c0_i32, %c0_i32_0 : i32, i32, i32
  }
  func.func @transform_2(%arg0: i32, %arg1: i32) -> (i32, i32) {
    %c0_i32 = arith.constant 0 : i32
    %c0_i32_0 = arith.constant 0 : i32
    %c0_i32_1 = arith.constant 0 : i32
    return %c0_i32, %c0_i32_0 : i32, i32
  }
  func.func @transform_3(%arg0: i32, %arg1: i32) -> (i32, i32) {
    %c0_i32 = arith.constant 0 : i32
    %c0_i32_0 = arith.constant 0 : i32
    %c0_i32_1 = arith.constant 0 : i32
    return %c0_i32, %c0_i32_0 : i32, i32
  }
  func.func @transform_4(%arg0: i32, %arg1: i32) -> (i32, i32) {
    %c0_i32 = arith.constant 0 : i32
    %c0_i32_0 = arith.constant 0 : i32
    %c0_i32_1 = arith.constant 0 : i32
    return %c0_i32, %c0_i32_0 : i32, i32
  }
  func.func @transform_5(%arg0: i32, %arg1: i32) -> (i32, i32) {
    %c0_i32 = arith.constant 0 : i32
    %c0_i32_0 = arith.constant 0 : i32
    %c0_i32_1 = arith.constant 0 : i32
    return %c0_i32, %c0_i32_0 : i32, i32
  }
  func.func @transform_6(%arg0: i32, %arg1: i32) -> (i32, i32, i32) {
    %0 = arith.muli %arg1, %arg0 : i32
    %c0_i32 = arith.constant 0 : i32
    %c0_i32_0 = arith.constant 0 : i32
    %c0_i32_1 = arith.constant 0 : i32
    return %0, %c0_i32, %c0_i32_0 : i32, i32, i32
  }
}

</mosaic_0001>

<llo_original>
// kernel: wrn_basic_block.1
$region0: #{wrn_basic_block.1}
  #allocation0 [shape = 'u32[]', space=smem, size = 0x4, offset = 0x4, fixed_abs, tag = 'smem constant byte address 0x4 - core index']
  #allocation1 [shape = 'u32[144,128]{1,0:T(1,128)}', space=vmem, size = 0x12000, scoped, tag = 'internal scratch']
  #allocation2 [shape = 'f32[1,128]{1,0:T(1,128)}', space=vmem, size = 0x200, scoped, tag = 'scratch operand']
  #allocation3 [shape = 'f32[1,128]{1,0:T(1,128)}', space=vmem, size = 0x200, scoped, tag = 'scratch operand']
  #allocation4 [shape = 'bf16[1,128,128]{2,1,0:T(16,128)(2,1)}', space=vmem, size = 0x8000, scoped, tag = 'scratch operand']
  #allocation5 [shape = 'bf16[2,10,10,128]{3,2,1,0:T(8,128)(2,1)}', space=vmem, size = 0x14000, scoped, tag = 'scratch operand']
  %s0 = inlined_call_operand.vmem [shape: bf16[2,64,72], index: 0, kind: input, shape index: {}]
  %s1 = inlined_call_operand.vmem [shape: bf16[2,64,8], index: 1, kind: input, shape index: {}]
  %s2 = inlined_call_operand.vmem [shape: bf16[72,128], index: 2, kind: input, shape index: {}]
  %s3 = inlined_call_operand.vmem [shape: bf16[1152,128], index: 3, kind: input, shape index: {}]
  %s4 = inlined_call_operand.vmem [shape: bf16[8,128], index: 4, kind: input, shape index: {}]
  %s5 = inlined_call_operand.vmem [shape: f32[2,128], index: 5, kind: input, shape index: {}]
  %s6 = inlined_call_operand.vmem [shape: f32[2,64,128], index: 6, kind: output, shape index: {}]
  %s7 = sld [smem:[#allocation0]]
  $region69: #{wrn_basic_block.1} parent=0
    _
  %s9 = ssub.s32 1, %s7
  %s10 = scalar_select 0, %s9, %s7
  loop: start=0, step=1, limit=4
  $region2: #{wrn_basic_block.1} parent=0 // loop_pre_header
    _
  $region3: #{wrn_basic_block.1} parent=0 // loop_header
    %s12 = sphi 0, %s16
    %p13 = scmp.ge.s32.totalorder %s12, 4
    %s19 = sphi 0, %s31
    %s20 = sphi 0, %s27
    %s21 = sphi 0, %s19
    %s22 = sphi 0, %s20
    %s23 = sphi 0, %s21
    %s24 = sphi 0, %s22
    %s40 = sphi 0, %s42
    %s43 = sphi 0, %s40
    %s44 = sphi 0, %s43
    %s60 = sphi 0, %s44
    %s68 = sphi 0, %s70
    %s71 = sphi 0, %s68
    %s72 = sphi 0, %s71
    %s88 = sphi 0, %s72
    %s92 = sphi 0, %s92
    %s94 = sphi 0, %s92
    %s95 = sphi 0, %s94
    %s109 = sphi 0, %s95
    %s113 = sphi 0, %s113
    %s115 = sphi 0, %s113
    %s116 = sphi 0, %s115
    %s130 = sphi 0, %s116
    %s134 = sphi 0, %s134
    %s136 = sphi 0, %s134
    %s137 = sphi 0, %s136
    %s151 = sphi 0, %s137
    %s155 = sphi 0, %s155
    %s157 = sphi 0, %s155
    %s158 = sphi 0, %s157
    %s172 = sphi 0, %s158
    %s180 = sphi 0, %s182
    %s183 = sphi 0, %s180
    %s184 = sphi 0, %s183
    %s200 = sphi 0, %s184
  $region4: #{wrn_basic_block.1} parent=0 // loop_header_branch
    %15 = sbr.rel (%p13) target = $region8
  $region5: #{wrn_basic_block.1} parent=0 // loop_body
    %s17 = ssub.s32 %s12, 1
    %s18 = ssub.s32 %s12, 2
    %s25 = sadd.s32 1, %s20
    %p26 = scmp.ge.s32.totalorder %s25, 1
    %s27 = scalar_select %p26, 0, %s25
    %s28 = sadd.s32 1, %s19
    %s29 = scalar_select %p26, %s28, %s19
    %p30 = scmp.ge.s32.totalorder %s29, 2
    %s31 = scalar_select %p30, 0, %s29
    %s32 = ssub.s32 0, %s20
    %s33 = smul.u32 %s19, %s32
    %s34 = sadd.s32 %s20, %s33
    %s35 = ssub.s32 0, %s27
    %s36 = smul.u32 %s31, %s35
    %s37 = sadd.s32 %s27, %s36
    %s38 = ssub.s32 %s34, %s37
    %p39 = scmp.eq.s32.totalorder %s38, 0
    %s41 = sadd.s32 %s40, 1
    %s42 = scalar_select %p39, %s40, %s41
    %p45 = pneg %p39
    %p46 = scmp.eq.s32.totalorder %s12, 1
    %p47 = por %p45, %p46
    %p48 = scmp.ne.s32.totalorder %s40, %s43
    %p49 = scmp.eq.s32.totalorder %s12, 0
    %p50 = por %p48, %p49
    %p51 = scmp.ne.s32.totalorder %s40, %s43
    %p52 = scmp.eq.s32.totalorder %s17, 1
    %p53 = por %p51, %p52
    %p54 = scmp.ne.s32.totalorder %s43, %s44
    %p55 = scmp.eq.s32.totalorder %s17, 0
    %p56 = por %p54, %p55
    %p57 = scmp.ne.s32.totalorder %s43, %s44
    %p58 = scmp.eq.s32.totalorder %s18, 1
    %p59 = por %p57, %p58
    %p61 = scmp.ne.s32.totalorder %s44, %s60
    %p62 = scmp.eq.s32.totalorder %s18, 0
    %p63 = por %p61, %p62
    %s64 = smul.u32 %s20, %s19
    %s65 = smul.u32 %s27, %s31
    %s66 = ssub.s32 %s64, %s65
    %p67 = scmp.eq.s32.totalorder %s66, 0
    %s69 = sadd.s32 %s68, 1
    %s70 = scalar_select %p67, %s68, %s69
    %p73 = pneg %p67
    %p74 = scmp.eq.s32.totalorder %s12, 1
    %p75 = por %p73, %p74
    %p76 = scmp.ne.s32.totalorder %s68, %s71
    %p77 = scmp.eq.s32.totalorder %s12, 0
    %p78 = por %p76, %p77
    %p79 = scmp.ne.s32.totalorder %s68, %s71
    %p80 = scmp.eq.s32.totalorder %s17, 1
    %p81 = por %p79, %p80
    %p82 = scmp.ne.s32.totalorder %s71, %s72
    %p83 = scmp.eq.s32.totalorder %s17, 0
    %p84 = por %p82, %p83
    %p85 = scmp.ne.s32.totalorder %s71, %s72
    %p86 = scmp.eq.s32.totalorder %s18, 1
    %p87 = por %p85, %p86
    %p89 = scmp.ne.s32.totalorder %s72, %s88
    %p90 = scmp.eq.s32.totalorder %s18, 0
    %p91 = por %p89, %p90
    %s93 = sadd.s32 %s92, 1
    %p96 = scmp.eq.s32.totalorder %s12, 1
    %p97 = scmp.ne.s32.totalorder %s92, %s94
    %p98 = scmp.eq.s32.totalorder %s12, 0
    %p99 = por %p97, %p98
    %p100 = scmp.ne.s32.totalorder %s92, %s94
    %p101 = scmp.eq.s32.totalorder %s17, 1
    %p102 = por %p100, %p101
    %p103 = scmp.ne.s32.totalorder %s94, %s95
    %p104 = scmp.eq.s32.totalorder %s17, 0
    %p105 = por %p103, %p104
    %p106 = scmp.ne.s32.totalorder %s94, %s95
    %p107 = scmp.eq.s32.totalorder %s18, 1
    %p108 = por %p106, %p107
    %p110 = scmp.ne.s32.totalorder %s95, %s109
    %p111 = scmp.eq.s32.totalorder %s18, 0
    %p112 = por %p110, %p111
    %s114 = sadd.s32 %s113, 1
    %p117 = scmp.eq.s32.totalorder %s12, 1
    %p118 = scmp.ne.s32.totalorder %s113, %s115
    %p119 = scmp.eq.s32.totalorder %s12, 0
    %p120 = por %p118, %p119
    %p121 = scmp.ne.s32.totalorder %s113, %s115
    %p122 = scmp.eq.s32.totalorder %s17, 1
    %p123 = por %p121, %p122
    %p124 = scmp.ne.s32.totalorder %s115, %s116
    %p125 = scmp.eq.s32.totalorder %s17, 0
    %p126 = por %p124, %p125
    %p127 = scmp.ne.s32.totalorder %s115, %s116
    %p128 = scmp.eq.s32.totalorder %s18, 1
    %p129 = por %p127, %p128
    %p131 = scmp.ne.s32.totalorder %s116, %s130
    %p132 = scmp.eq.s32.totalorder %s18, 0
    %p133 = por %p131, %p132
    %s135 = sadd.s32 %s134, 1
    %p138 = scmp.eq.s32.totalorder %s12, 1
    %p139 = scmp.ne.s32.totalorder %s134, %s136
    %p140 = scmp.eq.s32.totalorder %s12, 0
    %p141 = por %p139, %p140
    %p142 = scmp.ne.s32.totalorder %s134, %s136
    %p143 = scmp.eq.s32.totalorder %s17, 1
    %p144 = por %p142, %p143
    %p145 = scmp.ne.s32.totalorder %s136, %s137
    %p146 = scmp.eq.s32.totalorder %s17, 0
    %p147 = por %p145, %p146
    %p148 = scmp.ne.s32.totalorder %s136, %s137
    %p149 = scmp.eq.s32.totalorder %s18, 1
    %p150 = por %p148, %p149
    %p152 = scmp.ne.s32.totalorder %s137, %s151
    %p153 = scmp.eq.s32.totalorder %s18, 0
    %p154 = por %p152, %p153
    %s156 = sadd.s32 %s155, 1
    %p159 = scmp.eq.s32.totalorder %s12, 1
    %p160 = scmp.ne.s32.totalorder %s155, %s157
    %p161 = scmp.eq.s32.totalorder %s12, 0
    %p162 = por %p160, %p161
    %p163 = scmp.ne.s32.totalorder %s155, %s157
    %p164 = scmp.eq.s32.totalorder %s17, 1
    %p165 = por %p163, %p164
    %p166 = scmp.ne.s32.totalorder %s157, %s158
    %p167 = scmp.eq.s32.totalorder %s17, 0
    %p168 = por %p166, %p167
    %p169 = scmp.ne.s32.totalorder %s157, %s158
    %p170 = scmp.eq.s32.totalorder %s18, 1
    %p171 = por %p169, %p170
    %p173 = scmp.ne.s32.totalorder %s158, %s172
    %p174 = scmp.eq.s32.totalorder %s18, 0
    %p175 = por %p173, %p174
    %s176 = smul.u32 %s20, %s19
    %s177 = smul.u32 %s27, %s31
    %s178 = ssub.s32 %s176, %s177
    %p179 = scmp.eq.s32.totalorder %s178, 0
    %s181 = sadd.s32 %s180, 1
    %s182 = scalar_select %p179, %s180, %s181
    %p185 = pneg %p179
    %p186 = scmp.eq.s32.totalorder %s12, 1
    %p187 = por %p185, %p186
    %p188 = scmp.ne.s32.totalorder %s180, %s183
    %p189 = scmp.eq.s32.totalorder %s12, 0
    %p190 = por %p188, %p189
    %p191 = scmp.ne.s32.totalorder %s180, %s183
    %p192 = scmp.eq.s32.totalorder %s17, 1
    %p193 = por %p191, %p192
    %p194 = scmp.ne.s32.totalorder %s183, %s184
    %p195 = scmp.eq.s32.totalorder %s17, 0
    %p196 = por %p194, %p195
    %p197 = scmp.ne.s32.totalorder %s183, %s184
    %p198 = scmp.eq.s32.totalorder %s18, 1
    %p199 = por %p197, %p198
    %p201 = scmp.ne.s32.totalorder %s184, %s200
    %p202 = scmp.eq.s32.totalorder %s18, 0
    %p203 = por %p201, %p202
    %p204 = scmp.le.s32.totalorder 1, %s12
    %p205 = scmp.lt.s32.totalorder %s12, 3
    %p206 = pnand %p204, %p205
    %p207 = pneg %p206
    // Predicated region
    $region9: #{wrn_basic_block.1} parent=5 // pred_check
      _
    $region10: #{wrn_basic_block.1} parent=5 // pred_check_branch
      %209 = sbr.rel (%p206) target = $region12
    $region11: #{wrn_basic_block.1} parent=5 // pred_region
      %s210 = ssub.s32 %s12, 1
      // Predicated region
      $region13: #{wrn_basic_block.1} parent=11 // pred_check
        %p211 = pneg %p105
      $region14: #{wrn_basic_block.1} parent=11 // pred_check_branch
        %213 = sbr.rel (%p211) target = $region16
      $region15: #{wrn_basic_block.1} parent=11 // pred_region
        _
      $region16: #{wrn_basic_block.1} parent=11 // pred_fallthru
        _
      // Predicated region
      $region17: #{wrn_basic_block.1} parent=11 // pred_check
        %p214 = pneg %p126
      $region18: #{wrn_basic_block.1} parent=11 // pred_check_branch
        %216 = sbr.rel (%p214) target = $region20
      $region19: #{wrn_basic_block.1} parent=11 // pred_region
        _
      $region20: #{wrn_basic_block.1} parent=11 // pred_fallthru
        _
      // Predicated region
      $region21: #{wrn_basic_block.1} parent=11 // pred_check
        %p217 = pneg %p147
      $region22: #{wrn_basic_block.1} parent=11 // pred_check_branch
        %219 = sbr.rel (%p217) target = $region24
      $region23: #{wrn_basic_block.1} parent=11 // pred_region
        _
      $region24: #{wrn_basic_block.1} parent=11 // pred_fallthru
        _
      // Predicated region
      $region25: #{wrn_basic_block.1} parent=11 // pred_check
        %p220 = pneg %p168
      $region26: #{wrn_basic_block.1} parent=11 // pred_check_branch
        %222 = sbr.rel (%p220) target = $region28
      $region27: #{wrn_basic_block.1} parent=11 // pred_region
        _
      $region28: #{wrn_basic_block.1} parent=11 // pred_fallthru
        _
    $region12: #{wrn_basic_block.1} parent=5 // pred_fallthru
      _
    %p223 = scmp.lt.s32.totalorder %s12, 2
    // Predicated region
    $region29: #{wrn_basic_block.1} parent=5 // pred_check
      %p224 = pneg %p223
    $region30: #{wrn_basic_block.1} parent=5 // pred_check_branch
      %226 = sbr.rel (%p224) target = $region32
    $region31: #{wrn_basic_block.1} parent=5 // pred_region
      // Predicated region
      $region33: #{wrn_basic_block.1} parent=31 // pred_check
        %p227 = pneg %p50
      $region34: #{wrn_basic_block.1} parent=31 // pred_check_branch
        %229 = sbr.rel (%p227) target = $region36
      $region35: #{wrn_basic_block.1} parent=31 // pred_region
        %s230 = ssub.s32 0, %s20
        %s231 = smul.u32 %s19, %s230
        %s232 = sadd.s32 %s20, %s231
        %s233 = smul.u32 2, %s232
        %p234 = scmp.lt.s32.totalorder %s233, 1
        %s235 = scalar_select %p234, %s233, 1
        %s236 = smul.addr %s235, 8
        %s237 = smul.addr %s236, 4
        %s238 = scalar_lea.vmem %s0, %s237
        %s239 = ssub.s32 0, %s20
        %s240 = smul.u32 %s19, %s239
        %s241 = sadd.s32 %s20, %s240
        %s242 = smul.u32 2, %s241
      $region36: #{wrn_basic_block.1} parent=31 // pred_fallthru
        _
      // Predicated region
      $region37: #{wrn_basic_block.1} parent=31 // pred_check
        %p243 = pneg %p78
      $region38: #{wrn_basic_block.1} parent=31 // pred_check_branch
        %245 = sbr.rel (%p243) target = $region40
      $region39: #{wrn_basic_block.1} parent=31 // pred_region
        %s246 = smul.u32 %s20, %s19
        %s247 = smul.u32 2, %s246
        %p248 = scmp.lt.s32.totalorder %s247, 1
        %s249 = scalar_select %p248, %s247, 1
        %s250 = smul.addr %s249, 8
        %s251 = smul.addr %s250, 4
        %s252 = scalar_lea.vmem %s1, %s251
        %s253 = smul.u32 %s20, %s19
        %s254 = smul.u32 2, %s253
      $region40: #{wrn_basic_block.1} parent=31 // pred_fallthru
        _
    $region32: #{wrn_basic_block.1} parent=5 // pred_fallthru
      _
    %p255 = scmp.le.s32.totalorder 1, %s12
    %p256 = scmp.lt.s32.totalorder %s12, 3
    %p257 = pnand %p255, %p256
    %p258 = pneg %p257
    // Predicated region
    $region41: #{wrn_basic_block.1} parent=5 // pred_check
      _
    $region42: #{wrn_basic_block.1} parent=5 // pred_check_branch
      %260 = sbr.rel (%p257) target = $region44
    $region43: #{wrn_basic_block.1} parent=5 // pred_region
      %s261 = ssub.s32 %s12, 1
      %s262 = ssub.s32 0, %s22
      %s263 = smul.u32 %s21, %s262
      %s264 = sadd.s32 %s22, %s263
      %s265 = smul.u32 2, %s264
      %p266 = scmp.lt.s32.totalorder %s265, 1
      %s267 = scalar_select %p266, %s265, 1
      %s268 = smul.addr %s267, 8
      %s269 = smul.addr %s268, 4
      %s270 = scalar_lea.vmem %s0, %s269
      %p271 = pneg %p56
      %p272 = pneg %p53
      %s273 = smul.u32 %s22, %s21
      %s274 = smul.u32 2, %s273
      %p275 = scmp.lt.s32.totalorder %s274, 1
      %s276 = scalar_select %p275, %s274, 1
      %s277 = smul.addr %s276, 8
      %s278 = smul.addr %s277, 4
      %s279 = scalar_lea.vmem %s1, %s278
      %p280 = pneg %p84
      %p281 = pneg %p81
      %p282 = pneg %p105
      %p283 = pneg %p102
      %p284 = pneg %p126
      %p285 = pneg %p123
      %p286 = pneg %p147
      %p287 = pneg %p144
      %p288 = pneg %p168
      %p289 = pneg %p165
      %p290 = pneg %p196
      %p291 = pneg %p193
      %s292 = smul.u32 %s22, %s21
      %s293 = smul.u32 2, %s292
      %p294 = scmp.lt.s32.totalorder %s293, 1
      %s295 = scalar_select %p294, %s293, 1
      %s296 = smul.addr %s295, 8
      %s297 = smul.addr %s296, 8
      %s298 = scalar_lea.vmem %s6, %s297
      %s299 = ssub.s32 0, %s22
      %s300 = smul.u32 %s21, %s299
      %s301 = sadd.s32 %s22, %s300
      %s302 = smul.u32 2, %s301
      %p303 = scmp.lt.s32.totalorder %s302, 1
      %s304 = scalar_select %p303, %s302, 1
      %s305 = smul.addr %s304, 8
      %s306 = smul.addr %s305, 4
      %s307 = scalar_lea.vmem %s0, %s306
      %s308 = ssub.s32 0, %s22
      %s309 = smul.u32 %s21, %s308
      %s310 = sadd.s32 %s22, %s309
      %s311 = smul.u32 2, %s310
      %s312 = smul.u32 %s22, %s21
      %s313 = smul.u32 2, %s312
      %p314 = scmp.lt.s32.totalorder %s313, 1
      %s315 = scalar_select %p314, %s313, 1
      %s316 = smul.addr %s315, 8
      %s317 = smul.addr %s316, 4
      %s318 = scalar_lea.vmem %s1, %s317
      %s319 = smul.u32 %s22, %s21
      %s320 = smul.u32 2, %s319
      %s321 = smul.u32 %s22, %s21
      %s322 = smul.u32 2, %s321
      %p323 = scmp.lt.s32.totalorder %s322, 1
      %s324 = scalar_select %p323, %s322, 1
      %s325 = smul.addr %s324, 8
      %s326 = smul.addr %s325, 8
      %s327 = scalar_lea.vmem %s6, %s326
      %s328 = smul.u32 %s22, %s21
      %s329 = smul.u32 2, %s328
      %p331 = scmp.eq.s32.totalorder %s21, 0
      %p332 = scmp.eq.s32.totalorder %s22, 0
      %p333 = pnand %p331, %p332
      %p334 = pneg %p333
      // Predicated region
      $region45: #{wrn_basic_block.1} parent=43 // pred_check
        _
      $region46: #{wrn_basic_block.1} parent=43 // pred_check_branch
        %336 = sbr.rel (%p333) target = $region48
      $region47: #{wrn_basic_block.1} parent=43 // pred_region
        %337 = vst [vmem:[#allocation2] sm:$0x1] 0.0
        %338 = vst [vmem:[#allocation3] sm:$0x1] 0.0
        %339 = vst [vmem:[#allocation5] sm:$0xf] 0
        %340 = vst [vmem:[#allocation5 + $0x4] sm:$0x1] 0
        %341 = vst [vmem:[#allocation5 + $0x8] sm:$0xf] 0
        %342 = vst [vmem:[#allocation5 + $0xc] sm:$0x1] 0
        %343 = vst [vmem:[#allocation5 + $0x10] sm:$0xf] 0
        %344 = vst [vmem:[#allocation5 + $0x14] sm:$0x1] 0
        %345 = vst [vmem:[#allocation5 + $0x18] sm:$0xf] 0
        %346 = vst [vmem:[#allocation5 + $0x1c] sm:$0x1] 0
        %347 = vst [vmem:[#allocation5 + $0x20] sm:$0xf] 0
        %348 = vst [vmem:[#allocation5 + $0x24] sm:$0x1] 0
        %349 = vst [vmem:[#allocation5 + $0x28] sm:$0xf] 0
        %350 = vst [vmem:[#allocation5 + $0x2c] sm:$0x1] 0
        %351 = vst [vmem:[#allocation5 + $0x30] sm:$0xf] 0
        %352 = vst [vmem:[#allocation5 + $0x34] sm:$0x1] 0
        %353 = vst [vmem:[#allocation5 + $0x38] sm:$0xf] 0
        %354 = vst [vmem:[#allocation5 + $0x3c] sm:$0x1] 0
        %355 = vst [vmem:[#allocation5 + $0x40] sm:$0xf] 0
        %356 = vst [vmem:[#allocation5 + $0x44] sm:$0x1] 0
        %357 = vst [vmem:[#allocation5 + $0x48] sm:$0xf] 0
        %358 = vst [vmem:[#allocation5 + $0x4c] sm:$0x1] 0
        %359 = vst [vmem:[#allocation5 + $0x50] sm:$0xf] 0
        %360 = vst [vmem:[#allocation5 + $0x54] sm:$0x1] 0
        %361 = vst [vmem:[#allocation5 + $0x58] sm:$0xf] 0
        %362 = vst [vmem:[#allocation5 + $0x5c] sm:$0x1] 0
        %363 = vst [vmem:[#allocation5 + $0x60] sm:$0xf] 0
        %364 = vst [vmem:[#allocation5 + $0x64] sm:$0x1] 0
        %365 = vst [vmem:[#allocation5 + $0x68] sm:$0xf] 0
        %366 = vst [vmem:[#allocation5 + $0x6c] sm:$0x1] 0
        %367 = vst [vmem:[#allocation5 + $0x70] sm:$0xf] 0
        %368 = vst [vmem:[#allocation5 + $0x74] sm:$0x1] 0
        %369 = vst [vmem:[#allocation5 + $0x78] sm:$0xf] 0
        %370 = vst [vmem:[#allocation5 + $0x7c] sm:$0x1] 0
        %371 = vst [vmem:[#allocation5 + $0x80] sm:$0xf] 0
        %372 = vst [vmem:[#allocation5 + $0x84] sm:$0x1] 0
        %373 = vst [vmem:[#allocation5 + $0x88] sm:$0xf] 0
        %374 = vst [vmem:[#allocation5 + $0x8c] sm:$0x1] 0
        %375 = vst [vmem:[#allocation5 + $0x90] sm:$0xf] 0
        %376 = vst [vmem:[#allocation5 + $0x94] sm:$0x1] 0
        %377 = vst [vmem:[#allocation5 + $0x98] sm:$0xf] 0
        %378 = vst [vmem:[#allocation5 + $0x9c] sm:$0x1] 0
      $region48: #{wrn_basic_block.1} parent=43 // pred_fallthru
        _
      // Predicated region
      $region49: #{wrn_basic_block.1} parent=43 // pred_check
        %p379 = pneg %p331
      $region50: #{wrn_basic_block.1} parent=43 // pred_check_branch
        %381 = sbr.rel (%p379) target = $region52
      $region51: #{wrn_basic_block.1} parent=43 // pred_region
        %v382 = vld [vmem:[%s307] sm:$0xf]
        %v383 = vld [vmem:[%s307 + $0x4] sm:$0xf]
        %v384 = vld [vmem:[%s307 + $0x8] sm:$0xf]
        %v385 = vld [vmem:[%s307 + $0xc] sm:$0xf]
        %v386 = vld [vmem:[%s307 + $0x10] sm:$0xf]
        %v387 = vld [vmem:[%s307 + $0x14] sm:$0xf]
        %v388 = vld [vmem:[%s307 + $0x18] sm:$0xf]
        %v389 = vld [vmem:[%s307 + $0x1c] sm:$0xf]
        %v390 = vld [vmem:[%s307 + $0x20] sm:$0xf]
        %v391 = vld [vmem:[%s307 + $0x24] sm:$0xf]
        %v392 = vld [vmem:[%s307 + $0x28] sm:$0xf]
        %v393 = vld [vmem:[%s307 + $0x2c] sm:$0xf]
        %v394 = vld [vmem:[%s307 + $0x30] sm:$0xf]
        %v395 = vld [vmem:[%s307 + $0x34] sm:$0xf]
        %v396 = vld [vmem:[%s307 + $0x38] sm:$0xf]
        %v397 = vld [vmem:[%s307 + $0x3c] sm:$0xf]
        %v398 = vld [vmem:[%s2] sm:$0xf]
        %v399 = vld [vmem:[%s2 + $0x4] sm:$0xf]
        %v400 = vld [vmem:[%s2 + $0x8] sm:$0xf]
        %v401 = vld [vmem:[%s2 + $0xc] sm:$0xf]
        %v402 = vld [vmem:[%s2 + $0x10] sm:$0xf]
        %v403 = vld [vmem:[%s2 + $0x14] sm:$0xf]
        %v404 = vld [vmem:[%s2 + $0x18] sm:$0xf]
        %v405 = vld [vmem:[%s2 + $0x1c] sm:$0xf]
        %v406 = vld [vmem:[%s2 + $0x20] sm:$0xf]
        %v423 = vunpack.c.l.b16 %v382
        %v424 = vunpack.c.l.b16 %v383
        %v425 = vunpack.c.l.b16 %v384
        %v426 = vunpack.c.l.b16 %v385
        %v427 = vunpack.c.l.b16 %v386
        %v428 = vunpack.c.l.b16 %v387
        %v429 = vunpack.c.l.b16 %v388
        %v430 = vunpack.c.l.b16 %v389
        %v431 = vunpack.c.l.b16 %v390
        %v432 = vunpack.c.l.b16 %v391
        %v433 = vunpack.c.l.b16 %v392
        %v434 = vunpack.c.l.b16 %v393
        %v435 = vunpack.c.l.b16 %v394
        %v436 = vunpack.c.l.b16 %v395
        %v437 = vunpack.c.l.b16 %v396
        %v438 = vunpack.c.l.b16 %v397
        %v439 = vpack.c.b16 %v424, %v423
        %v440 = vpack.c.b16 %v426, %v425
        %v441 = vpack.c.b16 %v428, %v427
        %v442 = vpack.c.b16 %v430, %v429
        %v443 = vpack.c.b16 %v432, %v431
        %v444 = vpack.c.b16 %v434, %v433
        %v445 = vpack.c.b16 %v436, %v435
        %v446 = vpack.c.b16 %v438, %v437
        %v456 = vunpack.c.l.b16 %v398
        %v457 = vunpack.c.l.b16 %v399
        %v458 = vunpack.c.l.b16 %v400
        %v459 = vunpack.c.l.b16 %v401
        %v460 = vunpack.c.l.b16 %v402
        %v461 = vunpack.c.l.b16 %v403
        %v462 = vunpack.c.l.b16 %v404
        %v463 = vunpack.c.l.b16 %v405
        %v464 = vunpack.c.l.b16 %v406
        %v465 = vpack.c.b16 %v457, %v456
        %v466 = vpack.c.b16 %v459, %v458
        %v467 = vpack.c.b16 %v461, %v460
        %v468 = vpack.c.b16 %v463, %v462
        %v469 = vpack.c.b16 %v464, %v464
        %vm474 = vcmask 588800
        %v476 = vsel %vm474, %v439, 0
        %v479 = vsel %vm474, %v440, 0
        %v482 = vsel %vm474, %v441, 0
        %v485 = vsel %vm474, %v442, 0
        %v488 = vsel %vm474, %v443, 0
        %v491 = vsel %vm474, %v444, 0
        %v494 = vsel %vm474, %v445, 0
        %v497 = vsel %vm474, %v446, 0
        %vm499 = vcmask 1043456
        %v501 = vsel %vm499, %v469, 0
        %503 = vmatprep.subr.bf16.mxu0 0
        %504 = vmatpush1.bf16.msra.mxu0 %v465
        %505 = vmatprep.subr.bf16.mxu0 0
        %506 = vmatpush1.bf16.msra.mxu0 %v466
        %507 = vmatprep.subr.bf16.mxu0 0
        %508 = vmatpush1.bf16.msra.mxu0 %v467
        %509 = vmatprep.subr.bf16.mxu0 0
        %510 = vmatpush1.bf16.msra.mxu0 %v468
        %511 = vmatprep.subr.bf16.mxu0 0
        %512 = vmatpush1.bf16.msra.mxu0 %v501
        %513 = vmatprep.subr.bf16.mxu0 0
        %514 = vmatpush1.bf16.msra.mxu0 0
        %515 = vmatprep.subr.bf16.mxu0 0
        %516 = vmatpush1.bf16.msra.mxu0 0
        %517 = vmatprep.subr.bf16.mxu0 0
        %518 = vmatpush1.bf16.msra.mxu0 0
        %519 = vmatprep.subr.bf16.mxu0 0
        %520 = vmatpush1.bf16.msra.mxu0 0
        %521 = vmatprep.subr.bf16.mxu0 0
        %522 = vmatpush1.bf16.msra.mxu0 0
        %523 = vmatprep.subr.bf16.mxu0 0
        %524 = vmatpush1.bf16.msra.mxu0 0
        %525 = vmatprep.subr.bf16.mxu0 0
        %526 = vmatpush1.bf16.msra.mxu0 0
        %527 = vmatprep.subr.bf16.mxu0 0
        %528 = vmatpush1.bf16.msra.mxu0 0
        %529 = vmatprep.subr.bf16.mxu0 0
        %530 = vmatpush1.bf16.msra.mxu0 0
        %531 = vmatprep.subr.bf16.mxu0 0
        %532 = vmatpush1.bf16.msra.mxu0 0
        %533 = vmatprep.subr.bf16.mxu0 0
        %534 = vmatpush1.bf16.msra.mxu0 0
        %535 = vmatprep.mubr.bf16.mxu0 0
        %536 = vmatmul.mubr.bf16.gmra.mrb[0].mxu0 %v476
        %v537 = vpop.f32.mrb[0].mxu0
        %v538 = vadd.f32 0.0, %v537
        %v539 = vpop.f32.mrb[0].mxu0
        %v540 = vpop.f32.mrb[0].mxu0
        %v541 = vadd.f32 0.0, %v540
        %v542 = vpop.f32.mrb[0].mxu0
        %543 = vmatprep.mubr.bf16.mxu0 0
        %544 = vmatmul.mubr.bf16.gmra.mrb[0].mxu0 %v479
        %v545 = vpop.f32.mrb[0].mxu0
        %v546 = vadd.f32 0.0, %v545
        %v547 = vpop.f32.mrb[0].mxu0
        %v548 = vpop.f32.mrb[0].mxu0
        %v549 = vadd.f32 0.0, %v548
        %v550 = vpop.f32.mrb[0].mxu0
        %551 = vmatprep.mubr.bf16.mxu0 0
        %552 = vmatmul.mubr.bf16.gmra.mrb[0].mxu0 %v482
        %v553 = vpop.f32.mrb[0].mxu0
        %v554 = vadd.f32 0.0, %v553
        %v555 = vpop.f32.mrb[0].mxu0
        %v556 = vpop.f32.mrb[0].mxu0
        %v557 = vadd.f32 0.0, %v556
        %v558 = vpop.f32.mrb[0].mxu0
        %559 = vmatprep.mubr.bf16.mxu0 0
        %560 = vmatmul.mubr.bf16.gmra.mrb[0].mxu0 %v485
        %v561 = vpop.f32.mrb[0].mxu0
        %v562 = vadd.f32 0.0, %v561
        %v563 = vpop.f32.mrb[0].mxu0
        %v564 = vpop.f32.mrb[0].mxu0
        %v565 = vadd.f32 0.0, %v564
        %v566 = vpop.f32.mrb[0].mxu0
        %567 = vmatprep.mubr.bf16.mxu0 0
        %568 = vmatmul.mubr.bf16.gmra.mrb[0].mxu0 %v488
        %v569 = vpop.f32.mrb[0].mxu0
        %v570 = vadd.f32 0.0, %v569
        %v571 = vpop.f32.mrb[0].mxu0
        %v572 = vpop.f32.mrb[0].mxu0
        %v573 = vadd.f32 0.0, %v572
        %v574 = vpop.f32.mrb[0].mxu0
        %575 = vmatprep.mubr.bf16.mxu0 0
        %576 = vmatmul.mubr.bf16.gmra.mrb[0].mxu0 %v491
        %v577 = vpop.f32.mrb[0].mxu0
        %v578 = vadd.f32 0.0, %v577
        %v579 = vpop.f32.mrb[0].mxu0
        %v580 = vpop.f32.mrb[0].mxu0
        %v581 = vadd.f32 0.0, %v580
        %v582 = vpop.f32.mrb[0].mxu0
        %583 = vmatprep.mubr.bf16.mxu0 0
        %584 = vmatmul.mubr.bf16.gmra.mrb[0].mxu0 %v494
        %v585 = vpop.f32.mrb[0].mxu0
        %v586 = vadd.f32 0.0, %v585
        %v587 = vpop.f32.mrb[0].mxu0
        %v588 = vpop.f32.mrb[0].mxu0
        %v589 = vadd.f32 0.0, %v588
        %v590 = vpop.f32.mrb[0].mxu0
        %591 = vmatprep.mubr.bf16.mxu0 0
        %592 = vmatmul.mubr.bf16.gmra.mrb[0].mxu0 %v497
        %v593 = vpop.f32.mrb[0].mxu0
        %v594 = vadd.f32 0.0, %v593
        %v595 = vpop.f32.mrb[0].mxu0
        %v596 = vpop.f32.mrb[0].mxu0
        %v597 = vadd.f32 0.0, %v596
        %v598 = vpop.f32.mrb[0].mxu0
        %599 = vdwg.mxu0
        %v600 = vld [vmem:[#allocation2] sm:$0x1]
        %v601 = vadd.f32 %v538, %v541
        %v602 = vadd.f32 %v601, %v546
        %v603 = vadd.f32 %v602, %v549
        %v604 = vadd.f32 %v603, %v554
        %v605 = vadd.f32 %v604, %v557
        %v606 = vadd.f32 %v605, %v562
        %v607 = vadd.f32 %v606, %v565
        %v608 = vadd.f32 %v607, %v570
        %v609 = vadd.f32 %v608, %v573
        %v610 = vadd.f32 %v609, %v578
        %v611 = vadd.f32 %v610, %v581
        %v612 = vadd.f32 %v611, %v586
        %v613 = vadd.f32 %v612, %v589
        %v614 = vadd.f32 %v613, %v594
        %v615 = vadd.f32 %v614, %v597
        %v616 = vrot.slane %v615, 4
        %v617 = vadd.f32 %v615, %v616
        %v618 = vrot.slane %v617, 2
        %v619 = vadd.f32 %v617, %v618
        %v620 = vrot.slane %v619, 1
        %v621 = vadd.f32 %v619, %v620
        %v622 = vadd.f32 %v600, %v621
        %623 = vst [vmem:[#allocation2] sm:$0x1] %v622
        %v624 = vld [vmem:[#allocation3] sm:$0x1]
        %v625 = vmul.f32 %v538, %v538
        %v626 = vmul.f32 %v541, %v541
        %v627 = vmul.f32 %v546, %v546
        %v628 = vmul.f32 %v549, %v549
        %v629 = vmul.f32 %v554, %v554
        %v630 = vmul.f32 %v557, %v557
        %v631 = vmul.f32 %v562, %v562
        %v632 = vmul.f32 %v565, %v565
        %v633 = vmul.f32 %v570, %v570
        %v634 = vmul.f32 %v573, %v573
        %v635 = vmul.f32 %v578, %v578
        %v636 = vmul.f32 %v581, %v581
        %v637 = vmul.f32 %v586, %v586
        %v638 = vmul.f32 %v589, %v589
        %v639 = vmul.f32 %v594, %v594
        %v640 = vmul.f32 %v597, %v597
        %v641 = vadd.f32 %v625, %v626
        %v642 = vadd.f32 %v641, %v627
        %v643 = vadd.f32 %v642, %v628
        %v644 = vadd.f32 %v643, %v629
        %v645 = vadd.f32 %v644, %v630
        %v646 = vadd.f32 %v645, %v631
        %v647 = vadd.f32 %v646, %v632
        %v648 = vadd.f32 %v647, %v633
        %v649 = vadd.f32 %v648, %v634
        %v650 = vadd.f32 %v649, %v635
        %v651 = vadd.f32 %v650, %v636
        %v652 = vadd.f32 %v651, %v637
        %v653 = vadd.f32 %v652, %v638
        %v654 = vadd.f32 %v653, %v639
        %v655 = vadd.f32 %v654, %v640
        %v656 = vrot.slane %v655, 4
        %v657 = vadd.f32 %v655, %v656
        %v658 = vrot.slane %v657, 2
        %v659 = vadd.f32 %v657, %v658
        %v660 = vrot.slane %v659, 1
        %v661 = vadd.f32 %v659, %v660
        %v662 = vadd.f32 %v624, %v661
        %663 = vst [vmem:[#allocation3] sm:$0x1] %v662
        %v664 = vpack.c.bf16 %v541, %v538
        %v665 = vpack.c.bf16 %v549, %v546
        %v666 = vpack.c.bf16 %v557, %v554
        %v667 = vpack.c.bf16 %v565, %v562
        %v668 = vpack.c.bf16 %v573, %v570
        %v669 = vpack.c.bf16 %v581, %v578
        %v670 = vpack.c.bf16 %v589, %v586
        %v671 = vpack.c.bf16 %v597, %v594
        %s672 = smul.u32 %s22, 8
        %s673 = smul.addr %s672, 8
        %s674 = scalar_lea.vmem [#allocation4], %s673
        %675 = vst [vmem:[%s674] sm:$0xff] %v664
        %676 = vst [vmem:[%s674 + $0x8] sm:$0xff] %v665
        %677 = vst [vmem:[%s674 + $0x10] sm:$0xff] %v666
        %678 = vst [vmem:[%s674 + $0x18] sm:$0xff] %v667
        %679 = vst [vmem:[%s674 + $0x20] sm:$0xff] %v668
        %680 = vst [vmem:[%s674 + $0x28] sm:$0xff] %v669
        %681 = vst [vmem:[%s674 + $0x30] sm:$0xff] %v670
        %682 = vst [vmem:[%s674 + $0x38] sm:$0xff] %v671
      $region52: #{wrn_basic_block.1} parent=43 // pred_fallthru
        _
      %p683 = scmp.eq.s32.totalorder %s21, 1
      // Predicated region
      $region53: #{wrn_basic_block.1} parent=43 // pred_check
        %p684 = pneg %p683
      $region54: #{wrn_basic_block.1} parent=43 // pred_check_branch
        %686 = sbr.rel (%p684) target = $region56
      $region55: #{wrn_basic_block.1} parent=43 // pred_region
        %v687 = vld [vmem:[%s5] sm:$0x1]
        %v688 = vld [vmem:[%s5 + $0x1] sm:$0x1]
        %v689 = vld [vmem:[#allocation2] sm:$0x1]
        %v690 = vmul.f32 %v689, 0.0078125
        %v691 = vld [vmem:[#allocation3] sm:$0x1]
        %v692 = vmul.f32 %v691, 0.0078125
        %v693 = vmul.f32 %v690, %v690
        %v694 = vsub.f32 %v692, %v693
        %v695 = vadd.f32 %v694, 1e-05
        %v696 = vrsqrt.pop %v695
        %v697 = vmul.f32 %v687, %v696
        %v698 = vmul.f32 %v690, %v697
        %v699 = vsub.f32 %v688, %v698
        %s700 = smul.u32 %s22, 8
        %s701 = smul.addr %s700, 8
        %s702 = scalar_lea.vmem [#allocation4], %s701
        %v703 = vld [vmem:[%s702] sm:$0xff]
        %v704 = vld [vmem:[%s702 + $0x8] sm:$0xff]
        %v705 = vld [vmem:[%s702 + $0x10] sm:$0xff]
        %v706 = vld [vmem:[%s702 + $0x18] sm:$0xff]
        %v707 = vld [vmem:[%s702 + $0x20] sm:$0xff]
        %v708 = vld [vmem:[%s702 + $0x28] sm:$0xff]
        %v709 = vld [vmem:[%s702 + $0x30] sm:$0xff]
        %v710 = vld [vmem:[%s702 + $0x38] sm:$0xff]
        %v711 = vunpack.c.l.bf16 %v703
        %v712 = vunpack.c.h.bf16 %v703
        %v713 = vunpack.c.l.bf16 %v704
        %v714 = vunpack.c.h.bf16 %v704
        %v715 = vunpack.c.l.bf16 %v705
        %v716 = vunpack.c.h.bf16 %v705
        %v717 = vunpack.c.l.bf16 %v706
        %v718 = vunpack.c.h.bf16 %v706
        %v719 = vunpack.c.l.bf16 %v707
        %v720 = vunpack.c.h.bf16 %v707
        %v721 = vunpack.c.l.bf16 %v708
        %v722 = vunpack.c.h.bf16 %v708
        %v723 = vunpack.c.l.bf16 %v709
        %v724 = vunpack.c.h.bf16 %v709
        %v725 = vunpack.c.l.bf16 %v710
        %v726 = vunpack.c.h.bf16 %v710
        %v727 = vlaneseq
        %v728 = vshrl.u32 %v727, 7
        %v729 = vsub.s32 0, %v728
        %v730 = vrot.slane %v697, %v729
        %v731 = vmul.f32 %v711, %v730
        %v732 = vmul.f32 %v712, %v730
        %v733 = vmul.f32 %v713, %v730
        %v734 = vmul.f32 %v714, %v730
        %v735 = vmul.f32 %v715, %v730
        %v736 = vmul.f32 %v716, %v730
        %v737 = vmul.f32 %v717, %v730
        %v738 = vmul.f32 %v718, %v730
        %v739 = vmul.f32 %v719, %v730
        %v740 = vmul.f32 %v720, %v730
        %v741 = vmul.f32 %v721, %v730
        %v742 = vmul.f32 %v722, %v730
        %v743 = vmul.f32 %v723, %v730
        %v744 = vmul.f32 %v724, %v730
        %v745 = vmul.f32 %v725, %v730
        %v746 = vmul.f32 %v726, %v730
        %v747 = vlaneseq
        %v748 = vshrl.u32 %v747, 7
        %v749 = vsub.s32 0, %v748
        %v750 = vrot.slane %v699, %v749
        %v751 = vadd.f32 %v731, %v750
        %v752 = vadd.f32 %v732, %v750
        %v753 = vadd.f32 %v733, %v750
        %v754 = vadd.f32 %v734, %v750
        %v755 = vadd.f32 %v735, %v750
        %v756 = vadd.f32 %v736, %v750
        %v757 = vadd.f32 %v737, %v750
        %v758 = vadd.f32 %v738, %v750
        %v759 = vadd.f32 %v739, %v750
        %v760 = vadd.f32 %v740, %v750
        %v761 = vadd.f32 %v741, %v750
        %v762 = vadd.f32 %v742, %v750
        %v763 = vadd.f32 %v743, %v750
        %v764 = vadd.f32 %v744, %v750
        %v765 = vadd.f32 %v745, %v750
        %v766 = vadd.f32 %v746, %v750
        %v767 = vmax.f32 %v751, 0.0
        %v768 = vmax.f32 %v752, 0.0
        %v769 = vmax.f32 %v753, 0.0
        %v770 = vmax.f32 %v754, 0.0
        %v771 = vmax.f32 %v755, 0.0
        %v772 = vmax.f32 %v756, 0.0
        %v773 = vmax.f32 %v757, 0.0
        %v774 = vmax.f32 %v758, 0.0
        %v775 = vmax.f32 %v759, 0.0
        %v776 = vmax.f32 %v760, 0.0
        %v777 = vmax.f32 %v761, 0.0
        %v778 = vmax.f32 %v762, 0.0
        %v779 = vmax.f32 %v763, 0.0
        %v780 = vmax.f32 %v764, 0.0
        %v781 = vmax.f32 %v765, 0.0
        %v782 = vmax.f32 %v766, 0.0
        %v783 = vpack.c.bf16 %v767, %v767
        %v784 = vpack.c.bf16 %v768, %v768
        %v785 = vpack.c.bf16 %v769, %v769
        %v786 = vpack.c.bf16 %v770, %v770
        %v787 = vpack.c.bf16 %v771, %v771
        %v788 = vpack.c.bf16 %v772, %v772
        %v789 = vpack.c.bf16 %v773, %v773
        %v790 = vpack.c.bf16 %v774, %v774
        %v791 = vpack.c.bf16 %v775, %v775
        %v792 = vpack.c.bf16 %v776, %v776
        %v793 = vpack.c.bf16 %v777, %v777
        %v794 = vpack.c.bf16 %v778, %v778
        %v795 = vpack.c.bf16 %v779, %v779
        %v796 = vpack.c.bf16 %v780, %v780
        %v797 = vpack.c.bf16 %v781, %v781
        %v798 = vpack.c.bf16 %v782, %v782
        %v815 = vunpack.c.l.b16 %v783
        %v816 = vunpack.c.l.b16 %v784
        %v817 = vunpack.c.l.b16 %v785
        %v818 = vunpack.c.l.b16 %v786
        %v819 = vunpack.c.l.b16 %v787
        %v820 = vunpack.c.l.b16 %v788
        %v821 = vunpack.c.l.b16 %v789
        %v822 = vunpack.c.l.b16 %v790
        %v823 = vunpack.c.l.b16 %v791
        %v824 = vunpack.c.l.b16 %v792
        %v825 = vunpack.c.l.b16 %v793
        %v826 = vunpack.c.l.b16 %v794
        %v827 = vunpack.c.l.b16 %v795
        %v828 = vunpack.c.l.b16 %v796
        %v829 = vunpack.c.l.b16 %v797
        %v830 = vunpack.c.l.b16 %v798
        %v831 = vpack.c.b16 %v815, %v815
        %v832 = vpack.c.b16 %v816, %v816
        %v833 = vpack.c.b16 %v817, %v817
        %v834 = vpack.c.b16 %v818, %v818
        %v835 = vpack.c.b16 %v819, %v819
        %v836 = vpack.c.b16 %v820, %v820
        %v837 = vpack.c.b16 %v821, %v821
        %v838 = vpack.c.b16 %v822, %v822
        %v839 = vpack.c.b16 %v823, %v823
        %v840 = vpack.c.b16 %v824, %v824
        %v841 = vpack.c.b16 %v825, %v825
        %v842 = vpack.c.b16 %v826, %v826
        %v843 = vpack.c.b16 %v827, %v827
        %v844 = vpack.c.b16 %v828, %v828
        %v845 = vpack.c.b16 %v829, %v829
        %v846 = vpack.c.b16 %v830, %v830
        %v848 = vshrl.u32 %v831, 16
        %v850 = vrot.slane %v848, 7
        %v851 = vshll.u32 %v831, 16
        %v853 = vor.u32 %v850, %v851
        %v854 = vrot.slane %v850, 4
        %v856 = vshrl.u32 %v832, 16
        %v858 = vrot.slane %v856, 7
        %v859 = vshll.u32 %v832, 16
        %v861 = vor.u32 %v858, %v859
        %v862 = vrot.slane %v858, 4
        %v864 = vshrl.u32 %v833, 16
        %v866 = vrot.slane %v864, 7
        %v867 = vshll.u32 %v833, 16
        %v869 = vor.u32 %v866, %v867
        %v870 = vrot.slane %v866, 4
        %v872 = vshrl.u32 %v834, 16
        %v874 = vrot.slane %v872, 7
        %v875 = vshll.u32 %v834, 16
        %v877 = vor.u32 %v874, %v875
        %v878 = vrot.slane %v874, 4
        %v880 = vshrl.u32 %v835, 16
        %v882 = vrot.slane %v880, 7
        %v883 = vshll.u32 %v835, 16
        %v885 = vor.u32 %v882, %v883
        %v886 = vrot.slane %v882, 4
        %v888 = vshrl.u32 %v836, 16
        %v890 = vrot.slane %v888, 7
        %v891 = vshll.u32 %v836, 16
        %v893 = vor.u32 %v890, %v891
        %v894 = vrot.slane %v890, 4
        %v896 = vshrl.u32 %v837, 16
        %v898 = vrot.slane %v896, 7
        %v899 = vshll.u32 %v837, 16
        %v901 = vor.u32 %v898, %v899
        %v902 = vrot.slane %v898, 4
        %v904 = vshrl.u32 %v838, 16
        %v906 = vrot.slane %v904, 7
        %v907 = vshll.u32 %v838, 16
        %v909 = vor.u32 %v906, %v907
        %v910 = vrot.slane %v906, 4
        %v912 = vshrl.u32 %v839, 16
        %v914 = vrot.slane %v912, 7
        %v915 = vshll.u32 %v839, 16
        %v917 = vor.u32 %v914, %v915
        %v918 = vrot.slane %v914, 4
        %v920 = vshrl.u32 %v840, 16
        %v922 = vrot.slane %v920, 7
        %v923 = vshll.u32 %v840, 16
        %v925 = vor.u32 %v922, %v923
        %v926 = vrot.slane %v922, 4
        %v928 = vshrl.u32 %v841, 16
        %v930 = vrot.slane %v928, 7
        %v931 = vshll.u32 %v841, 16
        %v933 = vor.u32 %v930, %v931
        %v934 = vrot.slane %v930, 4
        %v936 = vshrl.u32 %v842, 16
        %v938 = vrot.slane %v936, 7
        %v939 = vshll.u32 %v842, 16
        %v941 = vor.u32 %v938, %v939
        %v942 = vrot.slane %v938, 4
        %v944 = vshrl.u32 %v843, 16
        %v946 = vrot.slane %v944, 7
        %v947 = vshll.u32 %v843, 16
        %v949 = vor.u32 %v946, %v947
        %v950 = vrot.slane %v946, 4
        %v952 = vshrl.u32 %v844, 16
        %v954 = vrot.slane %v952, 7
        %v955 = vshll.u32 %v844, 16
        %v957 = vor.u32 %v954, %v955
        %v958 = vrot.slane %v954, 4
        %v960 = vshrl.u32 %v845, 16
        %v962 = vrot.slane %v960, 7
        %v963 = vshll.u32 %v845, 16
        %v965 = vor.u32 %v962, %v963
        %v966 = vrot.slane %v962, 4
        %v968 = vshrl.u32 %v846, 16
        %v970 = vrot.slane %v968, 7
        %v971 = vshll.u32 %v846, 16
        %v973 = vor.u32 %v970, %v971
        %v974 = vrot.slane %v970, 4
        %s1007 = scalar_lea.vmem [#allocation5], 8
        %vm1008 = vcmask 1043456
        %vm1009 = vsmask.f32 7938
        %vm1010 = vmand %vm1008, %vm1009
        %v1011 = vld [vmem:[%s1007] sm:$0xf]
        %v1012 = vsel %vm1010, %v853, %v1011
        %1013 = vst [vmem:[%s1007] sm:$0xf] %v1012
        %vm1014 = vcmask 1040384
        %vm1015 = vsmask.f32 256
        %vm1016 = vmand %vm1014, %vm1015
        %v1017 = vld [vmem:[%s1007 + $0x4] sm:$0x1]
        %v1018 = vsel %vm1016, %v854, %v1017
        %1019 = vst [vmem:[%s1007 + $0x4] sm:$0x1] %v1018
        %v1020 = vld [vmem:[%s1007 + $0x8] sm:$0xf]
        %v1021 = vsel %vm1010, %v861, %v1020
        %1022 = vst [vmem:[%s1007 + $0x8] sm:$0xf] %v1021
        %v1023 = vld [vmem:[%s1007 + $0xc] sm:$0x1]
        %v1024 = vsel %vm1016, %v862, %v1023
        %1025 = vst [vmem:[%s1007 + $0xc] sm:$0x1] %v1024
        %v1026 = vld [vmem:[%s1007 + $0x10] sm:$0xf]
        %v1027 = vsel %vm1010, %v869, %v1026
        %1028 = vst [vmem:[%s1007 + $0x10] sm:$0xf] %v1027
        %v1029 = vld [vmem:[%s1007 + $0x14] sm:$0x1]
        %v1030 = vsel %vm1016, %v870, %v1029
        %1031 = vst [vmem:[%s1007 + $0x14] sm:$0x1] %v1030
        %v1032 = vld [vmem:[%s1007 + $0x18] sm:$0xf]
        %v1033 = vsel %vm1010, %v877, %v1032
        %1034 = vst [vmem:[%s1007 + $0x18] sm:$0xf] %v1033
        %v1035 = vld [vmem:[%s1007 + $0x1c] sm:$0x1]
        %v1036 = vsel %vm1016, %v878, %v1035
        %1037 = vst [vmem:[%s1007 + $0x1c] sm:$0x1] %v1036
        %v1038 = vld [vmem:[%s1007 + $0x20] sm:$0xf]
        %v1039 = vsel %vm1010, %v885, %v1038
        %1040 = vst [vmem:[%s1007 + $0x20] sm:$0xf] %v1039
        %v1041 = vld [vmem:[%s1007 + $0x24] sm:$0x1]
        %v1042 = vsel %vm1016, %v886, %v1041
        %1043 = vst [vmem:[%s1007 + $0x24] sm:$0x1] %v1042
        %v1044 = vld [vmem:[%s1007 + $0x28] sm:$0xf]
        %v1045 = vsel %vm1010, %v893, %v1044
        %1046 = vst [vmem:[%s1007 + $0x28] sm:$0xf] %v1045
        %v1047 = vld [vmem:[%s1007 + $0x2c] sm:$0x1]
        %v1048 = vsel %vm1016, %v894, %v1047
        %1049 = vst [vmem:[%s1007 + $0x2c] sm:$0x1] %v1048
        %v1050 = vld [vmem:[%s1007 + $0x30] sm:$0xf]
        %v1051 = vsel %vm1010, %v901, %v1050
        %1052 = vst [vmem:[%s1007 + $0x30] sm:$0xf] %v1051
        %v1053 = vld [vmem:[%s1007 + $0x34] sm:$0x1]
        %v1054 = vsel %vm1016, %v902, %v1053
        %1055 = vst [vmem:[%s1007 + $0x34] sm:$0x1] %v1054
        %v1056 = vld [vmem:[%s1007 + $0x38] sm:$0xf]
        %v1057 = vsel %vm1010, %v909, %v1056
        %1058 = vst [vmem:[%s1007 + $0x38] sm:$0xf] %v1057
        %v1059 = vld [vmem:[%s1007 + $0x3c] sm:$0x1]
        %v1060 = vsel %vm1016, %v910, %v1059
        %1061 = vst [vmem:[%s1007 + $0x3c] sm:$0x1] %v1060
        %v1062 = vld [vmem:[%s1007 + $0x50] sm:$0xf]
        %v1063 = vsel %vm1010, %v917, %v1062
        %1064 = vst [vmem:[%s1007 + $0x50] sm:$0xf] %v1063
        %v1065 = vld [vmem:[%s1007 + $0x54] sm:$0x1]
        %v1066 = vsel %vm1016, %v918, %v1065
        %1067 = vst [vmem:[%s1007 + $0x54] sm:$0x1] %v1066
        %v1068 = vld [vmem:[%s1007 + $0x58] sm:$0xf]
        %v1069 = vsel %vm1010, %v925, %v1068
        %1070 = vst [vmem:[%s1007 + $0x58] sm:$0xf] %v1069
        %v1071 = vld [vmem:[%s1007 + $0x5c] sm:$0x1]
        %v1072 = vsel %vm1016, %v926, %v1071
        %1073 = vst [vmem:[%s1007 + $0x5c] sm:$0x1] %v1072
        %v1074 = vld [vmem:[%s1007 + $0x60] sm:$0xf]
        %v1075 = vsel %vm1010, %v933, %v1074
        %1076 = vst [vmem:[%s1007 + $0x60] sm:$0xf] %v1075
        %v1077 = vld [vmem:[%s1007 + $0x64] sm:$0x1]
        %v1078 = vsel %vm1016, %v934, %v1077
        %1079 = vst [vmem:[%s1007 + $0x64] sm:$0x1] %v1078
        %v1080 = vld [vmem:[%s1007 + $0x68] sm:$0xf]
        %v1081 = vsel %vm1010, %v941, %v1080
        %1082 = vst [vmem:[%s1007 + $0x68] sm:$0xf] %v1081
        %v1083 = vld [vmem:[%s1007 + $0x6c] sm:$0x1]
        %v1084 = vsel %vm1016, %v942, %v1083
        %1085 = vst [vmem:[%s1007 + $0x6c] sm:$0x1] %v1084
        %v1086 = vld [vmem:[%s1007 + $0x70] sm:$0xf]
        %v1087 = vsel %vm1010, %v949, %v1086
        %1088 = vst [vmem:[%s1007 + $0x70] sm:$0xf] %v1087
        %v1089 = vld [vmem:[%s1007 + $0x74] sm:$0x1]
        %v1090 = vsel %vm1016, %v950, %v1089
        %1091 = vst [vmem:[%s1007 + $0x74] sm:$0x1] %v1090
        %v1092 = vld [vmem:[%s1007 + $0x78] sm:$0xf]
        %v1093 = vsel %vm1010, %v957, %v1092
        %1094 = vst [vmem:[%s1007 + $0x78] sm:$0xf] %v1093
        %v1095 = vld [vmem:[%s1007 + $0x7c] sm:$0x1]
        %v1096 = vsel %vm1016, %v958, %v1095
        %1097 = vst [vmem:[%s1007 + $0x7c] sm:$0x1] %v1096
        %v1098 = vld [vmem:[%s1007 + $0x80] sm:$0xf]
        %v1099 = vsel %vm1010, %v965, %v1098
        %1100 = vst [vmem:[%s1007 + $0x80] sm:$0xf] %v1099
        %v1101 = vld [vmem:[%s1007 + $0x84] sm:$0x1]
        %v1102 = vsel %vm1016, %v966, %v1101
        %1103 = vst [vmem:[%s1007 + $0x84] sm:$0x1] %v1102
        %v1104 = vld [vmem:[%s1007 + $0x88] sm:$0xf]
        %v1105 = vsel %vm1010, %v973, %v1104
        %1106 = vst [vmem:[%s1007 + $0x88] sm:$0xf] %v1105
        %v1107 = vld [vmem:[%s1007 + $0x8c] sm:$0x1]
        %v1108 = vsel %vm1016, %v974, %v1107
        %1109 = vst [vmem:[%s1007 + $0x8c] sm:$0x1] %v1108
        %v1110 = vld [vmem:[#allocation5] sm:$0xf]
        %v1111 = vld [vmem:[#allocation5 + $0x8] sm:$0xf]
        %v1112 = vld [vmem:[#allocation5 + $0x10] sm:$0xf]
        %v1113 = vld [vmem:[#allocation5 + $0x18] sm:$0xf]
        %v1114 = vld [vmem:[#allocation5 + $0x20] sm:$0xf]
        %v1115 = vld [vmem:[#allocation5 + $0x28] sm:$0xf]
        %v1116 = vld [vmem:[#allocation5 + $0x30] sm:$0xf]
        %v1117 = vld [vmem:[#allocation5 + $0x38] sm:$0xf]
        %v1118 = vld [vmem:[#allocation5 + $0x50] sm:$0xf]
        %v1119 = vld [vmem:[#allocation5 + $0x58] sm:$0xf]
        %v1120 = vld [vmem:[#allocation5 + $0x60] sm:$0xf]
        %v1121 = vld [vmem:[#allocation5 + $0x68] sm:$0xf]
        %v1122 = vld [vmem:[#allocation5 + $0x70] sm:$0xf]
        %v1123 = vld [vmem:[#allocation5 + $0x78] sm:$0xf]
        %v1124 = vld [vmem:[#allocation5 + $0x80] sm:$0xf]
        %v1125 = vld [vmem:[#allocation5 + $0x88] sm:$0xf]
        %v1126 = vld [vmem:[#allocation5 + $0x4] sm:$0x1]
        %v1127 = vld [vmem:[#allocation5 + $0xc] sm:$0x1]
        %v1128 = vld [vmem:[#allocation5 + $0x14] sm:$0x1]
        %v1129 = vld [vmem:[#allocation5 + $0x1c] sm:$0x1]
        %v1130 = vld [vmem:[#allocation5 + $0x24] sm:$0x1]
        %v1131 = vld [vmem:[#allocation5 + $0x2c] sm:$0x1]
        %v1132 = vld [vmem:[#allocation5 + $0x34] sm:$0x1]
        %v1133 = vld [vmem:[#allocation5 + $0x3c] sm:$0x1]
        %v1134 = vld [vmem:[#allocation5 + $0x54] sm:$0x1]
        %v1135 = vld [vmem:[#allocation5 + $0x5c] sm:$0x1]
        %v1136 = vld [vmem:[#allocation5 + $0x64] sm:$0x1]
        %v1137 = vld [vmem:[#allocation5 + $0x6c] sm:$0x1]
        %v1138 = vld [vmem:[#allocation5 + $0x74] sm:$0x1]
        %v1139 = vld [vmem:[#allocation5 + $0x7c] sm:$0x1]
        %v1140 = vld [vmem:[#allocation5 + $0x84] sm:$0x1]
        %v1141 = vld [vmem:[#allocation5 + $0x8c] sm:$0x1]
        %vm1142 = vsmask.f32 3328
        %vm1143 = vsmask.f32 7440
        %vm1144 = vmor %vm1142, %vm1143
        %v1146 = vshrl.u32 %v1110, 16
        %v1148 = vrot.slane %v1146, 4
        %v1149 = vshll.u32 %v1110, 16
        %v1151 = vrot.slane %v1149, 5
        %v1152 = vor.u32 %v1148, %v1151
        %v1153 = vrot.slane %v1152, 4
        %v1155 = vshll.u32 %v1126, 16
        %v1157 = vrot.slane %v1155, 5
        %v1158 = vsel %vm1144, %v1153, %v1157
        %v1160 = vshrl.u32 %v1111, 16
        %v1162 = vrot.slane %v1160, 4
        %v1163 = vshll.u32 %v1111, 16
        %v1165 = vrot.slane %v1163, 5
        %v1166 = vor.u32 %v1162, %v1165
        %v1167 = vrot.slane %v1166, 4
        %v1169 = vshll.u32 %v1127, 16
        %v1171 = vrot.slane %v1169, 5
        %v1172 = vsel %vm1144, %v1167, %v1171
        %v1174 = vshrl.u32 %v1112, 16
        %v1176 = vrot.slane %v1174, 4
        %v1177 = vshll.u32 %v1112, 16
        %v1179 = vrot.slane %v1177, 5
        %v1180 = vor.u32 %v1176, %v1179
        %v1181 = vrot.slane %v1180, 4
        %v1183 = vshll.u32 %v1128, 16
        %v1185 = vrot.slane %v1183, 5
        %v1186 = vsel %vm1144, %v1181, %v1185
        %v1188 = vshrl.u32 %v1113, 16
        %v1190 = vrot.slane %v1188, 4
        %v1191 = vshll.u32 %v1113, 16
        %v1193 = vrot.slane %v1191, 5
        %v1194 = vor.u32 %v1190, %v1193
        %v1195 = vrot.slane %v1194, 4
        %v1197 = vshll.u32 %v1129, 16
        %v1199 = vrot.slane %v1197, 5
        %v1200 = vsel %vm1144, %v1195, %v1199
        %v1202 = vshrl.u32 %v1114, 16
        %v1204 = vrot.slane %v1202, 4
        %v1205 = vshll.u32 %v1114, 16
        %v1207 = vrot.slane %v1205, 5
        %v1208 = vor.u32 %v1204, %v1207
        %v1209 = vrot.slane %v1208, 4
        %v1211 = vshll.u32 %v1130, 16
        %v1213 = vrot.slane %v1211, 5
        %v1214 = vsel %vm1144, %v1209, %v1213
        %v1216 = vshrl.u32 %v1115, 16
        %v1218 = vrot.slane %v1216, 4
        %v1219 = vshll.u32 %v1115, 16
        %v1221 = vrot.slane %v1219, 5
        %v1222 = vor.u32 %v1218, %v1221
        %v1223 = vrot.slane %v1222, 4
        %v1225 = vshll.u32 %v1131, 16
        %v1227 = vrot.slane %v1225, 5
        %v1228 = vsel %vm1144, %v1223, %v1227
        %v1230 = vshrl.u32 %v1116, 16
        %v1232 = vrot.slane %v1230, 4
        %v1233 = vshll.u32 %v1116, 16
        %v1235 = vrot.slane %v1233, 5
        %v1236 = vor.u32 %v1232, %v1235
        %v1237 = vrot.slane %v1236, 4
        %v1239 = vshll.u32 %v1132, 16
        %v1241 = vrot.slane %v1239, 5
        %v1242 = vsel %vm1144, %v1237, %v1241
        %v1244 = vshrl.u32 %v1117, 16
        %v1246 = vrot.slane %v1244, 4
        %v1247 = vshll.u32 %v1117, 16
        %v1249 = vrot.slane %v1247, 5
        %v1250 = vor.u32 %v1246, %v1249
        %v1251 = vrot.slane %v1250, 4
        %v1253 = vshll.u32 %v1133, 16
        %v1255 = vrot.slane %v1253, 5
        %v1256 = vsel %vm1144, %v1251, %v1255
        %v1258 = vshrl.u32 %v1118, 16
        %v1260 = vrot.slane %v1258, 4
        %v1261 = vshll.u32 %v1118, 16
        %v1263 = vrot.slane %v1261, 5
        %v1264 = vor.u32 %v1260, %v1263
        %v1265 = vrot.slane %v1264, 4
        %v1267 = vshll.u32 %v1134, 16
        %v1269 = vrot.slane %v1267, 5
        %v1270 = vsel %vm1144, %v1265, %v1269
        %v1272 = vshrl.u32 %v1119, 16
        %v1274 = vrot.slane %v1272, 4
        %v1275 = vshll.u32 %v1119, 16
        %v1277 = vrot.slane %v1275, 5
        %v1278 = vor.u32 %v1274, %v1277
        %v1279 = vrot.slane %v1278, 4
        %v1281 = vshll.u32 %v1135, 16
        %v1283 = vrot.slane %v1281, 5
        %v1284 = vsel %vm1144, %v1279, %v1283
        %v1286 = vshrl.u32 %v1120, 16
        %v1288 = vrot.slane %v1286, 4
        %v1289 = vshll.u32 %v1120, 16
        %v1291 = vrot.slane %v1289, 5
        %v1292 = vor.u32 %v1288, %v1291
        %v1293 = vrot.slane %v1292, 4
        %v1295 = vshll.u32 %v1136, 16
        %v1297 = vrot.slane %v1295, 5
        %v1298 = vsel %vm1144, %v1293, %v1297
        %v1300 = vshrl.u32 %v1121, 16
        %v1302 = vrot.slane %v1300, 4
        %v1303 = vshll.u32 %v1121, 16
        %v1305 = vrot.slane %v1303, 5
        %v1306 = vor.u32 %v1302, %v1305
        %v1307 = vrot.slane %v1306, 4
        %v1309 = vshll.u32 %v1137, 16
        %v1311 = vrot.slane %v1309, 5
        %v1312 = vsel %vm1144, %v1307, %v1311
        %v1314 = vshrl.u32 %v1122, 16
        %v1316 = vrot.slane %v1314, 4
        %v1317 = vshll.u32 %v1122, 16
        %v1319 = vrot.slane %v1317, 5
        %v1320 = vor.u32 %v1316, %v1319
        %v1321 = vrot.slane %v1320, 4
        %v1323 = vshll.u32 %v1138, 16
        %v1325 = vrot.slane %v1323, 5
        %v1326 = vsel %vm1144, %v1321, %v1325
        %v1328 = vshrl.u32 %v1123, 16
        %v1330 = vrot.slane %v1328, 4
        %v1331 = vshll.u32 %v1123, 16
        %v1333 = vrot.slane %v1331, 5
        %v1334 = vor.u32 %v1330, %v1333
        %v1335 = vrot.slane %v1334, 4
        %v1337 = vshll.u32 %v1139, 16
        %v1339 = vrot.slane %v1337, 5
        %v1340 = vsel %vm1144, %v1335, %v1339
        %v1342 = vshrl.u32 %v1124, 16
        %v1344 = vrot.slane %v1342, 4
        %v1345 = vshll.u32 %v1124, 16
        %v1347 = vrot.slane %v1345, 5
        %v1348 = vor.u32 %v1344, %v1347
        %v1349 = vrot.slane %v1348, 4
        %v1351 = vshll.u32 %v1140, 16
        %v1353 = vrot.slane %v1351, 5
        %v1354 = vsel %vm1144, %v1349, %v1353
        %v1356 = vshrl.u32 %v1125, 16
        %v1358 = vrot.slane %v1356, 4
        %v1359 = vshll.u32 %v1125, 16
        %v1361 = vrot.slane %v1359, 5
        %v1362 = vor.u32 %v1358, %v1361
        %v1363 = vrot.slane %v1362, 4
        %v1365 = vshll.u32 %v1141, 16
        %v1367 = vrot.slane %v1365, 5
        %v1368 = vsel %vm1144, %v1363, %v1367
        %v1369 = vld [vmem:[#allocation5] sm:$0xe]
        %v1370 = vld [vmem:[#allocation5 + $0x8] sm:$0xe]
        %v1371 = vld [vmem:[#allocation5 + $0x10] sm:$0xe]
        %v1372 = vld [vmem:[#allocation5 + $0x18] sm:$0xe]
        %v1373 = vld [vmem:[#allocation5 + $0x20] sm:$0xe]
        %v1374 = vld [vmem:[#allocation5 + $0x28] sm:$0xe]
        %v1375 = vld [vmem:[#allocation5 + $0x30] sm:$0xe]
        %v1376 = vld [vmem:[#allocation5 + $0x38] sm:$0xe]
        %v1377 = vld [vmem:[#allocation5 + $0x50] sm:$0xe]
        %v1378 = vld [vmem:[#allocation5 + $0x58] sm:$0xe]
        %v1379 = vld [vmem:[#allocation5 + $0x60] sm:$0xe]
        %v1380 = vld [vmem:[#allocation5 + $0x68] sm:$0xe]
        %v1381 = vld [vmem:[#allocation5 + $0x70] sm:$0xe]
        %v1382 = vld [vmem:[#allocation5 + $0x78] sm:$0xe]
        %v1383 = vld [vmem:[#allocation5 + $0x80] sm:$0xe]
        %v1384 = vld [vmem:[#allocation5 + $0x88] sm:$0xe]
        %vm1417 = vcmask 1042432
        %vm1418 = vcmask 1046532
        %vm1419 = vmor %vm1417, %vm1418
        %v1420 = vrot.slane %v1369, 5
        %v1421 = vrot.slane %v1420, 4
        %v1422 = vrot.slane %v1126, 5
        %v1423 = vsel %vm1419, %v1421, %v1422
        %v1424 = vrot.slane %v1370, 5
        %v1425 = vrot.slane %v1424, 4
        %v1426 = vrot.slane %v1127, 5
        %v1427 = vsel %vm1419, %v1425, %v1426
        %v1428 = vrot.slane %v1371, 5
        %v1429 = vrot.slane %v1428, 4
        %v1430 = vrot.slane %v1128, 5
        %v1431 = vsel %vm1419, %v1429, %v1430
        %v1432 = vrot.slane %v1372, 5
        %v1433 = vrot.slane %v1432, 4
        %v1434 = vrot.slane %v1129, 5
        %v1435 = vsel %vm1419, %v1433, %v1434
        %v1436 = vrot.slane %v1373, 5
        %v1437 = vrot.slane %v1436, 4
        %v1438 = vrot.slane %v1130, 5
        %v1439 = vsel %vm1419, %v1437, %v1438
        %v1440 = vrot.slane %v1374, 5
        %v1441 = vrot.slane %v1440, 4
        %v1442 = vrot.slane %v1131, 5
        %v1443 = vsel %vm1419, %v1441, %v1442
        %v1444 = vrot.slane %v1375, 5
        %v1445 = vrot.slane %v1444, 4
        %v1446 = vrot.slane %v1132, 5
        %v1447 = vsel %vm1419, %v1445, %v1446
        %v1448 = vrot.slane %v1376, 5
        %v1449 = vrot.slane %v1448, 4
        %v1450 = vrot.slane %v1133, 5
        %v1451 = vsel %vm1419, %v1449, %v1450
        %v1452 = vrot.slane %v1377, 5
        %v1453 = vrot.slane %v1452, 4
        %v1454 = vrot.slane %v1134, 5
        %v1455 = vsel %vm1419, %v1453, %v1454
        %v1456 = vrot.slane %v1378, 5
        %v1457 = vrot.slane %v1456, 4
        %v1458 = vrot.slane %v1135, 5
        %v1459 = vsel %vm1419, %v1457, %v1458
        %v1460 = vrot.slane %v1379, 5
        %v1461 = vrot.slane %v1460, 4
        %v1462 = vrot.slane %v1136, 5
        %v1463 = vsel %vm1419, %v1461, %v1462
        %v1464 = vrot.slane %v1380, 5
        %v1465 = vrot.slane %v1464, 4
        %v1466 = vrot.slane %v1137, 5
        %v1467 = vsel %vm1419, %v1465, %v1466
        %v1468 = vrot.slane %v1381, 5
        %v1469 = vrot.slane %v1468, 4
        %v1470 = vrot.slane %v1138, 5
        %v1471 = vsel %vm1419, %v1469, %v1470
        %v1472 = vrot.slane %v1382, 5
        %v1473 = vrot.slane %v1472, 4
        %v1474 = vrot.slane %v1139, 5
        %v1475 = vsel %vm1419, %v1473, %v1474
        %v1476 = vrot.slane %v1383, 5
        %v1477 = vrot.slane %v1476, 4
        %v1478 = vrot.slane %v1140, 5
        %v1479 = vsel %vm1419, %v1477, %v1478
        %v1480 = vrot.slane %v1384, 5
        %v1481 = vrot.slane %v1480, 4
        %v1482 = vrot.slane %v1141, 5
        %v1483 = vsel %vm1419, %v1481, %v1482
        %v1484 = vld [vmem:[%s1007] sm:$0xf]
        %v1485 = vld [vmem:[%s1007 + $0x8] sm:$0xf]
        %v1486 = vld [vmem:[%s1007 + $0x10] sm:$0xf]
        %v1487 = vld [vmem:[%s1007 + $0x18] sm:$0xf]
        %v1488 = vld [vmem:[%s1007 + $0x20] sm:$0xf]
        %v1489 = vld [vmem:[%s1007 + $0x28] sm:$0xf]
        %v1490 = vld [vmem:[%s1007 + $0x30] sm:$0xf]
        %v1491 = vld [vmem:[%s1007 + $0x38] sm:$0xf]
        %v1492 = vld [vmem:[%s1007 + $0x50] sm:$0xf]
        %v1493 = vld [vmem:[%s1007 + $0x58] sm:$0xf]
        %v1494 = vld [vmem:[%s1007 + $0x60] sm:$0xf]
        %v1495 = vld [vmem:[%s1007 + $0x68] sm:$0xf]
        %v1496 = vld [vmem:[%s1007 + $0x70] sm:$0xf]
        %v1497 = vld [vmem:[%s1007 + $0x78] sm:$0xf]
        %v1498 = vld [vmem:[%s1007 + $0x80] sm:$0xf]
        %v1499 = vld [vmem:[%s1007 + $0x88] sm:$0xf]
        %v1500 = vld [vmem:[%s1007 + $0x4] sm:$0x1]
        %v1501 = vld [vmem:[%s1007 + $0xc] sm:$0x1]
        %v1502 = vld [vmem:[%s1007 + $0x14] sm:$0x1]
        %v1503 = vld [vmem:[%s1007 + $0x1c] sm:$0x1]
        %v1504 = vld [vmem:[%s1007 + $0x24] sm:$0x1]
        %v1505 = vld [vmem:[%s1007 + $0x2c] sm:$0x1]
        %v1506 = vld [vmem:[%s1007 + $0x34] sm:$0x1]
        %v1507 = vld [vmem:[%s1007 + $0x3c] sm:$0x1]
        %v1508 = vld [vmem:[%s1007 + $0x54] sm:$0x1]
        %v1509 = vld [vmem:[%s1007 + $0x5c] sm:$0x1]
        %v1510 = vld [vmem:[%s1007 + $0x64] sm:$0x1]
        %v1511 = vld [vmem:[%s1007 + $0x6c] sm:$0x1]
        %v1512 = vld [vmem:[%s1007 + $0x74] sm:$0x1]
        %v1513 = vld [vmem:[%s1007 + $0x7c] sm:$0x1]
        %v1514 = vld [vmem:[%s1007 + $0x84] sm:$0x1]
        %v1515 = vld [vmem:[%s1007 + $0x8c] sm:$0x1]
        %v1517 = vshrl.u32 %v1484, 16
        %v1519 = vrot.slane %v1517, 4
        %v1520 = vshll.u32 %v1484, 16
        %v1522 = vrot.slane %v1520, 5
        %v1523 = vor.u32 %v1519, %v1522
        %v1524 = vrot.slane %v1523, 4
        %v1526 = vshll.u32 %v1500, 16
        %v1528 = vrot.slane %v1526, 5
        %v1529 = vsel %vm1144, %v1524, %v1528
        %v1531 = vshrl.u32 %v1485, 16
        %v1533 = vrot.slane %v1531, 4
        %v1534 = vshll.u32 %v1485, 16
        %v1536 = vrot.slane %v1534, 5
        %v1537 = vor.u32 %v1533, %v1536
        %v1538 = vrot.slane %v1537, 4
        %v1540 = vshll.u32 %v1501, 16
        %v1542 = vrot.slane %v1540, 5
        %v1543 = vsel %vm1144, %v1538, %v1542
        %v1545 = vshrl.u32 %v1486, 16
        %v1547 = vrot.slane %v1545, 4
        %v1548 = vshll.u32 %v1486, 16
        %v1550 = vrot.slane %v1548, 5
        %v1551 = vor.u32 %v1547, %v1550
        %v1552 = vrot.slane %v1551, 4
        %v1554 = vshll.u32 %v1502, 16
        %v1556 = vrot.slane %v1554, 5
        %v1557 = vsel %vm1144, %v1552, %v1556
        %v1559 = vshrl.u32 %v1487, 16
        %v1561 = vrot.slane %v1559, 4
        %v1562 = vshll.u32 %v1487, 16
        %v1564 = vrot.slane %v1562, 5
        %v1565 = vor.u32 %v1561, %v1564
        %v1566 = vrot.slane %v1565, 4
        %v1568 = vshll.u32 %v1503, 16
        %v1570 = vrot.slane %v1568, 5
        %v1571 = vsel %vm1144, %v1566, %v1570
        %v1573 = vshrl.u32 %v1488, 16
        %v1575 = vrot.slane %v1573, 4
        %v1576 = vshll.u32 %v1488, 16
        %v1578 = vrot.slane %v1576, 5
        %v1579 = vor.u32 %v1575, %v1578
        %v1580 = vrot.slane %v1579, 4
        %v1582 = vshll.u32 %v1504, 16
        %v1584 = vrot.slane %v1582, 5
        %v1585 = vsel %vm1144, %v1580, %v1584
        %v1587 = vshrl.u32 %v1489, 16
        %v1589 = vrot.slane %v1587, 4
        %v1590 = vshll.u32 %v1489, 16
        %v1592 = vrot.slane %v1590, 5
        %v1593 = vor.u32 %v1589, %v1592
        %v1594 = vrot.slane %v1593, 4
        %v1596 = vshll.u32 %v1505, 16
        %v1598 = vrot.slane %v1596, 5
        %v1599 = vsel %vm1144, %v1594, %v1598
        %v1601 = vshrl.u32 %v1490, 16
        %v1603 = vrot.slane %v1601, 4
        %v1604 = vshll.u32 %v1490, 16
        %v1606 = vrot.slane %v1604, 5
        %v1607 = vor.u32 %v1603, %v1606
        %v1608 = vrot.slane %v1607, 4
        %v1610 = vshll.u32 %v1506, 16
        %v1612 = vrot.slane %v1610, 5
        %v1613 = vsel %vm1144, %v1608, %v1612
        %v1615 = vshrl.u32 %v1491, 16
        %v1617 = vrot.slane %v1615, 4
        %v1618 = vshll.u32 %v1491, 16
        %v1620 = vrot.slane %v1618, 5
        %v1621 = vor.u32 %v1617, %v1620
        %v1622 = vrot.slane %v1621, 4
        %v1624 = vshll.u32 %v1507, 16
        %v1626 = vrot.slane %v1624, 5
        %v1627 = vsel %vm1144, %v1622, %v1626
        %v1629 = vshrl.u32 %v1492, 16
        %v1631 = vrot.slane %v1629, 4
        %v1632 = vshll.u32 %v1492, 16
        %v1634 = vrot.slane %v1632, 5
        %v1635 = vor.u32 %v1631, %v1634
        %v1636 = vrot.slane %v1635, 4
        %v1638 = vshll.u32 %v1508, 16
        %v1640 = vrot.slane %v1638, 5
        %v1641 = vsel %vm1144, %v1636, %v1640
        %v1643 = vshrl.u32 %v1493, 16
        %v1645 = vrot.slane %v1643, 4
        %v1646 = vshll.u32 %v1493, 16
        %v1648 = vrot.slane %v1646, 5
        %v1649 = vor.u32 %v1645, %v1648
        %v1650 = vrot.slane %v1649, 4
        %v1652 = vshll.u32 %v1509, 16
        %v1654 = vrot.slane %v1652, 5
        %v1655 = vsel %vm1144, %v1650, %v1654
        %v1657 = vshrl.u32 %v1494, 16
        %v1659 = vrot.slane %v1657, 4
        %v1660 = vshll.u32 %v1494, 16
        %v1662 = vrot.slane %v1660, 5
        %v1663 = vor.u32 %v1659, %v1662
        %v1664 = vrot.slane %v1663, 4
        %v1666 = vshll.u32 %v1510, 16
        %v1668 = vrot.slane %v1666, 5
        %v1669 = vsel %vm1144, %v1664, %v1668
        %v1671 = vshrl.u32 %v1495, 16
        %v1673 = vrot.slane %v1671, 4
        %v1674 = vshll.u32 %v1495, 16
        %v1676 = vrot.slane %v1674, 5
        %v1677 = vor.u32 %v1673, %v1676
        %v1678 = vrot.slane %v1677, 4
        %v1680 = vshll.u32 %v1511, 16
        %v1682 = vrot.slane %v1680, 5
        %v1683 = vsel %vm1144, %v1678, %v1682
        %v1685 = vshrl.u32 %v1496, 16
        %v1687 = vrot.slane %v1685, 4
        %v1688 = vshll.u32 %v1496, 16
        %v1690 = vrot.slane %v1688, 5
        %v1691 = vor.u32 %v1687, %v1690
        %v1692 = vrot.slane %v1691, 4
        %v1694 = vshll.u32 %v1512, 16
        %v1696 = vrot.slane %v1694, 5
        %v1697 = vsel %vm1144, %v1692, %v1696
        %v1699 = vshrl.u32 %v1497, 16
        %v1701 = vrot.slane %v1699, 4
        %v1702 = vshll.u32 %v1497, 16
        %v1704 = vrot.slane %v1702, 5
        %v1705 = vor.u32 %v1701, %v1704
        %v1706 = vrot.slane %v1705, 4
        %v1708 = vshll.u32 %v1513, 16
        %v1710 = vrot.slane %v1708, 5
        %v1711 = vsel %vm1144, %v1706, %v1710
        %v1713 = vshrl.u32 %v1498, 16
        %v1715 = vrot.slane %v1713, 4
        %v1716 = vshll.u32 %v1498, 16
        %v1718 = vrot.slane %v1716, 5
        %v1719 = vor.u32 %v1715, %v1718
        %v1720 = vrot.slane %v1719, 4
        %v1722 = vshll.u32 %v1514, 16
        %v1724 = vrot.slane %v1722, 5
        %v1725 = vsel %vm1144, %v1720, %v1724
        %v1727 = vshrl.u32 %v1499, 16
        %v1729 = vrot.slane %v1727, 4
        %v1730 = vshll.u32 %v1499, 16
        %v1732 = vrot.slane %v1730, 5
        %v1733 = vor.u32 %v1729, %v1732
        %v1734 = vrot.slane %v1733, 4
        %v1736 = vshll.u32 %v1515, 16
        %v1738 = vrot.slane %v1736, 5
        %v1739 = vsel %vm1144, %v1734, %v1738
        %v1740 = vld [vmem:[%s1007] sm:$0xe]
        %v1741 = vld [vmem:[%s1007 + $0x8] sm:$0xe]
        %v1742 = vld [vmem:[%s1007 + $0x10] sm:$0xe]
        %v1743 = vld [vmem:[%s1007 + $0x18] sm:$0xe]
        %v1744 = vld [vmem:[%s1007 + $0x20] sm:$0xe]
        %v1745 = vld [vmem:[%s1007 + $0x28] sm:$0xe]
        %v1746 = vld [vmem:[%s1007 + $0x30] sm:$0xe]
        %v1747 = vld [vmem:[%s1007 + $0x38] sm:$0xe]
        %v1748 = vld [vmem:[%s1007 + $0x50] sm:$0xe]
        %v1749 = vld [vmem:[%s1007 + $0x58] sm:$0xe]
        %v1750 = vld [vmem:[%s1007 + $0x60] sm:$0xe]
        %v1751 = vld [vmem:[%s1007 + $0x68] sm:$0xe]
        %v1752 = vld [vmem:[%s1007 + $0x70] sm:$0xe]
        %v1753 = vld [vmem:[%s1007 + $0x78] sm:$0xe]
        %v1754 = vld [vmem:[%s1007 + $0x80] sm:$0xe]
        %v1755 = vld [vmem:[%s1007 + $0x88] sm:$0xe]
        %v1788 = vrot.slane %v1740, 5
        %v1789 = vrot.slane %v1788, 4
        %v1790 = vrot.slane %v1500, 5
        %v1791 = vsel %vm1419, %v1789, %v1790
        %v1792 = vrot.slane %v1741, 5
        %v1793 = vrot.slane %v1792, 4
        %v1794 = vrot.slane %v1501, 5
        %v1795 = vsel %vm1419, %v1793, %v1794
        %v1796 = vrot.slane %v1742, 5
        %v1797 = vrot.slane %v1796, 4
        %v1798 = vrot.slane %v1502, 5
        %v1799 = vsel %vm1419, %v1797, %v1798
        %v1800 = vrot.slane %v1743, 5
        %v1801 = vrot.slane %v1800, 4
        %v1802 = vrot.slane %v1503, 5
        %v1803 = vsel %vm1419, %v1801, %v1802
        %v1804 = vrot.slane %v1744, 5
        %v1805 = vrot.slane %v1804, 4
        %v1806 = vrot.slane %v1504, 5
        %v1807 = vsel %vm1419, %v1805, %v1806
        %v1808 = vrot.slane %v1745, 5
        %v1809 = vrot.slane %v1808, 4
        %v1810 = vrot.slane %v1505, 5
        %v1811 = vsel %vm1419, %v1809, %v1810
        %v1812 = vrot.slane %v1746, 5
        %v1813 = vrot.slane %v1812, 4
        %v1814 = vrot.slane %v1506, 5
        %v1815 = vsel %vm1419, %v1813, %v1814
        %v1816 = vrot.slane %v1747, 5
        %v1817 = vrot.slane %v1816, 4
        %v1818 = vrot.slane %v1507, 5
        %v1819 = vsel %vm1419, %v1817, %v1818
        %v1820 = vrot.slane %v1748, 5
        %v1821 = vrot.slane %v1820, 4
        %v1822 = vrot.slane %v1508, 5
        %v1823 = vsel %vm1419, %v1821, %v1822
        %v1824 = vrot.slane %v1749, 5
        %v1825 = vrot.slane %v1824, 4
        %v1826 = vrot.slane %v1509, 5
        %v1827 = vsel %vm1419, %v1825, %v1826
        %v1828 = vrot.slane %v1750, 5
        %v1829 = vrot.slane %v1828, 4
        %v1830 = vrot.slane %v1510, 5
        %v1831 = vsel %vm1419, %v1829, %v1830
        %v1832 = vrot.slane %v1751, 5
        %v1833 = vrot.slane %v1832, 4
        %v1834 = vrot.slane %v1511, 5
        %v1835 = vsel %vm1419, %v1833, %v1834
        %v1836 = vrot.slane %v1752, 5
        %v1837 = vrot.slane %v1836, 4
        %v1838 = vrot.slane %v1512, 5
        %v1839 = vsel %vm1419, %v1837, %v1838
        %v1840 = vrot.slane %v1753, 5
        %v1841 = vrot.slane %v1840, 4
        %v1842 = vrot.slane %v1513, 5
        %v1843 = vsel %vm1419, %v1841, %v1842
        %v1844 = vrot.slane %v1754, 5
        %v1845 = vrot.slane %v1844, 4
        %v1846 = vrot.slane %v1514, 5
        %v1847 = vsel %vm1419, %v1845, %v1846
        %v1848 = vrot.slane %v1755, 5
        %v1849 = vrot.slane %v1848, 4
        %v1850 = vrot.slane %v1515, 5
        %v1851 = vsel %vm1419, %v1849, %v1850
        %s1852 = scalar_lea.vmem [#allocation5], 16
        %v1853 = vld [vmem:[%s1852] sm:$0xf]
        %v1854 = vld [vmem:[%s1852 + $0x8] sm:$0xf]
        %v1855 = vld [vmem:[%s1852 + $0x10] sm:$0xf]
        %v1856 = vld [vmem:[%s1852 + $0x18] sm:$0xf]
        %v1857 = vld [vmem:[%s1852 + $0x20] sm:$0xf]
        %v1858 = vld [vmem:[%s1852 + $0x28] sm:$0xf]
        %v1859 = vld [vmem:[%s1852 + $0x30] sm:$0xf]
        %v1860 = vld [vmem:[%s1852 + $0x38] sm:$0xf]
        %v1861 = vld [vmem:[%s1852 + $0x50] sm:$0xf]
        %v1862 = vld [vmem:[%s1852 + $0x58] sm:$0xf]
        %v1863 = vld [vmem:[%s1852 + $0x60] sm:$0xf]
        %v1864 = vld [vmem:[%s1852 + $0x68] sm:$0xf]
        %v1865 = vld [vmem:[%s1852 + $0x70] sm:$0xf]
        %v1866 = vld [vmem:[%s1852 + $0x78] sm:$0xf]
        %v1867 = vld [vmem:[%s1852 + $0x80] sm:$0xf]
        %v1868 = vld [vmem:[%s1852 + $0x88] sm:$0xf]
        %v1869 = vld [vmem:[%s1852 + $0x4] sm:$0x1]
        %v1870 = vld [vmem:[%s1852 + $0xc] sm:$0x1]
        %v1871 = vld [vmem:[%s1852 + $0x14] sm:$0x1]
        %v1872 = vld [vmem:[%s1852 + $0x1c] sm:$0x1]
        %v1873 = vld [vmem:[%s1852 + $0x24] sm:$0x1]
        %v1874 = vld [vmem:[%s1852 + $0x2c] sm:$0x1]
        %v1875 = vld [vmem:[%s1852 + $0x34] sm:$0x1]
        %v1876 = vld [vmem:[%s1852 + $0x3c] sm:$0x1]
        %v1877 = vld [vmem:[%s1852 + $0x54] sm:$0x1]
        %v1878 = vld [vmem:[%s1852 + $0x5c] sm:$0x1]
        %v1879 = vld [vmem:[%s1852 + $0x64] sm:$0x1]
        %v1880 = vld [vmem:[%s1852 + $0x6c] sm:$0x1]
        %v1881 = vld [vmem:[%s1852 + $0x74] sm:$0x1]
        %v1882 = vld [vmem:[%s1852 + $0x7c] sm:$0x1]
        %v1883 = vld [vmem:[%s1852 + $0x84] sm:$0x1]
        %v1884 = vld [vmem:[%s1852 + $0x8c] sm:$0x1]
        %v1886 = vshrl.u32 %v1853, 16
        %v1888 = vrot.slane %v1886, 4
        %v1889 = vshll.u32 %v1853, 16
        %v1891 = vrot.slane %v1889, 5
        %v1892 = vor.u32 %v1888, %v1891
        %v1893 = vrot.slane %v1892, 4
        %v1895 = vshll.u32 %v1869, 16
        %v1897 = vrot.slane %v1895, 5
        %v1898 = vsel %vm1144, %v1893, %v1897
        %v1900 = vshrl.u32 %v1854, 16
        %v1902 = vrot.slane %v1900, 4
        %v1903 = vshll.u32 %v1854, 16
        %v1905 = vrot.slane %v1903, 5
        %v1906 = vor.u32 %v1902, %v1905
        %v1907 = vrot.slane %v1906, 4
        %v1909 = vshll.u32 %v1870, 16
        %v1911 = vrot.slane %v1909, 5
        %v1912 = vsel %vm1144, %v1907, %v1911
        %v1914 = vshrl.u32 %v1855, 16
        %v1916 = vrot.slane %v1914, 4
        %v1917 = vshll.u32 %v1855, 16
        %v1919 = vrot.slane %v1917, 5
        %v1920 = vor.u32 %v1916, %v1919
        %v1921 = vrot.slane %v1920, 4
        %v1923 = vshll.u32 %v1871, 16
        %v1925 = vrot.slane %v1923, 5
        %v1926 = vsel %vm1144, %v1921, %v1925
        %v1928 = vshrl.u32 %v1856, 16
        %v1930 = vrot.slane %v1928, 4
        %v1931 = vshll.u32 %v1856, 16
        %v1933 = vrot.slane %v1931, 5
        %v1934 = vor.u32 %v1930, %v1933
        %v1935 = vrot.slane %v1934, 4
        %v1937 = vshll.u32 %v1872, 16
        %v1939 = vrot.slane %v1937, 5
        %v1940 = vsel %vm1144, %v1935, %v1939
        %v1942 = vshrl.u32 %v1857, 16
        %v1944 = vrot.slane %v1942, 4
        %v1945 = vshll.u32 %v1857, 16
        %v1947 = vrot.slane %v1945, 5
        %v1948 = vor.u32 %v1944, %v1947
        %v1949 = vrot.slane %v1948, 4
        %v1951 = vshll.u32 %v1873, 16
        %v1953 = vrot.slane %v1951, 5
        %v1954 = vsel %vm1144, %v1949, %v1953
        %v1956 = vshrl.u32 %v1858, 16
        %v1958 = vrot.slane %v1956, 4
        %v1959 = vshll.u32 %v1858, 16
        %v1961 = vrot.slane %v1959, 5
        %v1962 = vor.u32 %v1958, %v1961
        %v1963 = vrot.slane %v1962, 4
        %v1965 = vshll.u32 %v1874, 16
        %v1967 = vrot.slane %v1965, 5
        %v1968 = vsel %vm1144, %v1963, %v1967
        %v1970 = vshrl.u32 %v1859, 16
        %v1972 = vrot.slane %v1970, 4
        %v1973 = vshll.u32 %v1859, 16
        %v1975 = vrot.slane %v1973, 5
        %v1976 = vor.u32 %v1972, %v1975
        %v1977 = vrot.slane %v1976, 4
        %v1979 = vshll.u32 %v1875, 16
        %v1981 = vrot.slane %v1979, 5
        %v1982 = vsel %vm1144, %v1977, %v1981
        %v1984 = vshrl.u32 %v1860, 16
        %v1986 = vrot.slane %v1984, 4
        %v1987 = vshll.u32 %v1860, 16
        %v1989 = vrot.slane %v1987, 5
        %v1990 = vor.u32 %v1986, %v1989
        %v1991 = vrot.slane %v1990, 4
        %v1993 = vshll.u32 %v1876, 16
        %v1995 = vrot.slane %v1993, 5
        %v1996 = vsel %vm1144, %v1991, %v1995
        %v1998 = vshrl.u32 %v1861, 16
        %v2000 = vrot.slane %v1998, 4
        %v2001 = vshll.u32 %v1861, 16
        %v2003 = vrot.slane %v2001, 5
        %v2004 = vor.u32 %v2000, %v2003
        %v2005 = vrot.slane %v2004, 4
        %v2007 = vshll.u32 %v1877, 16
        %v2009 = vrot.slane %v2007, 5
        %v2010 = vsel %vm1144, %v2005, %v2009
        %v2012 = vshrl.u32 %v1862, 16
        %v2014 = vrot.slane %v2012, 4
        %v2015 = vshll.u32 %v1862, 16
        %v2017 = vrot.slane %v2015, 5
        %v2018 = vor.u32 %v2014, %v2017
        %v2019 = vrot.slane %v2018, 4
        %v2021 = vshll.u32 %v1878, 16
        %v2023 = vrot.slane %v2021, 5
        %v2024 = vsel %vm1144, %v2019, %v2023
        %v2026 = vshrl.u32 %v1863, 16
        %v2028 = vrot.slane %v2026, 4
        %v2029 = vshll.u32 %v1863, 16
        %v2031 = vrot.slane %v2029, 5
        %v2032 = vor.u32 %v2028, %v2031
        %v2033 = vrot.slane %v2032, 4
        %v2035 = vshll.u32 %v1879, 16
        %v2037 = vrot.slane %v2035, 5
        %v2038 = vsel %vm1144, %v2033, %v2037
        %v2040 = vshrl.u32 %v1864, 16
        %v2042 = vrot.slane %v2040, 4
        %v2043 = vshll.u32 %v1864, 16
        %v2045 = vrot.slane %v2043, 5
        %v2046 = vor.u32 %v2042, %v2045
        %v2047 = vrot.slane %v2046, 4
        %v2049 = vshll.u32 %v1880, 16
        %v2051 = vrot.slane %v2049, 5
        %v2052 = vsel %vm1144, %v2047, %v2051
        %v2054 = vshrl.u32 %v1865, 16
        %v2056 = vrot.slane %v2054, 4
        %v2057 = vshll.u32 %v1865, 16
        %v2059 = vrot.slane %v2057, 5
        %v2060 = vor.u32 %v2056, %v2059
        %v2061 = vrot.slane %v2060, 4
        %v2063 = vshll.u32 %v1881, 16
        %v2065 = vrot.slane %v2063, 5
        %v2066 = vsel %vm1144, %v2061, %v2065
        %v2068 = vshrl.u32 %v1866, 16
        %v2070 = vrot.slane %v2068, 4
        %v2071 = vshll.u32 %v1866, 16
        %v2073 = vrot.slane %v2071, 5
        %v2074 = vor.u32 %v2070, %v2073
        %v2075 = vrot.slane %v2074, 4
        %v2077 = vshll.u32 %v1882, 16
        %v2079 = vrot.slane %v2077, 5
        %v2080 = vsel %vm1144, %v2075, %v2079
        %v2082 = vshrl.u32 %v1867, 16
        %v2084 = vrot.slane %v2082, 4
        %v2085 = vshll.u32 %v1867, 16
        %v2087 = vrot.slane %v2085, 5
        %v2088 = vor.u32 %v2084, %v2087
        %v2089 = vrot.slane %v2088, 4
        %v2091 = vshll.u32 %v1883, 16
        %v2093 = vrot.slane %v2091, 5
        %v2094 = vsel %vm1144, %v2089, %v2093
        %v2096 = vshrl.u32 %v1868, 16
        %v2098 = vrot.slane %v2096, 4
        %v2099 = vshll.u32 %v1868, 16
        %v2101 = vrot.slane %v2099, 5
        %v2102 = vor.u32 %v2098, %v2101
        %v2103 = vrot.slane %v2102, 4
        %v2105 = vshll.u32 %v1884, 16
        %v2107 = vrot.slane %v2105, 5
        %v2108 = vsel %vm1144, %v2103, %v2107
        %v2109 = vld [vmem:[%s1852] sm:$0xe]
        %v2110 = vld [vmem:[%s1852 + $0x8] sm:$0xe]
        %v2111 = vld [vmem:[%s1852 + $0x10] sm:$0xe]
        %v2112 = vld [vmem:[%s1852 + $0x18] sm:$0xe]
        %v2113 = vld [vmem:[%s1852 + $0x20] sm:$0xe]
        %v2114 = vld [vmem:[%s1852 + $0x28] sm:$0xe]
        %v2115 = vld [vmem:[%s1852 + $0x30] sm:$0xe]
        %v2116 = vld [vmem:[%s1852 + $0x38] sm:$0xe]
        %v2117 = vld [vmem:[%s1852 + $0x50] sm:$0xe]
        %v2118 = vld [vmem:[%s1852 + $0x58] sm:$0xe]
        %v2119 = vld [vmem:[%s1852 + $0x60] sm:$0xe]
        %v2120 = vld [vmem:[%s1852 + $0x68] sm:$0xe]
        %v2121 = vld [vmem:[%s1852 + $0x70] sm:$0xe]
        %v2122 = vld [vmem:[%s1852 + $0x78] sm:$0xe]
        %v2123 = vld [vmem:[%s1852 + $0x80] sm:$0xe]
        %v2124 = vld [vmem:[%s1852 + $0x88] sm:$0xe]
        %v2157 = vrot.slane %v2109, 5
        %v2158 = vrot.slane %v2157, 4
        %v2159 = vrot.slane %v1869, 5
        %v2160 = vsel %vm1419, %v2158, %v2159
        %v2161 = vrot.slane %v2110, 5
        %v2162 = vrot.slane %v2161, 4
        %v2163 = vrot.slane %v1870, 5
        %v2164 = vsel %vm1419, %v2162, %v2163
        %v2165 = vrot.slane %v2111, 5
        %v2166 = vrot.slane %v2165, 4
        %v2167 = vrot.slane %v1871, 5
        %v2168 = vsel %vm1419, %v2166, %v2167
        %v2169 = vrot.slane %v2112, 5
        %v2170 = vrot.slane %v2169, 4
        %v2171 = vrot.slane %v1872, 5
        %v2172 = vsel %vm1419, %v2170, %v2171
        %v2173 = vrot.slane %v2113, 5
        %v2174 = vrot.slane %v2173, 4
        %v2175 = vrot.slane %v1873, 5
        %v2176 = vsel %vm1419, %v2174, %v2175
        %v2177 = vrot.slane %v2114, 5
        %v2178 = vrot.slane %v2177, 4
        %v2179 = vrot.slane %v1874, 5
        %v2180 = vsel %vm1419, %v2178, %v2179
        %v2181 = vrot.slane %v2115, 5
        %v2182 = vrot.slane %v2181, 4
        %v2183 = vrot.slane %v1875, 5
        %v2184 = vsel %vm1419, %v2182, %v2183
        %v2185 = vrot.slane %v2116, 5
        %v2186 = vrot.slane %v2185, 4
        %v2187 = vrot.slane %v1876, 5
        %v2188 = vsel %vm1419, %v2186, %v2187
        %v2189 = vrot.slane %v2117, 5
        %v2190 = vrot.slane %v2189, 4
        %v2191 = vrot.slane %v1877, 5
        %v2192 = vsel %vm1419, %v2190, %v2191
        %v2193 = vrot.slane %v2118, 5
        %v2194 = vrot.slane %v2193, 4
        %v2195 = vrot.slane %v1878, 5
        %v2196 = vsel %vm1419, %v2194, %v2195
        %v2197 = vrot.slane %v2119, 5
        %v2198 = vrot.slane %v2197, 4
        %v2199 = vrot.slane %v1879, 5
        %v2200 = vsel %vm1419, %v2198, %v2199
        %v2201 = vrot.slane %v2120, 5
        %v2202 = vrot.slane %v2201, 4
        %v2203 = vrot.slane %v1880, 5
        %v2204 = vsel %vm1419, %v2202, %v2203
        %v2205 = vrot.slane %v2121, 5
        %v2206 = vrot.slane %v2205, 4
        %v2207 = vrot.slane %v1881, 5
        %v2208 = vsel %vm1419, %v2206, %v2207
        %v2209 = vrot.slane %v2122, 5
        %v2210 = vrot.slane %v2209, 4
        %v2211 = vrot.slane %v1882, 5
        %v2212 = vsel %vm1419, %v2210, %v2211
        %v2213 = vrot.slane %v2123, 5
        %v2214 = vrot.slane %v2213, 4
        %v2215 = vrot.slane %v1883, 5
        %v2216 = vsel %vm1419, %v2214, %v2215
        %v2217 = vrot.slane %v2124, 5
        %v2218 = vrot.slane %v2217, 4
        %v2219 = vrot.slane %v1884, 5
        %v2220 = vsel %vm1419, %v2218, %v2219
        %v2237 = vunpack.c.l.b16 %v1110
        %v2238 = vunpack.c.l.b16 %v1111
        %v2239 = vunpack.c.l.b16 %v1112
        %v2240 = vunpack.c.l.b16 %v1113
        %v2241 = vunpack.c.l.b16 %v1114
        %v2242 = vunpack.c.l.b16 %v1115
        %v2243 = vunpack.c.l.b16 %v1116
        %v2244 = vunpack.c.l.b16 %v1117
        %v2245 = vunpack.c.l.b16 %v1118
        %v2246 = vunpack.c.l.b16 %v1119
        %v2247 = vunpack.c.l.b16 %v1120
        %v2248 = vunpack.c.l.b16 %v1121
        %v2249 = vunpack.c.l.b16 %v1122
        %v2250 = vunpack.c.l.b16 %v1123
        %v2251 = vunpack.c.l.b16 %v1124
        %v2252 = vunpack.c.l.b16 %v1125
        %v2253 = vpack.c.b16 %v2238, %v2237
        %v2254 = vpack.c.b16 %v2240, %v2239
        %v2255 = vpack.c.b16 %v2242, %v2241
        %v2256 = vpack.c.b16 %v2244, %v2243
        %v2257 = vpack.c.b16 %v2246, %v2245
        %v2258 = vpack.c.b16 %v2248, %v2247
        %v2259 = vpack.c.b16 %v2250, %v2249
        %v2260 = vpack.c.b16 %v2252, %v2251
        %v2269 = vunpack.c.l.b16 %v1158
        %v2270 = vunpack.c.l.b16 %v1172
        %v2271 = vunpack.c.l.b16 %v1186
        %v2272 = vunpack.c.l.b16 %v1200
        %v2273 = vunpack.c.l.b16 %v1214
        %v2274 = vunpack.c.l.b16 %v1228
        %v2275 = vunpack.c.l.b16 %v1242
        %v2276 = vunpack.c.l.b16 %v1256
        %v2277 = vunpack.c.l.b16 %v1270
        %v2278 = vunpack.c.l.b16 %v1284
        %v2279 = vunpack.c.l.b16 %v1298
        %v2280 = vunpack.c.l.b16 %v1312
        %v2281 = vunpack.c.l.b16 %v1326
        %v2282 = vunpack.c.l.b16 %v1340
        %v2283 = vunpack.c.l.b16 %v1354
        %v2284 = vunpack.c.l.b16 %v1368
        %v2285 = vpack.c.b16 %v2270, %v2269
        %v2286 = vpack.c.b16 %v2272, %v2271
        %v2287 = vpack.c.b16 %v2274, %v2273
        %v2288 = vpack.c.b16 %v2276, %v2275
        %v2289 = vpack.c.b16 %v2278, %v2277
        %v2290 = vpack.c.b16 %v2280, %v2279
        %v2291 = vpack.c.b16 %v2282, %v2281
        %v2292 = vpack.c.b16 %v2284, %v2283
        %v2301 = vunpack.c.l.b16 %v1423
        %v2302 = vunpack.c.l.b16 %v1427
        %v2303 = vunpack.c.l.b16 %v1431
        %v2304 = vunpack.c.l.b16 %v1435
        %v2305 = vunpack.c.l.b16 %v1439
        %v2306 = vunpack.c.l.b16 %v1443
        %v2307 = vunpack.c.l.b16 %v1447
        %v2308 = vunpack.c.l.b16 %v1451
        %v2309 = vunpack.c.l.b16 %v1455
        %v2310 = vunpack.c.l.b16 %v1459
        %v2311 = vunpack.c.l.b16 %v1463
        %v2312 = vunpack.c.l.b16 %v1467
        %v2313 = vunpack.c.l.b16 %v1471
        %v2314 = vunpack.c.l.b16 %v1475
        %v2315 = vunpack.c.l.b16 %v1479
        %v2316 = vunpack.c.l.b16 %v1483
        %v2317 = vpack.c.b16 %v2302, %v2301
        %v2318 = vpack.c.b16 %v2304, %v2303
        %v2319 = vpack.c.b16 %v2306, %v2305
        %v2320 = vpack.c.b16 %v2308, %v2307
        %v2321 = vpack.c.b16 %v2310, %v2309
        %v2322 = vpack.c.b16 %v2312, %v2311
        %v2323 = vpack.c.b16 %v2314, %v2313
        %v2324 = vpack.c.b16 %v2316, %v2315
        %v2349 = vunpack.c.l.b16 %v1484
        %v2350 = vunpack.c.l.b16 %v1485
        %v2351 = vunpack.c.l.b16 %v1486
        %v2352 = vunpack.c.l.b16 %v1487
        %v2353 = vunpack.c.l.b16 %v1488
        %v2354 = vunpack.c.l.b16 %v1489
        %v2355 = vunpack.c.l.b16 %v1490
        %v2356 = vunpack.c.l.b16 %v1491
        %v2357 = vunpack.c.l.b16 %v1492
        %v2358 = vunpack.c.l.b16 %v1493
        %v2359 = vunpack.c.l.b16 %v1494
        %v2360 = vunpack.c.l.b16 %v1495
        %v2361 = vunpack.c.l.b16 %v1496
        %v2362 = vunpack.c.l.b16 %v1497
        %v2363 = vunpack.c.l.b16 %v1498
        %v2364 = vunpack.c.l.b16 %v1499
        %v2365 = vpack.c.b16 %v2350, %v2349
        %v2366 = vpack.c.b16 %v2352, %v2351
        %v2367 = vpack.c.b16 %v2354, %v2353
        %v2368 = vpack.c.b16 %v2356, %v2355
        %v2369 = vpack.c.b16 %v2358, %v2357
        %v2370 = vpack.c.b16 %v2360, %v2359
        %v2371 = vpack.c.b16 %v2362, %v2361
        %v2372 = vpack.c.b16 %v2364, %v2363
        %v2381 = vunpack.c.l.b16 %v1529
        %v2382 = vunpack.c.l.b16 %v1543
        %v2383 = vunpack.c.l.b16 %v1557
        %v2384 = vunpack.c.l.b16 %v1571
        %v2385 = vunpack.c.l.b16 %v1585
        %v2386 = vunpack.c.l.b16 %v1599
        %v2387 = vunpack.c.l.b16 %v1613
        %v2388 = vunpack.c.l.b16 %v1627
        %v2389 = vunpack.c.l.b16 %v1641
        %v2390 = vunpack.c.l.b16 %v1655
        %v2391 = vunpack.c.l.b16 %v1669
        %v2392 = vunpack.c.l.b16 %v1683
        %v2393 = vunpack.c.l.b16 %v1697
        %v2394 = vunpack.c.l.b16 %v1711
        %v2395 = vunpack.c.l.b16 %v1725
        %v2396 = vunpack.c.l.b16 %v1739
        %v2397 = vpack.c.b16 %v2382, %v2381
        %v2398 = vpack.c.b16 %v2384, %v2383
        %v2399 = vpack.c.b16 %v2386, %v2385
        %v2400 = vpack.c.b16 %v2388, %v2387
        %v2401 = vpack.c.b16 %v2390, %v2389
        %v2402 = vpack.c.b16 %v2392, %v2391
        %v2403 = vpack.c.b16 %v2394, %v2393
        %v2404 = vpack.c.b16 %v2396, %v2395
        %v2413 = vunpack.c.l.b16 %v1791
        %v2414 = vunpack.c.l.b16 %v1795
        %v2415 = vunpack.c.l.b16 %v1799
        %v2416 = vunpack.c.l.b16 %v1803
        %v2417 = vunpack.c.l.b16 %v1807
        %v2418 = vunpack.c.l.b16 %v1811
        %v2419 = vunpack.c.l.b16 %v1815
        %v2420 = vunpack.c.l.b16 %v1819
        %v2421 = vunpack.c.l.b16 %v1823
        %v2422 = vunpack.c.l.b16 %v1827
        %v2423 = vunpack.c.l.b16 %v1831
        %v2424 = vunpack.c.l.b16 %v1835
        %v2425 = vunpack.c.l.b16 %v1839
        %v2426 = vunpack.c.l.b16 %v1843
        %v2427 = vunpack.c.l.b16 %v1847
        %v2428 = vunpack.c.l.b16 %v1851
        %v2429 = vpack.c.b16 %v2414, %v2413
        %v2430 = vpack.c.b16 %v2416, %v2415
        %v2431 = vpack.c.b16 %v2418, %v2417
        %v2432 = vpack.c.b16 %v2420, %v2419
        %v2433 = vpack.c.b16 %v2422, %v2421
        %v2434 = vpack.c.b16 %v2424, %v2423
        %v2435 = vpack.c.b16 %v2426, %v2425
        %v2436 = vpack.c.b16 %v2428, %v2427
        %v2461 = vunpack.c.l.b16 %v1853
        %v2462 = vunpack.c.l.b16 %v1854
        %v2463 = vunpack.c.l.b16 %v1855
        %v2464 = vunpack.c.l.b16 %v1856
        %v2465 = vunpack.c.l.b16 %v1857
        %v2466 = vunpack.c.l.b16 %v1858
        %v2467 = vunpack.c.l.b16 %v1859
        %v2468 = vunpack.c.l.b16 %v1860
        %v2469 = vunpack.c.l.b16 %v1861
        %v2470 = vunpack.c.l.b16 %v1862
        %v2471 = vunpack.c.l.b16 %v1863
        %v2472 = vunpack.c.l.b16 %v1864
        %v2473 = vunpack.c.l.b16 %v1865
        %v2474 = vunpack.c.l.b16 %v1866
        %v2475 = vunpack.c.l.b16 %v1867
        %v2476 = vunpack.c.l.b16 %v1868
        %v2477 = vpack.c.b16 %v2462, %v2461
        %v2478 = vpack.c.b16 %v2464, %v2463
        %v2479 = vpack.c.b16 %v2466, %v2465
        %v2480 = vpack.c.b16 %v2468, %v2467
        %v2481 = vpack.c.b16 %v2470, %v2469
        %v2482 = vpack.c.b16 %v2472, %v2471
        %v2483 = vpack.c.b16 %v2474, %v2473
        %v2484 = vpack.c.b16 %v2476, %v2475
        %v2493 = vunpack.c.l.b16 %v1898
        %v2494 = vunpack.c.l.b16 %v1912
        %v2495 = vunpack.c.l.b16 %v1926
        %v2496 = vunpack.c.l.b16 %v1940
        %v2497 = vunpack.c.l.b16 %v1954
        %v2498 = vunpack.c.l.b16 %v1968
        %v2499 = vunpack.c.l.b16 %v1982
        %v2500 = vunpack.c.l.b16 %v1996
        %v2501 = vunpack.c.l.b16 %v2010
        %v2502 = vunpack.c.l.b16 %v2024
        %v2503 = vunpack.c.l.b16 %v2038
        %v2504 = vunpack.c.l.b16 %v2052
        %v2505 = vunpack.c.l.b16 %v2066
        %v2506 = vunpack.c.l.b16 %v2080
        %v2507 = vunpack.c.l.b16 %v2094
        %v2508 = vunpack.c.l.b16 %v2108
        %v2509 = vpack.c.b16 %v2494, %v2493
        %v2510 = vpack.c.b16 %v2496, %v2495
        %v2511 = vpack.c.b16 %v2498, %v2497
        %v2512 = vpack.c.b16 %v2500, %v2499
        %v2513 = vpack.c.b16 %v2502, %v2501
        %v2514 = vpack.c.b16 %v2504, %v2503
        %v2515 = vpack.c.b16 %v2506, %v2505
        %v2516 = vpack.c.b16 %v2508, %v2507
        %v2525 = vunpack.c.l.b16 %v2160
        %v2526 = vunpack.c.l.b16 %v2164
        %v2527 = vunpack.c.l.b16 %v2168
        %v2528 = vunpack.c.l.b16 %v2172
        %v2529 = vunpack.c.l.b16 %v2176
        %v2530 = vunpack.c.l.b16 %v2180
        %v2531 = vunpack.c.l.b16 %v2184
        %v2532 = vunpack.c.l.b16 %v2188
        %v2533 = vunpack.c.l.b16 %v2192
        %v2534 = vunpack.c.l.b16 %v2196
        %v2535 = vunpack.c.l.b16 %v2200
        %v2536 = vunpack.c.l.b16 %v2204
        %v2537 = vunpack.c.l.b16 %v2208
        %v2538 = vunpack.c.l.b16 %v2212
        %v2539 = vunpack.c.l.b16 %v2216
        %v2540 = vunpack.c.l.b16 %v2220
        %v2541 = vpack.c.b16 %v2526, %v2525
        %v2542 = vpack.c.b16 %v2528, %v2527
        %v2543 = vpack.c.b16 %v2530, %v2529
        %v2544 = vpack.c.b16 %v2532, %v2531
        %v2545 = vpack.c.b16 %v2534, %v2533
        %v2546 = vpack.c.b16 %v2536, %v2535
        %v2547 = vpack.c.b16 %v2538, %v2537
        %v2548 = vpack.c.b16 %v2540, %v2539
        %v2557 = vld [vmem:[%s3] sm:$0xf]
        %v2558 = vld [vmem:[%s3 + $0x4] sm:$0xf]
        %v2559 = vld [vmem:[%s3 + $0x8] sm:$0xf]
        %v2560 = vld [vmem:[%s3 + $0xc] sm:$0xf]
        %v2561 = vld [vmem:[%s3 + $0x10] sm:$0xf]
        %v2562 = vld [vmem:[%s3 + $0x14] sm:$0xf]
        %v2563 = vld [vmem:[%s3 + $0x18] sm:$0xf]
        %v2564 = vld [vmem:[%s3 + $0x1c] sm:$0xf]
        %v2565 = vld [vmem:[%s3 + $0x20] sm:$0xf]
        %v2566 = vld [vmem:[%s3 + $0x24] sm:$0xf]
        %v2567 = vld [vmem:[%s3 + $0x28] sm:$0xf]
        %v2568 = vld [vmem:[%s3 + $0x2c] sm:$0xf]
        %v2569 = vld [vmem:[%s3 + $0x30] sm:$0xf]
        %v2570 = vld [vmem:[%s3 + $0x34] sm:$0xf]
        %v2571 = vld [vmem:[%s3 + $0x38] sm:$0xf]
        %v2572 = vld [vmem:[%s3 + $0x3c] sm:$0xf]
        %v2573 = vld [vmem:[%s3 + $0x40] sm:$0xf]
        %v2574 = vld [vmem:[%s3 + $0x44] sm:$0xf]
        %v2575 = vld [vmem:[%s3 + $0x48] sm:$0xf]
        %v2576 = vld [vmem:[%s3 + $0x4c] sm:$0xf]
        %v2577 = vld [vmem:[%s3 + $0x50] sm:$0xf]
        %v2578 = vld [vmem:[%s3 + $0x54] sm:$0xf]
        %v2579 = vld [vmem:[%s3 + $0x58] sm:$0xf]
        %v2580 = vld [vmem:[%s3 + $0x5c] sm:$0xf]
        %v2581 = vld [vmem:[%s3 + $0x60] sm:$0xf]
        %v2582 = vld [vmem:[%s3 + $0x64] sm:$0xf]
        %v2583 = vld [vmem:[%s3 + $0x68] sm:$0xf]
        %v2584 = vld [vmem:[%s3 + $0x6c] sm:$0xf]
        %v2585 = vld [vmem:[%s3 + $0x70] sm:$0xf]
        %v2586 = vld [vmem:[%s3 + $0x74] sm:$0xf]
        %v2587 = vld [vmem:[%s3 + $0x78] sm:$0xf]
        %v2588 = vld [vmem:[%s3 + $0x7c] sm:$0xf]
        %v2589 = vld [vmem:[%s3 + $0x80] sm:$0xf]
        %v2590 = vld [vmem:[%s3 + $0x84] sm:$0xf]
        %v2591 = vld [vmem:[%s3 + $0x88] sm:$0xf]
        %v2592 = vld [vmem:[%s3 + $0x8c] sm:$0xf]
        %v2593 = vld [vmem:[%s3 + $0x90] sm:$0xf]
        %v2594 = vld [vmem:[%s3 + $0x94] sm:$0xf]
        %v2595 = vld [vmem:[%s3 + $0x98] sm:$0xf]
        %v2596 = vld [vmem:[%s3 + $0x9c] sm:$0xf]
        %v2597 = vld [vmem:[%s3 + $0xa0] sm:$0xf]
        %v2598 = vld [vmem:[%s3 + $0xa4] sm:$0xf]
        %v2599 = vld [vmem:[%s3 + $0xa8] sm:$0xf]
        %v2600 = vld [vmem:[%s3 + $0xac] sm:$0xf]
        %v2601 = vld [vmem:[%s3 + $0xb0] sm:$0xf]
        %v2602 = vld [vmem:[%s3 + $0xb4] sm:$0xf]
        %v2603 = vld [vmem:[%s3 + $0xb8] sm:$0xf]
        %v2604 = vld [vmem:[%s3 + $0xbc] sm:$0xf]
        %v2605 = vld [vmem:[%s3 + $0xc0] sm:$0xf]
        %v2606 = vld [vmem:[%s3 + $0xc4] sm:$0xf]
        %v2607 = vld [vmem:[%s3 + $0xc8] sm:$0xf]
        %v2608 = vld [vmem:[%s3 + $0xcc] sm:$0xf]
        %v2609 = vld [vmem:[%s3 + $0xd0] sm:$0xf]
        %v2610 = vld [vmem:[%s3 + $0xd4] sm:$0xf]
        %v2611 = vld [vmem:[%s3 + $0xd8] sm:$0xf]
        %v2612 = vld [vmem:[%s3 + $0xdc] sm:$0xf]
        %v2613 = vld [vmem:[%s3 + $0xe0] sm:$0xf]
        %v2614 = vld [vmem:[%s3 + $0xe4] sm:$0xf]
        %v2615 = vld [vmem:[%s3 + $0xe8] sm:$0xf]
        %v2616 = vld [vmem:[%s3 + $0xec] sm:$0xf]
        %v2617 = vld [vmem:[%s3 + $0xf0] sm:$0xf]
        %v2618 = vld [vmem:[%s3 + $0xf4] sm:$0xf]
        %v2619 = vld [vmem:[%s3 + $0xf8] sm:$0xf]
        %v2620 = vld [vmem:[%s3 + $0xfc] sm:$0xf]
        %v2621 = vld [vmem:[%s3 + $0x100] sm:$0xf]
        %v2622 = vld [vmem:[%s3 + $0x104] sm:$0xf]
        %v2623 = vld [vmem:[%s3 + $0x108] sm:$0xf]
        %v2624 = vld [vmem:[%s3 + $0x10c] sm:$0xf]
        %v2625 = vld [vmem:[%s3 + $0x110] sm:$0xf]
        %v2626 = vld [vmem:[%s3 + $0x114] sm:$0xf]
        %v2627 = vld [vmem:[%s3 + $0x118] sm:$0xf]
        %v2628 = vld [vmem:[%s3 + $0x11c] sm:$0xf]
        %v2629 = vld [vmem:[%s3 + $0x120] sm:$0xf]
        %v2630 = vld [vmem:[%s3 + $0x124] sm:$0xf]
        %v2631 = vld [vmem:[%s3 + $0x128] sm:$0xf]
        %v2632 = vld [vmem:[%s3 + $0x12c] sm:$0xf]
        %v2633 = vld [vmem:[%s3 + $0x130] sm:$0xf]
        %v2634 = vld [vmem:[%s3 + $0x134] sm:$0xf]
        %v2635 = vld [vmem:[%s3 + $0x138] sm:$0xf]
        %v2636 = vld [vmem:[%s3 + $0x13c] sm:$0xf]
        %v2637 = vld [vmem:[%s3 + $0x140] sm:$0xf]
        %v2638 = vld [vmem:[%s3 + $0x144] sm:$0xf]
        %v2639 = vld [vmem:[%s3 + $0x148] sm:$0xf]
        %v2640 = vld [vmem:[%s3 + $0x14c] sm:$0xf]
        %v2641 = vld [vmem:[%s3 + $0x150] sm:$0xf]
        %v2642 = vld [vmem:[%s3 + $0x154] sm:$0xf]
        %v2643 = vld [vmem:[%s3 + $0x158] sm:$0xf]
        %v2644 = vld [vmem:[%s3 + $0x15c] sm:$0xf]
        %v2645 = vld [vmem:[%s3 + $0x160] sm:$0xf]
        %v2646 = vld [vmem:[%s3 + $0x164] sm:$0xf]
        %v2647 = vld [vmem:[%s3 + $0x168] sm:$0xf]
        %v2648 = vld [vmem:[%s3 + $0x16c] sm:$0xf]
        %v2649 = vld [vmem:[%s3 + $0x170] sm:$0xf]
        %v2650 = vld [vmem:[%s3 + $0x174] sm:$0xf]
        %v2651 = vld [vmem:[%s3 + $0x178] sm:$0xf]
        %v2652 = vld [vmem:[%s3 + $0x17c] sm:$0xf]
        %v2653 = vld [vmem:[%s3 + $0x180] sm:$0xf]
        %v2654 = vld [vmem:[%s3 + $0x184] sm:$0xf]
        %v2655 = vld [vmem:[%s3 + $0x188] sm:$0xf]
        %v2656 = vld [vmem:[%s3 + $0x18c] sm:$0xf]
        %v2657 = vld [vmem:[%s3 + $0x190] sm:$0xf]
        %v2658 = vld [vmem:[%s3 + $0x194] sm:$0xf]
        %v2659 = vld [vmem:[%s3 + $0x198] sm:$0xf]
        %v2660 = vld [vmem:[%s3 + $0x19c] sm:$0xf]
        %v2661 = vld [vmem:[%s3 + $0x1a0] sm:$0xf]
        %v2662 = vld [vmem:[%s3 + $0x1a4] sm:$0xf]
        %v2663 = vld [vmem:[%s3 + $0x1a8] sm:$0xf]
        %v2664 = vld [vmem:[%s3 + $0x1ac] sm:$0xf]
        %v2665 = vld [vmem:[%s3 + $0x1b0] sm:$0xf]
        %v2666 = vld [vmem:[%s3 + $0x1b4] sm:$0xf]
        %v2667 = vld [vmem:[%s3 + $0x1b8] sm:$0xf]
        %v2668 = vld [vmem:[%s3 + $0x1bc] sm:$0xf]
        %v2669 = vld [vmem:[%s3 + $0x1c0] sm:$0xf]
        %v2670 = vld [vmem:[%s3 + $0x1c4] sm:$0xf]
        %v2671 = vld [vmem:[%s3 + $0x1c8] sm:$0xf]
        %v2672 = vld [vmem:[%s3 + $0x1cc] sm:$0xf]
        %v2673 = vld [vmem:[%s3 + $0x1d0] sm:$0xf]
        %v2674 = vld [vmem:[%s3 + $0x1d4] sm:$0xf]
        %v2675 = vld [vmem:[%s3 + $0x1d8] sm:$0xf]
        %v2676 = vld [vmem:[%s3 + $0x1dc] sm:$0xf]
        %v2677 = vld [vmem:[%s3 + $0x1e0] sm:$0xf]
        %v2678 = vld [vmem:[%s3 + $0x1e4] sm:$0xf]
        %v2679 = vld [vmem:[%s3 + $0x1e8] sm:$0xf]
        %v2680 = vld [vmem:[%s3 + $0x1ec] sm:$0xf]
        %v2681 = vld [vmem:[%s3 + $0x1f0] sm:$0xf]
        %v2682 = vld [vmem:[%s3 + $0x1f4] sm:$0xf]
        %v2683 = vld [vmem:[%s3 + $0x1f8] sm:$0xf]
        %v2684 = vld [vmem:[%s3 + $0x1fc] sm:$0xf]
        %v2685 = vld [vmem:[%s3 + $0x200] sm:$0xf]
        %v2686 = vld [vmem:[%s3 + $0x204] sm:$0xf]
        %v2687 = vld [vmem:[%s3 + $0x208] sm:$0xf]
        %v2688 = vld [vmem:[%s3 + $0x20c] sm:$0xf]
        %v2689 = vld [vmem:[%s3 + $0x210] sm:$0xf]
        %v2690 = vld [vmem:[%s3 + $0x214] sm:$0xf]
        %v2691 = vld [vmem:[%s3 + $0x218] sm:$0xf]
        %v2692 = vld [vmem:[%s3 + $0x21c] sm:$0xf]
        %v2693 = vld [vmem:[%s3 + $0x220] sm:$0xf]
        %v2694 = vld [vmem:[%s3 + $0x224] sm:$0xf]
        %v2695 = vld [vmem:[%s3 + $0x228] sm:$0xf]
        %v2696 = vld [vmem:[%s3 + $0x22c] sm:$0xf]
        %v2697 = vld [vmem:[%s3 + $0x230] sm:$0xf]
        %v2698 = vld [vmem:[%s3 + $0x234] sm:$0xf]
        %v2699 = vld [vmem:[%s3 + $0x238] sm:$0xf]
        %v2700 = vld [vmem:[%s3 + $0x23c] sm:$0xf]
        %v2701 = vld [vmem:[%s318] sm:$0xf]
        %v2702 = vld [vmem:[%s318 + $0x4] sm:$0xf]
        %v2703 = vld [vmem:[%s318 + $0x8] sm:$0xf]
        %v2704 = vld [vmem:[%s318 + $0xc] sm:$0xf]
        %v2705 = vld [vmem:[%s318 + $0x10] sm:$0xf]
        %v2706 = vld [vmem:[%s318 + $0x14] sm:$0xf]
        %v2707 = vld [vmem:[%s318 + $0x18] sm:$0xf]
        %v2708 = vld [vmem:[%s318 + $0x1c] sm:$0xf]
        %v2709 = vld [vmem:[%s318 + $0x20] sm:$0xf]
        %v2710 = vld [vmem:[%s318 + $0x24] sm:$0xf]
        %v2711 = vld [vmem:[%s318 + $0x28] sm:$0xf]
        %v2712 = vld [vmem:[%s318 + $0x2c] sm:$0xf]
        %v2713 = vld [vmem:[%s318 + $0x30] sm:$0xf]
        %v2714 = vld [vmem:[%s318 + $0x34] sm:$0xf]
        %v2715 = vld [vmem:[%s318 + $0x38] sm:$0xf]
        %v2716 = vld [vmem:[%s318 + $0x3c] sm:$0xf]
        %v2717 = vld [vmem:[%s4] sm:$0xf]
        %v2734 = vunpack.c.l.b16 %v2701
        %v2735 = vunpack.c.l.b16 %v2702
        %v2736 = vunpack.c.l.b16 %v2703
        %v2737 = vunpack.c.l.b16 %v2704
        %v2738 = vunpack.c.l.b16 %v2705
        %v2739 = vunpack.c.l.b16 %v2706
        %v2740 = vunpack.c.l.b16 %v2707
        %v2741 = vunpack.c.l.b16 %v2708
        %v2742 = vunpack.c.l.b16 %v2709
        %v2743 = vunpack.c.l.b16 %v2710
        %v2744 = vunpack.c.l.b16 %v2711
        %v2745 = vunpack.c.l.b16 %v2712
        %v2746 = vunpack.c.l.b16 %v2713
        %v2747 = vunpack.c.l.b16 %v2714
        %v2748 = vunpack.c.l.b16 %v2715
        %v2749 = vunpack.c.l.b16 %v2716
        %v2750 = vpack.c.b16 %v2735, %v2734
        %v2751 = vpack.c.b16 %v2737, %v2736
        %v2752 = vpack.c.b16 %v2739, %v2738
        %v2753 = vpack.c.b16 %v2741, %v2740
        %v2754 = vpack.c.b16 %v2743, %v2742
        %v2755 = vpack.c.b16 %v2745, %v2744
        %v2756 = vpack.c.b16 %v2747, %v2746
        %v2757 = vpack.c.b16 %v2749, %v2748
        %vm2758 = vcmask 64512
        %v2760 = vsel %vm2758, %v2750, 0
        %v2763 = vsel %vm2758, %v2751, 0
        %v2766 = vsel %vm2758, %v2752, 0
        %v2769 = vsel %vm2758, %v2753, 0
        %v2772 = vsel %vm2758, %v2754, 0
        %v2775 = vsel %vm2758, %v2755, 0
        %v2778 = vsel %vm2758, %v2756, 0
        %v2781 = vsel %vm2758, %v2757, 0
        %vm2783 = vcmask 1043456
        %v2785 = vsel %vm2783, %v2717, 0
        %2787 = vmatprep.subr.bf16.mxu0 0
        %2788 = vmatpush1.bf16.msra.mxu0 %v2785
        %2789 = vmatprep.subr.bf16.mxu0 0
        %2790 = vmatpush1.bf16.msra.mxu0 0
        %2791 = vmatprep.subr.bf16.mxu0 0
        %2792 = vmatpush1.bf16.msra.mxu0 0
        %2793 = vmatprep.subr.bf16.mxu0 0
        %2794 = vmatpush1.bf16.msra.mxu0 0
        %2795 = vmatprep.subr.bf16.mxu0 0
        %2796 = vmatpush1.bf16.msra.mxu0 0
        %2797 = vmatprep.subr.bf16.mxu0 0
        %2798 = vmatpush1.bf16.msra.mxu0 0
        %2799 = vmatprep.subr.bf16.mxu0 0
        %2800 = vmatpush1.bf16.msra.mxu0 0
        %2801 = vmatprep.subr.bf16.mxu0 0
        %2802 = vmatpush1.bf16.msra.mxu0 0
        %2803 = vmatprep.subr.bf16.mxu0 0
        %2804 = vmatpush1.bf16.msra.mxu0 0
        %2805 = vmatprep.subr.bf16.mxu0 0
        %2806 = vmatpush1.bf16.msra.mxu0 0
        %2807 = vmatprep.subr.bf16.mxu0 0
        %2808 = vmatpush1.bf16.msra.mxu0 0
        %2809 = vmatprep.subr.bf16.mxu0 0
        %2810 = vmatpush1.bf16.msra.mxu0 0
        %2811 = vmatprep.subr.bf16.mxu0 0
        %2812 = vmatpush1.bf16.msra.mxu0 0
        %2813 = vmatprep.subr.bf16.mxu0 0
        %2814 = vmatpush1.bf16.msra.mxu0 0
        %2815 = vmatprep.subr.bf16.mxu0 0
        %2816 = vmatpush1.bf16.msra.mxu0 0
        %2817 = vmatprep.subr.bf16.mxu0 0
        %2818 = vmatpush1.bf16.msra.mxu0 0
        %2819 = vmatprep.mubr.bf16.mxu0 0
        %2820 = vmatmul.mubr.bf16.gmra.mrb[0].mxu0 %v2760
        %v2821 = vpop.f32.mrb[0].mxu0
        %v2822 = vadd.f32 0.0, %v2821
        %v2823 = vpop.f32.mrb[0].mxu0
        %v2824 = vpop.f32.mrb[0].mxu0
        %v2825 = vadd.f32 0.0, %v2824
        %v2826 = vpop.f32.mrb[0].mxu0
        %2827 = vmatprep.mubr.bf16.mxu0 0
        %2828 = vmatmul.mubr.bf16.gmra.mrb[0].mxu0 %v2763
        %v2829 = vpop.f32.mrb[0].mxu0
        %v2830 = vadd.f32 0.0, %v2829
        %v2831 = vpop.f32.mrb[0].mxu0
        %v2832 = vpop.f32.mrb[0].mxu0
        %v2833 = vadd.f32 0.0, %v2832
        %v2834 = vpop.f32.mrb[0].mxu0
        %2835 = vmatprep.mubr.bf16.mxu0 0
        %2836 = vmatmul.mubr.bf16.gmra.mrb[0].mxu0 %v2766
        %v2837 = vpop.f32.mrb[0].mxu0
        %v2838 = vadd.f32 0.0, %v2837
        %v2839 = vpop.f32.mrb[0].mxu0
        %v2840 = vpop.f32.mrb[0].mxu0
        %v2841 = vadd.f32 0.0, %v2840
        %v2842 = vpop.f32.mrb[0].mxu0
        %2843 = vmatprep.mubr.bf16.mxu0 0
        %2844 = vmatmul.mubr.bf16.gmra.mrb[0].mxu0 %v2769
        %v2845 = vpop.f32.mrb[0].mxu0
        %v2846 = vadd.f32 0.0, %v2845
        %v2847 = vpop.f32.mrb[0].mxu0
        %v2848 = vpop.f32.mrb[0].mxu0
        %v2849 = vadd.f32 0.0, %v2848
        %v2850 = vpop.f32.mrb[0].mxu0
        %2851 = vmatprep.mubr.bf16.mxu0 0
        %2852 = vmatmul.mubr.bf16.gmra.mrb[0].mxu0 %v2772
        %v2853 = vpop.f32.mrb[0].mxu0
        %v2854 = vadd.f32 0.0, %v2853
        %v2855 = vpop.f32.mrb[0].mxu0
        %v2856 = vpop.f32.mrb[0].mxu0
        %v2857 = vadd.f32 0.0, %v2856
        %v2858 = vpop.f32.mrb[0].mxu0
        %2859 = vmatprep.mubr.bf16.mxu0 0
        %2860 = vmatmul.mubr.bf16.gmra.mrb[0].mxu0 %v2775
        %v2861 = vpop.f32.mrb[0].mxu0
        %v2862 = vadd.f32 0.0, %v2861
        %v2863 = vpop.f32.mrb[0].mxu0
        %v2864 = vpop.f32.mrb[0].mxu0
        %v2865 = vadd.f32 0.0, %v2864
        %v2866 = vpop.f32.mrb[0].mxu0
        %2867 = vmatprep.mubr.bf16.mxu0 0
        %2868 = vmatmul.mubr.bf16.gmra.mrb[0].mxu0 %v2778
        %v2869 = vpop.f32.mrb[0].mxu0
        %v2870 = vadd.f32 0.0, %v2869
        %v2871 = vpop.f32.mrb[0].mxu0
        %v2872 = vpop.f32.mrb[0].mxu0
        %v2873 = vadd.f32 0.0, %v2872
        %v2874 = vpop.f32.mrb[0].mxu0
        %2875 = vmatprep.mubr.bf16.mxu0 0
        %2876 = vmatmul.mubr.bf16.gmra.mrb[0].mxu0 %v2781
        %v2877 = vpop.f32.mrb[0].mxu0
        %v2878 = vadd.f32 0.0, %v2877
        %v2879 = vpop.f32.mrb[0].mxu0
        %v2880 = vpop.f32.mrb[0].mxu0
        %v2881 = vadd.f32 0.0, %v2880
        %v2882 = vpop.f32.mrb[0].mxu0
        %2883 = vdwg.mxu0
        %v3028 = vunpack.c.l.b16 %v2557
        %v3029 = vunpack.c.l.b16 %v2558
        %v3030 = vunpack.c.l.b16 %v2559
        %v3031 = vunpack.c.l.b16 %v2560
        %v3032 = vunpack.c.l.b16 %v2561
        %v3033 = vunpack.c.l.b16 %v2562
        %v3034 = vunpack.c.l.b16 %v2563
        %v3035 = vunpack.c.l.b16 %v2564
        %v3036 = vunpack.c.l.b16 %v2565
        %v3037 = vunpack.c.l.b16 %v2566
        %v3038 = vunpack.c.l.b16 %v2567
        %v3039 = vunpack.c.l.b16 %v2568
        %v3040 = vunpack.c.l.b16 %v2569
        %v3041 = vunpack.c.l.b16 %v2570
        %v3042 = vunpack.c.l.b16 %v2571
        %v3043 = vunpack.c.l.b16 %v2572
        %v3044 = vunpack.c.l.b16 %v2573
        %v3045 = vunpack.c.l.b16 %v2574
        %v3046 = vunpack.c.l.b16 %v2575
        %v3047 = vunpack.c.l.b16 %v2576
        %v3048 = vunpack.c.l.b16 %v2577
        %v3049 = vunpack.c.l.b16 %v2578
        %v3050 = vunpack.c.l.b16 %v2579
        %v3051 = vunpack.c.l.b16 %v2580
        %v3052 = vunpack.c.l.b16 %v2581
        %v3053 = vunpack.c.l.b16 %v2582
        %v3054 = vunpack.c.l.b16 %v2583
        %v3055 = vunpack.c.l.b16 %v2584
        %v3056 = vunpack.c.l.b16 %v2585
        %v3057 = vunpack.c.l.b16 %v2586
        %v3058 = vunpack.c.l.b16 %v2587
        %v3059 = vunpack.c.l.b16 %v2588
        %v3060 = vunpack.c.l.b16 %v2589
        %v3061 = vunpack.c.l.b16 %v2590
        %v3062 = vunpack.c.l.b16 %v2591
        %v3063 = vunpack.c.l.b16 %v2592
        %v3064 = vunpack.c.l.b16 %v2593
        %v3065 = vunpack.c.l.b16 %v2594
        %v3066 = vunpack.c.l.b16 %v2595
        %v3067 = vunpack.c.l.b16 %v2596
        %v3068 = vunpack.c.l.b16 %v2597
        %v3069 = vunpack.c.l.b16 %v2598
        %v3070 = vunpack.c.l.b16 %v2599
        %v3071 = vunpack.c.l.b16 %v2600
        %v3072 = vunpack.c.l.b16 %v2601
        %v3073 = vunpack.c.l.b16 %v2602
        %v3074 = vunpack.c.l.b16 %v2603
        %v3075 = vunpack.c.l.b16 %v2604
        %v3076 = vunpack.c.l.b16 %v2605
        %v3077 = vunpack.c.l.b16 %v2606
        %v3078 = vunpack.c.l.b16 %v2607
        %v3079 = vunpack.c.l.b16 %v2608
        %v3080 = vunpack.c.l.b16 %v2609
        %v3081 = vunpack.c.l.b16 %v2610
        %v3082 = vunpack.c.l.b16 %v2611
        %v3083 = vunpack.c.l.b16 %v2612
        %v3084 = vunpack.c.l.b16 %v2613
        %v3085 = vunpack.c.l.b16 %v2614
        %v3086 = vunpack.c.l.b16 %v2615
        %v3087 = vunpack.c.l.b16 %v2616
        %v3088 = vunpack.c.l.b16 %v2617
        %v3089 = vunpack.c.l.b16 %v2618
        %v3090 = vunpack.c.l.b16 %v2619
        %v3091 = vunpack.c.l.b16 %v2620
        %v3092 = vunpack.c.l.b16 %v2621
        %v3093 = vunpack.c.l.b16 %v2622
        %v3094 = vunpack.c.l.b16 %v2623
        %v3095 = vunpack.c.l.b16 %v2624
        %v3096 = vunpack.c.l.b16 %v2625
        %v3097 = vunpack.c.l.b16 %v2626
        %v3098 = vunpack.c.l.b16 %v2627
        %v3099 = vunpack.c.l.b16 %v2628
        %v3100 = vunpack.c.l.b16 %v2629
        %v3101 = vunpack.c.l.b16 %v2630
        %v3102 = vunpack.c.l.b16 %v2631
        %v3103 = vunpack.c.l.b16 %v2632
        %v3104 = vunpack.c.l.b16 %v2633
        %v3105 = vunpack.c.l.b16 %v2634
        %v3106 = vunpack.c.l.b16 %v2635
        %v3107 = vunpack.c.l.b16 %v2636
        %v3108 = vunpack.c.l.b16 %v2637
        %v3109 = vunpack.c.l.b16 %v2638
        %v3110 = vunpack.c.l.b16 %v2639
        %v3111 = vunpack.c.l.b16 %v2640
        %v3112 = vunpack.c.l.b16 %v2641
        %v3113 = vunpack.c.l.b16 %v2642
        %v3114 = vunpack.c.l.b16 %v2643
        %v3115 = vunpack.c.l.b16 %v2644
        %v3116 = vunpack.c.l.b16 %v2645
        %v3117 = vunpack.c.l.b16 %v2646
        %v3118 = vunpack.c.l.b16 %v2647
        %v3119 = vunpack.c.l.b16 %v2648
        %v3120 = vunpack.c.l.b16 %v2649
        %v3121 = vunpack.c.l.b16 %v2650
        %v3122 = vunpack.c.l.b16 %v2651
        %v3123 = vunpack.c.l.b16 %v2652
        %v3124 = vunpack.c.l.b16 %v2653
        %v3125 = vunpack.c.l.b16 %v2654
        %v3126 = vunpack.c.l.b16 %v2655
        %v3127 = vunpack.c.l.b16 %v2656
        %v3128 = vunpack.c.l.b16 %v2657
        %v3129 = vunpack.c.l.b16 %v2658
        %v3130 = vunpack.c.l.b16 %v2659
        %v3131 = vunpack.c.l.b16 %v2660
        %v3132 = vunpack.c.l.b16 %v2661
        %v3133 = vunpack.c.l.b16 %v2662
        %v3134 = vunpack.c.l.b16 %v2663
        %v3135 = vunpack.c.l.b16 %v2664
        %v3136 = vunpack.c.l.b16 %v2665
        %v3137 = vunpack.c.l.b16 %v2666
        %v3138 = vunpack.c.l.b16 %v2667
        %v3139 = vunpack.c.l.b16 %v2668
        %v3140 = vunpack.c.l.b16 %v2669
        %v3141 = vunpack.c.l.b16 %v2670
        %v3142 = vunpack.c.l.b16 %v2671
        %v3143 = vunpack.c.l.b16 %v2672
        %v3144 = vunpack.c.l.b16 %v2673
        %v3145 = vunpack.c.l.b16 %v2674
        %v3146 = vunpack.c.l.b16 %v2675
        %v3147 = vunpack.c.l.b16 %v2676
        %v3148 = vunpack.c.l.b16 %v2677
        %v3149 = vunpack.c.l.b16 %v2678
        %v3150 = vunpack.c.l.b16 %v2679
        %v3151 = vunpack.c.l.b16 %v2680
        %v3152 = vunpack.c.l.b16 %v2681
        %v3153 = vunpack.c.l.b16 %v2682
        %v3154 = vunpack.c.l.b16 %v2683
        %v3155 = vunpack.c.l.b16 %v2684
        %v3156 = vunpack.c.l.b16 %v2685
        %v3157 = vunpack.c.l.b16 %v2686
        %v3158 = vunpack.c.l.b16 %v2687
        %v3159 = vunpack.c.l.b16 %v2688
        %v3160 = vunpack.c.l.b16 %v2689
        %v3161 = vunpack.c.l.b16 %v2690
        %v3162 = vunpack.c.l.b16 %v2691
        %v3163 = vunpack.c.l.b16 %v2692
        %v3164 = vunpack.c.l.b16 %v2693
        %v3165 = vunpack.c.l.b16 %v2694
        %v3166 = vunpack.c.l.b16 %v2695
        %v3167 = vunpack.c.l.b16 %v2696
        %v3168 = vunpack.c.l.b16 %v2697
        %v3169 = vunpack.c.l.b16 %v2698
        %v3170 = vunpack.c.l.b16 %v2699
        %v3171 = vunpack.c.l.b16 %v2700
        %v3172 = vpack.c.b16 %v3029, %v3028
        %v3173 = vpack.c.b16 %v3031, %v3030
        %v3174 = vpack.c.b16 %v3033, %v3032
        %v3175 = vpack.c.b16 %v3035, %v3034
        %v3176 = vpack.c.b16 %v3037, %v3036
        %v3177 = vpack.c.b16 %v3039, %v3038
        %v3178 = vpack.c.b16 %v3041, %v3040
        %v3179 = vpack.c.b16 %v3043, %v3042
        %v3180 = vpack.c.b16 %v3045, %v3044
        %v3181 = vpack.c.b16 %v3047, %v3046
        %v3182 = vpack.c.b16 %v3049, %v3048
        %v3183 = vpack.c.b16 %v3051, %v3050
        %v3184 = vpack.c.b16 %v3053, %v3052
        %v3185 = vpack.c.b16 %v3055, %v3054
        %v3186 = vpack.c.b16 %v3057, %v3056
        %v3187 = vpack.c.b16 %v3059, %v3058
        %v3188 = vpack.c.b16 %v3061, %v3060
        %v3189 = vpack.c.b16 %v3063, %v3062
        %v3190 = vpack.c.b16 %v3065, %v3064
        %v3191 = vpack.c.b16 %v3067, %v3066
        %v3192 = vpack.c.b16 %v3069, %v3068
        %v3193 = vpack.c.b16 %v3071, %v3070
        %v3194 = vpack.c.b16 %v3073, %v3072
        %v3195 = vpack.c.b16 %v3075, %v3074
        %v3196 = vpack.c.b16 %v3077, %v3076
        %v3197 = vpack.c.b16 %v3079, %v3078
        %v3198 = vpack.c.b16 %v3081, %v3080
        %v3199 = vpack.c.b16 %v3083, %v3082
        %v3200 = vpack.c.b16 %v3085, %v3084
        %v3201 = vpack.c.b16 %v3087, %v3086
        %v3202 = vpack.c.b16 %v3089, %v3088
        %v3203 = vpack.c.b16 %v3091, %v3090
        %v3204 = vpack.c.b16 %v3093, %v3092
        %v3205 = vpack.c.b16 %v3095, %v3094
        %v3206 = vpack.c.b16 %v3097, %v3096
        %v3207 = vpack.c.b16 %v3099, %v3098
        %v3208 = vpack.c.b16 %v3101, %v3100
        %v3209 = vpack.c.b16 %v3103, %v3102
        %v3210 = vpack.c.b16 %v3105, %v3104
        %v3211 = vpack.c.b16 %v3107, %v3106
        %v3212 = vpack.c.b16 %v3109, %v3108
        %v3213 = vpack.c.b16 %v3111, %v3110
        %v3214 = vpack.c.b16 %v3113, %v3112
        %v3215 = vpack.c.b16 %v3115, %v3114
        %v3216 = vpack.c.b16 %v3117, %v3116
        %v3217 = vpack.c.b16 %v3119, %v3118
        %v3218 = vpack.c.b16 %v3121, %v3120
        %v3219 = vpack.c.b16 %v3123, %v3122
        %v3220 = vpack.c.b16 %v3125, %v3124
        %v3221 = vpack.c.b16 %v3127, %v3126
        %v3222 = vpack.c.b16 %v3129, %v3128
        %v3223 = vpack.c.b16 %v3131, %v3130
        %v3224 = vpack.c.b16 %v3133, %v3132
        %v3225 = vpack.c.b16 %v3135, %v3134
        %v3226 = vpack.c.b16 %v3137, %v3136
        %v3227 = vpack.c.b16 %v3139, %v3138
        %v3228 = vpack.c.b16 %v3141, %v3140
        %v3229 = vpack.c.b16 %v3143, %v3142
        %v3230 = vpack.c.b16 %v3145, %v3144
        %v3231 = vpack.c.b16 %v3147, %v3146
        %v3232 = vpack.c.b16 %v3149, %v3148
        %v3233 = vpack.c.b16 %v3151, %v3150
        %v3234 = vpack.c.b16 %v3153, %v3152
        %v3235 = vpack.c.b16 %v3155, %v3154
        %v3236 = vpack.c.b16 %v3157, %v3156
        %v3237 = vpack.c.b16 %v3159, %v3158
        %v3238 = vpack.c.b16 %v3161, %v3160
        %v3239 = vpack.c.b16 %v3163, %v3162
        %v3240 = vpack.c.b16 %v3165, %v3164
        %v3241 = vpack.c.b16 %v3167, %v3166
        %v3242 = vpack.c.b16 %v3169, %v3168
        %v3243 = vpack.c.b16 %v3171, %v3170
        %3316 = vmatprep.subr.bf16.mxu0 0
        %3317 = vmatpush1.bf16.msra.mxu0 %v3172
        %3318 = vmatprep.subr.bf16.mxu0 0
        %3319 = vmatpush1.bf16.msra.mxu0 %v3173
        %3320 = vmatprep.subr.bf16.mxu0 0
        %3321 = vmatpush1.bf16.msra.mxu0 %v3174
        %3322 = vmatprep.subr.bf16.mxu0 0
        %3323 = vmatpush1.bf16.msra.mxu0 %v3175
        %3324 = vmatprep.subr.bf16.mxu0 0
        %3325 = vmatpush1.bf16.msra.mxu0 %v3176
        %3326 = vmatprep.subr.bf16.mxu0 0
        %3327 = vmatpush1.bf16.msra.mxu0 %v3177
        %3328 = vmatprep.subr.bf16.mxu0 0
        %3329 = vmatpush1.bf16.msra.mxu0 %v3178
        %3330 = vmatprep.subr.bf16.mxu0 0
        %3331 = vmatpush1.bf16.msra.mxu0 %v3179
        %3332 = vmatprep.subr.bf16.mxu0 0
        %3333 = vmatpush1.bf16.msra.mxu0 %v3180
        %3334 = vmatprep.subr.bf16.mxu0 0
        %3335 = vmatpush1.bf16.msra.mxu0 %v3181
        %3336 = vmatprep.subr.bf16.mxu0 0
        %3337 = vmatpush1.bf16.msra.mxu0 %v3182
        %3338 = vmatprep.subr.bf16.mxu0 0
        %3339 = vmatpush1.bf16.msra.mxu0 %v3183
        %3340 = vmatprep.subr.bf16.mxu0 0
        %3341 = vmatpush1.bf16.msra.mxu0 %v3184
        %3342 = vmatprep.subr.bf16.mxu0 0
        %3343 = vmatpush1.bf16.msra.mxu0 %v3185
        %3344 = vmatprep.subr.bf16.mxu0 0
        %3345 = vmatpush1.bf16.msra.mxu0 %v3186
        %3346 = vmatprep.subr.bf16.mxu0 0
        %3347 = vmatpush1.bf16.msra.mxu0 %v3187
        %3348 = vmatprep.mubr.bf16.mxu0 %v2285
        %3349 = vmatmul.mubr.bf16.gmra.mrb[0].mxu0 %v2253
        %v3350 = vpop.f32.mrb[0].mxu0
        %v3351 = vadd.f32 %v2822, %v3350
        %v3352 = vpop.f32.mrb[0].mxu0
        %v3353 = vpop.f32.mrb[0].mxu0
        %v3354 = vadd.f32 %v2825, %v3353
        %v3355 = vpop.f32.mrb[0].mxu0
        %3356 = vmatprep.mubr.bf16.mxu0 %v2286
        %3357 = vmatmul.mubr.bf16.gmra.mrb[0].mxu0 %v2254
        %v3358 = vpop.f32.mrb[0].mxu0
        %v3359 = vadd.f32 %v2830, %v3358
        %v3360 = vpop.f32.mrb[0].mxu0
        %v3361 = vpop.f32.mrb[0].mxu0
        %v3362 = vadd.f32 %v2833, %v3361
        %v3363 = vpop.f32.mrb[0].mxu0
        %3364 = vmatprep.mubr.bf16.mxu0 %v2287
        %3365 = vmatmul.mubr.bf16.gmra.mrb[0].mxu0 %v2255
        %v3366 = vpop.f32.mrb[0].mxu0
        %v3367 = vadd.f32 %v2838, %v3366
        %v3368 = vpop.f32.mrb[0].mxu0
        %v3369 = vpop.f32.mrb[0].mxu0
        %v3370 = vadd.f32 %v2841, %v3369
        %v3371 = vpop.f32.mrb[0].mxu0
        %3372 = vmatprep.mubr.bf16.mxu0 %v2288
        %3373 = vmatmul.mubr.bf16.gmra.mrb[0].mxu0 %v2256
        %v3374 = vpop.f32.mrb[0].mxu0
        %v3375 = vadd.f32 %v2846, %v3374
        %v3376 = vpop.f32.mrb[0].mxu0
        %v3377 = vpop.f32.mrb[0].mxu0
        %v3378 = vadd.f32 %v2849, %v3377
        %v3379 = vpop.f32.mrb[0].mxu0
        %3380 = vmatprep.mubr.bf16.mxu0 %v2289
        %3381 = vmatmul.mubr.bf16.gmra.mrb[0].mxu0 %v2257
        %v3382 = vpop.f32.mrb[0].mxu0
        %v3383 = vadd.f32 %v2854, %v3382
        %v3384 = vpop.f32.mrb[0].mxu0
        %v3385 = vpop.f32.mrb[0].mxu0
        %v3386 = vadd.f32 %v2857, %v3385
        %v3387 = vpop.f32.mrb[0].mxu0
        %3388 = vmatprep.mubr.bf16.mxu0 %v2290
        %3389 = vmatmul.mubr.bf16.gmra.mrb[0].mxu0 %v2258
        %v3390 = vpop.f32.mrb[0].mxu0
        %v3391 = vadd.f32 %v2862, %v3390
        %v3392 = vpop.f32.mrb[0].mxu0
        %v3393 = vpop.f32.mrb[0].mxu0
        %v3394 = vadd.f32 %v2865, %v3393
        %v3395 = vpop.f32.mrb[0].mxu0
        %3396 = vmatprep.mubr.bf16.mxu0 %v2291
        %3397 = vmatmul.mubr.bf16.gmra.mrb[0].mxu0 %v2259
        %v3398 = vpop.f32.mrb[0].mxu0
        %v3399 = vadd.f32 %v2870, %v3398
        %v3400 = vpop.f32.mrb[0].mxu0
        %v3401 = vpop.f32.mrb[0].mxu0
        %v3402 = vadd.f32 %v2873, %v3401
        %v3403 = vpop.f32.mrb[0].mxu0
        %3404 = vmatprep.mubr.bf16.mxu0 %v2292
        %3405 = vmatmul.mubr.bf16.gmra.mrb[0].mxu0 %v2260
        %v3406 = vpop.f32.mrb[0].mxu0
        %v3407 = vadd.f32 %v2878, %v3406
        %v3408 = vpop.f32.mrb[0].mxu0
        %v3409 = vpop.f32.mrb[0].mxu0
        %v3410 = vadd.f32 %v2881, %v3409
        %v3411 = vpop.f32.mrb[0].mxu0
        %3412 = vdwg.mxu0
        %3413 = vmatprep.subr.bf16.mxu0 0
        %3414 = vmatpush1.bf16.msra.mxu0 %v3188
        %3415 = vmatprep.subr.bf16.mxu0 0
        %3416 = vmatpush1.bf16.msra.mxu0 %v3189
        %3417 = vmatprep.subr.bf16.mxu0 0
        %3418 = vmatpush1.bf16.msra.mxu0 %v3190
        %3419 = vmatprep.subr.bf16.mxu0 0
        %3420 = vmatpush1.bf16.msra.mxu0 %v3191
        %3421 = vmatprep.subr.bf16.mxu0 0
        %3422 = vmatpush1.bf16.msra.mxu0 %v3192
        %3423 = vmatprep.subr.bf16.mxu0 0
        %3424 = vmatpush1.bf16.msra.mxu0 %v3193
        %3425 = vmatprep.subr.bf16.mxu0 0
        %3426 = vmatpush1.bf16.msra.mxu0 %v3194
        %3427 = vmatprep.subr.bf16.mxu0 0
        %3428 = vmatpush1.bf16.msra.mxu0 %v3195
        %3429 = vmatprep.subr.bf16.mxu0 0
        %3430 = vmatpush1.bf16.msra.mxu0 %v3196
        %3431 = vmatprep.subr.bf16.mxu0 0
        %3432 = vmatpush1.bf16.msra.mxu0 %v3197
        %3433 = vmatprep.subr.bf16.mxu0 0
        %3434 = vmatpush1.bf16.msra.mxu0 %v3198
        %3435 = vmatprep.subr.bf16.mxu0 0
        %3436 = vmatpush1.bf16.msra.mxu0 %v3199
        %3437 = vmatprep.subr.bf16.mxu0 0
        %3438 = vmatpush1.bf16.msra.mxu0 %v3200
        %3439 = vmatprep.subr.bf16.mxu0 0
        %3440 = vmatpush1.bf16.msra.mxu0 %v3201
        %3441 = vmatprep.subr.bf16.mxu0 0
        %3442 = vmatpush1.bf16.msra.mxu0 %v3202
        %3443 = vmatprep.subr.bf16.mxu0 0
        %3444 = vmatpush1.bf16.msra.mxu0 %v3203
        %3445 = vmatprep.mubr.bf16.mxu0 %v2365
        %3446 = vmatmul.mubr.bf16.gmra.mrb[0].mxu0 %v2317
        %v3447 = vpop.f32.mrb[0].mxu0
        %v3448 = vadd.f32 %v3351, %v3447
        %v3449 = vpop.f32.mrb[0].mxu0
        %v3450 = vpop.f32.mrb[0].mxu0
        %v3451 = vadd.f32 %v3354, %v3450
        %v3452 = vpop.f32.mrb[0].mxu0
        %3453 = vmatprep.mubr.bf16.mxu0 %v2366
        %3454 = vmatmul.mubr.bf16.gmra.mrb[0].mxu0 %v2318
        %v3455 = vpop.f32.mrb[0].mxu0
        %v3456 = vadd.f32 %v3359, %v3455
        %v3457 = vpop.f32.mrb[0].mxu0
        %v3458 = vpop.f32.mrb[0].mxu0
        %v3459 = vadd.f32 %v3362, %v3458
        %v3460 = vpop.f32.mrb[0].mxu0
        %3461 = vmatprep.mubr.bf16.mxu0 %v2367
        %3462 = vmatmul.mubr.bf16.gmra.mrb[0].mxu0 %v2319
        %v3463 = vpop.f32.mrb[0].mxu0
        %v3464 = vadd.f32 %v3367, %v3463
        %v3465 = vpop.f32.mrb[0].mxu0
        %v3466 = vpop.f32.mrb[0].mxu0
        %v3467 = vadd.f32 %v3370, %v3466
        %v3468 = vpop.f32.mrb[0].mxu0
        %3469 = vmatprep.mubr.bf16.mxu0 %v2368
        %3470 = vmatmul.mubr.bf16.gmra.mrb[0].mxu0 %v2320
        %v3471 = vpop.f32.mrb[0].mxu0
        %v3472 = vadd.f32 %v3375, %v3471
        %v3473 = vpop.f32.mrb[0].mxu0
        %v3474 = vpop.f32.mrb[0].mxu0
        %v3475 = vadd.f32 %v3378, %v3474
        %v3476 = vpop.f32.mrb[0].mxu0
        %3477 = vmatprep.mubr.bf16.mxu0 %v2369
        %3478 = vmatmul.mubr.bf16.gmra.mrb[0].mxu0 %v2321
        %v3479 = vpop.f32.mrb[0].mxu0
        %v3480 = vadd.f32 %v3383, %v3479
        %v3481 = vpop.f32.mrb[0].mxu0
        %v3482 = vpop.f32.mrb[0].mxu0
        %v3483 = vadd.f32 %v3386, %v3482
        %v3484 = vpop.f32.mrb[0].mxu0
        %3485 = vmatprep.mubr.bf16.mxu0 %v2370
        %3486 = vmatmul.mubr.bf16.gmra.mrb[0].mxu0 %v2322
        %v3487 = vpop.f32.mrb[0].mxu0
        %v3488 = vadd.f32 %v3391, %v3487
        %v3489 = vpop.f32.mrb[0].mxu0
        %v3490 = vpop.f32.mrb[0].mxu0
        %v3491 = vadd.f32 %v3394, %v3490
        %v3492 = vpop.f32.mrb[0].mxu0
        %3493 = vmatprep.mubr.bf16.mxu0 %v2371
        %3494 = vmatmul.mubr.bf16.gmra.mrb[0].mxu0 %v2323
        %v3495 = vpop.f32.mrb[0].mxu0
        %v3496 = vadd.f32 %v3399, %v3495
        %v3497 = vpop.f32.mrb[0].mxu0
        %v3498 = vpop.f32.mrb[0].mxu0
        %v3499 = vadd.f32 %v3402, %v3498
        %v3500 = vpop.f32.mrb[0].mxu0
        %3501 = vmatprep.mubr.bf16.mxu0 %v2372
        %3502 = vmatmul.mubr.bf16.gmra.mrb[0].mxu0 %v2324
        %v3503 = vpop.f32.mrb[0].mxu0
        %v3504 = vadd.f32 %v3407, %v3503
        %v3505 = vpop.f32.mrb[0].mxu0
        %v3506 = vpop.f32.mrb[0].mxu0
        %v3507 = vadd.f32 %v3410, %v3506
        %v3508 = vpop.f32.mrb[0].mxu0
        %3509 = vdwg.mxu0
        %3510 = vmatprep.subr.bf16.mxu0 0
        %3511 = vmatpush1.bf16.msra.mxu0 %v3204
        %3512 = vmatprep.subr.bf16.mxu0 0
        %3513 = vmatpush1.bf16.msra.mxu0 %v3205
        %3514 = vmatprep.subr.bf16.mxu0 0
        %3515 = vmatpush1.bf16.msra.mxu0 %v3206
        %3516 = vmatprep.subr.bf16.mxu0 0
        %3517 = vmatpush1.bf16.msra.mxu0 %v3207
        %3518 = vmatprep.subr.bf16.mxu0 0
        %3519 = vmatpush1.bf16.msra.mxu0 %v3208
        %3520 = vmatprep.subr.bf16.mxu0 0
        %3521 = vmatpush1.bf16.msra.mxu0 %v3209
        %3522 = vmatprep.subr.bf16.mxu0 0
        %3523 = vmatpush1.bf16.msra.mxu0 %v3210
        %3524 = vmatprep.subr.bf16.mxu0 0
        %3525 = vmatpush1.bf16.msra.mxu0 %v3211
        %3526 = vmatprep.subr.bf16.mxu0 0
        %3527 = vmatpush1.bf16.msra.mxu0 %v3212
        %3528 = vmatprep.subr.bf16.mxu0 0
        %3529 = vmatpush1.bf16.msra.mxu0 %v3213
        %3530 = vmatprep.subr.bf16.mxu0 0
        %3531 = vmatpush1.bf16.msra.mxu0 %v3214
        %3532 = vmatprep.subr.bf16.mxu0 0
        %3533 = vmatpush1.bf16.msra.mxu0 %v3215
        %3534 = vmatprep.subr.bf16.mxu0 0
        %3535 = vmatpush1.bf16.msra.mxu0 %v3216
        %3536 = vmatprep.subr.bf16.mxu0 0
        %3537 = vmatpush1.bf16.msra.mxu0 %v3217
        %3538 = vmatprep.subr.bf16.mxu0 0
        %3539 = vmatpush1.bf16.msra.mxu0 %v3218
        %3540 = vmatprep.subr.bf16.mxu0 0
        %3541 = vmatpush1.bf16.msra.mxu0 %v3219
        %3542 = vmatprep.mubr.bf16.mxu0 %v2429
        %3543 = vmatmul.mubr.bf16.gmra.mrb[0].mxu0 %v2397
        %v3544 = vpop.f32.mrb[0].mxu0
        %v3545 = vadd.f32 %v3448, %v3544
        %v3546 = vpop.f32.mrb[0].mxu0
        %v3547 = vpop.f32.mrb[0].mxu0
        %v3548 = vadd.f32 %v3451, %v3547
        %v3549 = vpop.f32.mrb[0].mxu0
        %3550 = vmatprep.mubr.bf16.mxu0 %v2430
        %3551 = vmatmul.mubr.bf16.gmra.mrb[0].mxu0 %v2398
        %v3552 = vpop.f32.mrb[0].mxu0
        %v3553 = vadd.f32 %v3456, %v3552
        %v3554 = vpop.f32.mrb[0].mxu0
        %v3555 = vpop.f32.mrb[0].mxu0
        %v3556 = vadd.f32 %v3459, %v3555
        %v3557 = vpop.f32.mrb[0].mxu0
        %3558 = vmatprep.mubr.bf16.mxu0 %v2431
        %3559 = vmatmul.mubr.bf16.gmra.mrb[0].mxu0 %v2399
        %v3560 = vpop.f32.mrb[0].mxu0
        %v3561 = vadd.f32 %v3464, %v3560
        %v3562 = vpop.f32.mrb[0].mxu0
        %v3563 = vpop.f32.mrb[0].mxu0
        %v3564 = vadd.f32 %v3467, %v3563
        %v3565 = vpop.f32.mrb[0].mxu0
        %3566 = vmatprep.mubr.bf16.mxu0 %v2432
        %3567 = vmatmul.mubr.bf16.gmra.mrb[0].mxu0 %v2400
        %v3568 = vpop.f32.mrb[0].mxu0
        %v3569 = vadd.f32 %v3472, %v3568
        %v3570 = vpop.f32.mrb[0].mxu0
        %v3571 = vpop.f32.mrb[0].mxu0
        %v3572 = vadd.f32 %v3475, %v3571
        %v3573 = vpop.f32.mrb[0].mxu0
        %3574 = vmatprep.mubr.bf16.mxu0 %v2433
        %3575 = vmatmul.mubr.bf16.gmra.mrb[0].mxu0 %v2401
        %v3576 = vpop.f32.mrb[0].mxu0
        %v3577 = vadd.f32 %v3480, %v3576
        %v3578 = vpop.f32.mrb[0].mxu0
        %v3579 = vpop.f32.mrb[0].mxu0
        %v3580 = vadd.f32 %v3483, %v3579
        %v3581 = vpop.f32.mrb[0].mxu0
        %3582 = vmatprep.mubr.bf16.mxu0 %v2434
        %3583 = vmatmul.mubr.bf16.gmra.mrb[0].mxu0 %v2402
        %v3584 = vpop.f32.mrb[0].mxu0
        %v3585 = vadd.f32 %v3488, %v3584
        %v3586 = vpop.f32.mrb[0].mxu0
        %v3587 = vpop.f32.mrb[0].mxu0
        %v3588 = vadd.f32 %v3491, %v3587
        %v3589 = vpop.f32.mrb[0].mxu0
        %3590 = vmatprep.mubr.bf16.mxu0 %v2435
        %3591 = vmatmul.mubr.bf16.gmra.mrb[0].mxu0 %v2403
        %v3592 = vpop.f32.mrb[0].mxu0
        %v3593 = vadd.f32 %v3496, %v3592
        %v3594 = vpop.f32.mrb[0].mxu0
        %v3595 = vpop.f32.mrb[0].mxu0
        %v3596 = vadd.f32 %v3499, %v3595
        %v3597 = vpop.f32.mrb[0].mxu0
        %3598 = vmatprep.mubr.bf16.mxu0 %v2436
        %3599 = vmatmul.mubr.bf16.gmra.mrb[0].mxu0 %v2404
        %v3600 = vpop.f32.mrb[0].mxu0
        %v3601 = vadd.f32 %v3504, %v3600
        %v3602 = vpop.f32.mrb[0].mxu0
        %v3603 = vpop.f32.mrb[0].mxu0
        %v3604 = vadd.f32 %v3507, %v3603
        %v3605 = vpop.f32.mrb[0].mxu0
        %3606 = vdwg.mxu0
        %3607 = vmatprep.subr.bf16.mxu0 0
        %3608 = vmatpush1.bf16.msra.mxu0 %v3220
        %3609 = vmatprep.subr.bf16.mxu0 0
        %3610 = vmatpush1.bf16.msra.mxu0 %v3221
        %3611 = vmatprep.subr.bf16.mxu0 0
        %3612 = vmatpush1.bf16.msra.mxu0 %v3222
        %3613 = vmatprep.subr.bf16.mxu0 0
        %3614 = vmatpush1.bf16.msra.mxu0 %v3223
        %3615 = vmatprep.subr.bf16.mxu0 0
        %3616 = vmatpush1.bf16.msra.mxu0 %v3224
        %3617 = vmatprep.subr.bf16.mxu0 0
        %3618 = vmatpush1.bf16.msra.mxu0 %v3225
        %3619 = vmatprep.subr.bf16.mxu0 0
        %3620 = vmatpush1.bf16.msra.mxu0 %v3226
        %3621 = vmatprep.subr.bf16.mxu0 0
        %3622 = vmatpush1.bf16.msra.mxu0 %v3227
        %3623 = vmatprep.subr.bf16.mxu0 0
        %3624 = vmatpush1.bf16.msra.mxu0 %v3228
        %3625 = vmatprep.subr.bf16.mxu0 0
        %3626 = vmatpush1.bf16.msra.mxu0 %v3229
        %3627 = vmatprep.subr.bf16.mxu0 0
        %3628 = vmatpush1.bf16.msra.mxu0 %v3230
        %3629 = vmatprep.subr.bf16.mxu0 0
        %3630 = vmatpush1.bf16.msra.mxu0 %v3231
        %3631 = vmatprep.subr.bf16.mxu0 0
        %3632 = vmatpush1.bf16.msra.mxu0 %v3232
        %3633 = vmatprep.subr.bf16.mxu0 0
        %3634 = vmatpush1.bf16.msra.mxu0 %v3233
        %3635 = vmatprep.subr.bf16.mxu0 0
        %3636 = vmatpush1.bf16.msra.mxu0 %v3234
        %3637 = vmatprep.subr.bf16.mxu0 0
        %3638 = vmatpush1.bf16.msra.mxu0 %v3235
        %3639 = vmatprep.mubr.bf16.mxu0 %v2509
        %3640 = vmatmul.mubr.bf16.gmra.mrb[0].mxu0 %v2477
        %v3641 = vpop.f32.mrb[0].mxu0
        %v3642 = vadd.f32 %v3545, %v3641
        %v3643 = vpop.f32.mrb[0].mxu0
        %v3644 = vpop.f32.mrb[0].mxu0
        %v3645 = vadd.f32 %v3548, %v3644
        %v3646 = vpop.f32.mrb[0].mxu0
        %3647 = vmatprep.mubr.bf16.mxu0 %v2510
        %3648 = vmatmul.mubr.bf16.gmra.mrb[0].mxu0 %v2478
        %v3649 = vpop.f32.mrb[0].mxu0
        %v3650 = vadd.f32 %v3553, %v3649
        %v3651 = vpop.f32.mrb[0].mxu0
        %v3652 = vpop.f32.mrb[0].mxu0
        %v3653 = vadd.f32 %v3556, %v3652
        %v3654 = vpop.f32.mrb[0].mxu0
        %3655 = vmatprep.mubr.bf16.mxu0 %v2511
        %3656 = vmatmul.mubr.bf16.gmra.mrb[0].mxu0 %v2479
        %v3657 = vpop.f32.mrb[0].mxu0
        %v3658 = vadd.f32 %v3561, %v3657
        %v3659 = vpop.f32.mrb[0].mxu0
        %v3660 = vpop.f32.mrb[0].mxu0
        %v3661 = vadd.f32 %v3564, %v3660
        %v3662 = vpop.f32.mrb[0].mxu0
        %3663 = vmatprep.mubr.bf16.mxu0 %v2512
        %3664 = vmatmul.mubr.bf16.gmra.mrb[0].mxu0 %v2480
        %v3665 = vpop.f32.mrb[0].mxu0
        %v3666 = vadd.f32 %v3569, %v3665
        %v3667 = vpop.f32.mrb[0].mxu0
        %v3668 = vpop.f32.mrb[0].mxu0
        %v3669 = vadd.f32 %v3572, %v3668
        %v3670 = vpop.f32.mrb[0].mxu0
        %3671 = vmatprep.mubr.bf16.mxu0 %v2513
        %3672 = vmatmul.mubr.bf16.gmra.mrb[0].mxu0 %v2481
        %v3673 = vpop.f32.mrb[0].mxu0
        %v3674 = vadd.f32 %v3577, %v3673
        %v3675 = vpop.f32.mrb[0].mxu0
        %v3676 = vpop.f32.mrb[0].mxu0
        %v3677 = vadd.f32 %v3580, %v3676
        %v3678 = vpop.f32.mrb[0].mxu0
        %3679 = vmatprep.mubr.bf16.mxu0 %v2514
        %3680 = vmatmul.mubr.bf16.gmra.mrb[0].mxu0 %v2482
        %v3681 = vpop.f32.mrb[0].mxu0
        %v3682 = vadd.f32 %v3585, %v3681
        %v3683 = vpop.f32.mrb[0].mxu0
        %v3684 = vpop.f32.mrb[0].mxu0
        %v3685 = vadd.f32 %v3588, %v3684
        %v3686 = vpop.f32.mrb[0].mxu0
        %3687 = vmatprep.mubr.bf16.mxu0 %v2515
        %3688 = vmatmul.mubr.bf16.gmra.mrb[0].mxu0 %v2483
        %v3689 = vpop.f32.mrb[0].mxu0
        %v3690 = vadd.f32 %v3593, %v3689
        %v3691 = vpop.f32.mrb[0].mxu0
        %v3692 = vpop.f32.mrb[0].mxu0
        %v3693 = vadd.f32 %v3596, %v3692
        %v3694 = vpop.f32.mrb[0].mxu0
        %3695 = vmatprep.mubr.bf16.mxu0 %v2516
        %3696 = vmatmul.mubr.bf16.gmra.mrb[0].mxu0 %v2484
        %v3697 = vpop.f32.mrb[0].mxu0
        %v3698 = vadd.f32 %v3601, %v3697
        %v3699 = vpop.f32.mrb[0].mxu0
        %v3700 = vpop.f32.mrb[0].mxu0
        %v3701 = vadd.f32 %v3604, %v3700
        %v3702 = vpop.f32.mrb[0].mxu0
        %3703 = vdwg.mxu0
        %3704 = vmatprep.subr.bf16.mxu0 0
        %3705 = vmatpush1.bf16.msra.mxu0 %v3236
        %3706 = vmatprep.subr.bf16.mxu0 0
        %3707 = vmatpush1.bf16.msra.mxu0 %v3237
        %3708 = vmatprep.subr.bf16.mxu0 0
        %3709 = vmatpush1.bf16.msra.mxu0 %v3238
        %3710 = vmatprep.subr.bf16.mxu0 0
        %3711 = vmatpush1.bf16.msra.mxu0 %v3239
        %3712 = vmatprep.subr.bf16.mxu0 0
        %3713 = vmatpush1.bf16.msra.mxu0 %v3240
        %3714 = vmatprep.subr.bf16.mxu0 0
        %3715 = vmatpush1.bf16.msra.mxu0 %v3241
        %3716 = vmatprep.subr.bf16.mxu0 0
        %3717 = vmatpush1.bf16.msra.mxu0 %v3242
        %3718 = vmatprep.subr.bf16.mxu0 0
        %3719 = vmatpush1.bf16.msra.mxu0 %v3243
        %3720 = vmatprep.subr.bf16.mxu0 0
        %3721 = vmatpush1.bf16.msra.mxu0 0
        %3722 = vmatprep.subr.bf16.mxu0 0
        %3723 = vmatpush1.bf16.msra.mxu0 0
        %3724 = vmatprep.subr.bf16.mxu0 0
        %3725 = vmatpush1.bf16.msra.mxu0 0
        %3726 = vmatprep.subr.bf16.mxu0 0
        %3727 = vmatpush1.bf16.msra.mxu0 0
        %3728 = vmatprep.subr.bf16.mxu0 0
        %3729 = vmatpush1.bf16.msra.mxu0 0
        %3730 = vmatprep.subr.bf16.mxu0 0
        %3731 = vmatpush1.bf16.msra.mxu0 0
        %3732 = vmatprep.subr.bf16.mxu0 0
        %3733 = vmatpush1.bf16.msra.mxu0 0
        %3734 = vmatprep.subr.bf16.mxu0 0
        %3735 = vmatpush1.bf16.msra.mxu0 0
        %3736 = vmatprep.mubr.bf16.mxu0 0
        %3737 = vmatmul.mubr.bf16.gmra.mrb[0].mxu0 %v2541
        %v3738 = vpop.f32.mrb[0].mxu0
        %v3739 = vadd.f32 %v3642, %v3738
        %v3740 = vpop.f32.mrb[0].mxu0
        %v3741 = vpop.f32.mrb[0].mxu0
        %v3742 = vadd.f32 %v3645, %v3741
        %v3743 = vpop.f32.mrb[0].mxu0
        %3744 = vmatprep.mubr.bf16.mxu0 0
        %3745 = vmatmul.mubr.bf16.gmra.mrb[0].mxu0 %v2542
        %v3746 = vpop.f32.mrb[0].mxu0
        %v3747 = vadd.f32 %v3650, %v3746
        %v3748 = vpop.f32.mrb[0].mxu0
        %v3749 = vpop.f32.mrb[0].mxu0
        %v3750 = vadd.f32 %v3653, %v3749
        %v3751 = vpop.f32.mrb[0].mxu0
        %3752 = vmatprep.mubr.bf16.mxu0 0
        %3753 = vmatmul.mubr.bf16.gmra.mrb[0].mxu0 %v2543
        %v3754 = vpop.f32.mrb[0].mxu0
        %v3755 = vadd.f32 %v3658, %v3754
        %v3756 = vpop.f32.mrb[0].mxu0
        %v3757 = vpop.f32.mrb[0].mxu0
        %v3758 = vadd.f32 %v3661, %v3757
        %v3759 = vpop.f32.mrb[0].mxu0
        %3760 = vmatprep.mubr.bf16.mxu0 0
        %3761 = vmatmul.mubr.bf16.gmra.mrb[0].mxu0 %v2544
        %v3762 = vpop.f32.mrb[0].mxu0
        %v3763 = vadd.f32 %v3666, %v3762
        %v3764 = vpop.f32.mrb[0].mxu0
        %v3765 = vpop.f32.mrb[0].mxu0
        %v3766 = vadd.f32 %v3669, %v3765
        %v3767 = vpop.f32.mrb[0].mxu0
        %3768 = vmatprep.mubr.bf16.mxu0 0
        %3769 = vmatmul.mubr.bf16.gmra.mrb[0].mxu0 %v2545
        %v3770 = vpop.f32.mrb[0].mxu0
        %v3771 = vadd.f32 %v3674, %v3770
        %v3772 = vpop.f32.mrb[0].mxu0
        %v3773 = vpop.f32.mrb[0].mxu0
        %v3774 = vadd.f32 %v3677, %v3773
        %v3775 = vpop.f32.mrb[0].mxu0
        %3776 = vmatprep.mubr.bf16.mxu0 0
        %3777 = vmatmul.mubr.bf16.gmra.mrb[0].mxu0 %v2546
        %v3778 = vpop.f32.mrb[0].mxu0
        %v3779 = vadd.f32 %v3682, %v3778
        %v3780 = vpop.f32.mrb[0].mxu0
        %v3781 = vpop.f32.mrb[0].mxu0
        %v3782 = vadd.f32 %v3685, %v3781
        %v3783 = vpop.f32.mrb[0].mxu0
        %3784 = vmatprep.mubr.bf16.mxu0 0
        %3785 = vmatmul.mubr.bf16.gmra.mrb[0].mxu0 %v2547
        %v3786 = vpop.f32.mrb[0].mxu0
        %v3787 = vadd.f32 %v3690, %v3786
        %v3788 = vpop.f32.mrb[0].mxu0
        %v3789 = vpop.f32.mrb[0].mxu0
        %v3790 = vadd.f32 %v3693, %v3789
        %v3791 = vpop.f32.mrb[0].mxu0
        %3792 = vmatprep.mubr.bf16.mxu0 0
        %3793 = vmatmul.mubr.bf16.gmra.mrb[0].mxu0 %v2548
        %v3794 = vpop.f32.mrb[0].mxu0
        %v3795 = vadd.f32 %v3698, %v3794
        %v3796 = vpop.f32.mrb[0].mxu0
        %v3797 = vpop.f32.mrb[0].mxu0
        %v3798 = vadd.f32 %v3701, %v3797
        %v3799 = vpop.f32.mrb[0].mxu0
        %3800 = vdwg.mxu0
        %3801 = vst [vmem:[%s327] sm:$0xff] %v3739
        %3802 = vst [vmem:[%s327 + $0x8] sm:$0xff] %v3742
        %3803 = vst [vmem:[%s327 + $0x10] sm:$0xff] %v3747
        %3804 = vst [vmem:[%s327 + $0x18] sm:$0xff] %v3750
        %3805 = vst [vmem:[%s327 + $0x20] sm:$0xff] %v3755
        %3806 = vst [vmem:[%s327 + $0x28] sm:$0xff] %v3758
        %3807 = vst [vmem:[%s327 + $0x30] sm:$0xff] %v3763
        %3808 = vst [vmem:[%s327 + $0x38] sm:$0xff] %v3766
        %3809 = vst [vmem:[%s327 + $0x40] sm:$0xff] %v3771
        %3810 = vst [vmem:[%s327 + $0x48] sm:$0xff] %v3774
        %3811 = vst [vmem:[%s327 + $0x50] sm:$0xff] %v3779
        %3812 = vst [vmem:[%s327 + $0x58] sm:$0xff] %v3782
        %3813 = vst [vmem:[%s327 + $0x60] sm:$0xff] %v3787
        %3814 = vst [vmem:[%s327 + $0x68] sm:$0xff] %v3790
        %3815 = vst [vmem:[%s327 + $0x70] sm:$0xff] %v3795
        %3816 = vst [vmem:[%s327 + $0x78] sm:$0xff] %v3798
      $region56: #{wrn_basic_block.1} parent=43 // pred_fallthru
        _
      %s3817 = smul.u32 %s22, %s21
      %s3818 = smul.u32 2, %s3817
      %p3819 = scmp.lt.s32.totalorder %s3818, 1
      %s3820 = scalar_select %p3819, %s3818, 1
      %s3821 = smul.addr %s3820, 8
      %s3822 = smul.addr %s3821, 8
      %s3823 = scalar_lea.vmem %s6, %s3822
      // Predicated region
      $region57: #{wrn_basic_block.1} parent=43 // pred_check
        %p3824 = pneg %p193
      $region58: #{wrn_basic_block.1} parent=43 // pred_check_branch
        %3826 = sbr.rel (%p3824) target = $region60
      $region59: #{wrn_basic_block.1} parent=43 // pred_region
        %s3827 = smul.u32 %s22, %s21
        %s3828 = smul.u32 2, %s3827
      $region60: #{wrn_basic_block.1} parent=43 // pred_fallthru
        _
    $region44: #{wrn_basic_block.1} parent=5 // pred_fallthru
      _
    %p3829 = scmp.le.s32.totalorder 2, %s12
    // Predicated region
    $region61: #{wrn_basic_block.1} parent=5 // pred_check
      %p3830 = pneg %p3829
    $region62: #{wrn_basic_block.1} parent=5 // pred_check_branch
      %3832 = sbr.rel (%p3830) target = $region64
    $region63: #{wrn_basic_block.1} parent=5 // pred_region
      %s3833 = ssub.s32 %s12, 2
      // Predicated region
      $region65: #{wrn_basic_block.1} parent=63 // pred_check
        %p3834 = pneg %p199
      $region66: #{wrn_basic_block.1} parent=63 // pred_check_branch
        %3836 = sbr.rel (%p3834) target = $region68
      $region67: #{wrn_basic_block.1} parent=63 // pred_region
        %s3837 = smul.u32 %s24, %s23
        %s3838 = smul.u32 2, %s3837
        %p3839 = scmp.lt.s32.totalorder %s3838, 1
        %s3840 = scalar_select %p3839, %s3838, 1
        %s3841 = smul.addr %s3840, 8
        %s3842 = smul.addr %s3841, 8
        %s3843 = scalar_lea.vmem %s6, %s3842
      $region68: #{wrn_basic_block.1} parent=63 // pred_fallthru
        _
    $region64: #{wrn_basic_block.1} parent=5 // pred_fallthru
      _
  $region6: #{wrn_basic_block.1} parent=0 // loop_footer
    %s16 = sadd.s32 1, %s12
  $region7: #{wrn_basic_block.1} parent=0 // loop_footer_branch
    %11 = sbr.rel target = $region3
  $region8: #{wrn_basic_block.1} parent=0 // loop_exit
    _

</llo_original>
